<compile_context>
chip_gen: v6e
topology: v6e:2x2x1
jax: 0.10.0
libtpu: 0.0.40
codegen_flags: <defaults>
</compile_context>

<pallas_src>
import functools

import jax
import jax.numpy as jnp
from jax import lax
from jax.experimental import pallas as pl
from jax.experimental.pallas import tpu as pltpu

_LANE = 128


# ----------------------------- Pallas kernels ------------------------------


def _lstm_chunk_body(x_ref, wih_t_ref, whh_t_ref, b_ref, fc, out_ref,
                     gx_sc, h_sc, c_sc, hseq_sc, *, unroll):
    """Process one (batch-block, time-chunk) of an LSTM layer.

    x_ref:     (Tt, Bb, Din)   bf16 time-major input chunk
    wih_t_ref: (Din, 4H)       bf16 pre-transposed, lane-aligned input weights
    whh_t_ref: (H, 4H)         bf16 pre-transposed, lane-aligned hidden weights
    b_ref:     (1, 4H)         f32 combined bias
    fc:        None, or (fcw_t_ref (H, C) bf16, fcb_ref (1, C) f32)
    out_ref:   (Tt, Bb, H) bf16, or (Tt, Bb, C) f32 when fc is fused
    gx_sc:     (Tt, Bb, 4H)    bf16 scratch: hoisted input projection
    h_sc,c_sc: (Bb, H)         f32 recurrent state, carried across time chunks
    hseq_sc:   (Tt, Bb, H)     bf16 scratch (only when fc is fused) or None
    """
    # Reset the recurrent state at the first time chunk of each batch block.
    @pl.when(pl.program_id(1) == 0)
    def _():
        h_sc[...] = jnp.zeros_like(h_sc)
        c_sc[...] = jnp.zeros_like(c_sc)

    Tt, Bb, Din = x_ref.shape
    H = h_sc.shape[1]

    # Hoisted input projection + bias: ONE chunk-wide bf16 MXU matmul with f32
    # accumulation instead of Tt tiny per-timestep matmuls.
    x2 = x_ref[...].reshape(Tt * Bb, Din)
    gx = jnp.dot(x2, wih_t_ref[...], preferred_element_type=jnp.float32)
    gx = gx + b_ref[...]
    gx_sc[...] = gx.reshape(Tt, Bb, 4 * H).astype(gx_sc.dtype)

    whh_t = whh_t_ref[...]                 # bf16, loaded once, reused per step
    hout = out_ref if fc is None else hseq_sc

    def step(t, carry):
        # Only the unavoidable recurrent matmul stays in the serial loop.
        rec = jnp.dot(h_sc[...].astype(whh_t.dtype), whh_t,
                      preferred_element_type=jnp.float32)
        gates = gx_sc[t].astype(jnp.float32) + rec
        # H is padded to a multiple of 128 -> every slice is lane-aligned.
        i_g = jax.nn.sigmoid(gates[:, 0 * H:1 * H])
        f_g = jax.nn.sigmoid(gates[:, 1 * H:2 * H])
        g_g = jnp.tanh(gates[:, 2 * H:3 * H])
        o_g = jax.nn.sigmoid(gates[:, 3 * H:4 * H])

        c_new = f_g * c_sc[...] + i_g * g_g
        h_new = o_g * jnp.tanh(c_new)

        c_sc[...] = c_new
        h_sc[...] = h_new
        hout[t] = h_new.astype(hout.dtype)
        return carry

    lax.fori_loop(0, Tt, step, 0, unroll=unroll)

    if fc is not None:
        # Fused per-timestep Linear: one chunk-wide bf16 matmul on the hidden
        # states (avoids a (T,B,H) HBM round trip + a separate fc kernel).
        fcw_t_ref, fcb_ref = fc
        C = fcw_t_ref.shape[1]
        h2 = hseq_sc[...].reshape(Tt * Bb, H)
        logits = jnp.dot(h2, fcw_t_ref[...],
                         preferred_element_type=jnp.float32) + fcb_ref[...]
        out_ref[...] = logits.reshape(Tt, Bb, C).astype(out_ref.dtype)


def _make_lstm_kernel(fuse_fc, unroll):
    if fuse_fc:
        def kernel(x_ref, wih_t_ref, whh_t_ref, b_ref, fcw_t_ref, fcb_ref,
                   out_ref, gx_sc, h_sc, c_sc, hseq_sc):
            _lstm_chunk_body(x_ref, wih_t_ref, whh_t_ref, b_ref,
                             (fcw_t_ref, fcb_ref), out_ref,
                             gx_sc, h_sc, c_sc, hseq_sc, unroll=unroll)
    else:
        def kernel(x_ref, wih_t_ref, whh_t_ref, b_ref,
                   out_ref, gx_sc, h_sc, c_sc):
            _lstm_chunk_body(x_ref, wih_t_ref, whh_t_ref, b_ref,
                             None, out_ref, gx_sc, h_sc, c_sc, None,
                             unroll=unroll)
    return kernel


# --------------------------- sizing heuristics ------------------------------


def _round_up(n, m):
    return ((n + m - 1) // m) * m


def _tpu_vmem_capacity_bytes():
    try:
        return int(pltpu.get_tpu_info().vmem_capacity_bytes)
    except Exception:
        return 64 * 1024 * 1024          # conservative (v7x-sized) fallback


def _num_tensorcores():
    try:
        kind = jax.devices()[0].device_kind.lower()
    except Exception:
        return 1
    if "7x" in kind or "v7" in kind:     # v7x: 2 TCs per chip
        return 2
    if "v4" in kind or "v5p" in kind:    # megacore
        return 2
    return 1                             # v5e / v6e: single TensorCore


def _batch_blocks(B):
    # Split the batch across TensorCores only on dual-TC chips and only when
    # each half still gives the recurrent matmul a decent M dimension.
    if _num_tensorcores() >= 2 and B % 16 == 0 and B // 2 >= 128:
        return 2
    return 1


def _unroll_for(Bb, H):
    gate_elems = Bb * 4 * H              # per-timestep gate tile
    if gate_elems <= 16 * 1024:
        return 8
    if gate_elems <= 128 * 1024:
        return 4
    return 2


def _chunk_vmem_bytes(Tt, Bb, Din, H, out_feat, out_bytes, fuse_fc):
    G = 4 * H
    n = 0
    n += Tt * Bb * Din * 2 * 2           # bf16 x chunk, double-buffered
    n += Tt * Bb * out_feat * out_bytes * 2   # output chunk, double-buffered
    n += (Din * G + H * G) * 2 + G * 4   # single-buffered weights + f32 bias
    n += Tt * Bb * G * 2                 # bf16 gx scratch
    n += 2 * Bb * H * 4                  # f32 h, c state
    if fuse_fc:
        n += H * out_feat * 2 + out_feat * 4   # fc weights + bias
        n += Tt * Bb * H * 2             # bf16 hidden-sequence scratch
    return n


def _choose_time_chunk(T, Bb, Din, H, out_feat, out_bytes, fuse_fc, cap):
    budget = int(cap * 0.55)
    best = 1
    for Tt in range(1, min(T, 256) + 1):
        if T % Tt == 0 and _chunk_vmem_bytes(
                Tt, Bb, Din, H, out_feat, out_bytes, fuse_fc) <= budget:
            best = Tt
    return best


def _const_spec(block_shape):
    """BlockSpec for a weight/bias whose block index never changes: single
    buffering (double-buffering it would be pure VMEM waste)."""
    zeros = (0,) * len(block_shape)

    def idx(b_, t_):
        return zeros

    for make_mode in (lambda: pl.Buffered(buffer_count=1),
                      lambda: pl.Buffered(1)):
        try:
            return pl.BlockSpec(block_shape, idx, pipeline_mode=make_mode())
        except Exception:
            continue
    return pl.BlockSpec(block_shape, idx)


# ------------------------------ JAX wrappers --------------------------------


def _lstm_layer(x_tm, w_ih_t, w_hh_t, bias, fc=None):
    """x_tm: (T, B, Din) time-major bf16. Returns (T,B,H) bf16, or (T,B,C) f32
    when the final Linear is fused."""
    T, B, Din = x_tm.shape
    H = w_hh_t.shape[0]                  # padded hidden size (multiple of 128)
    nb = _batch_blocks(B)
    Bb = B // nb
    fuse_fc = fc is not None
    out_feat = fc[0].shape[1] if fuse_fc else H
    out_dtype = jnp.float32 if fuse_fc else jnp.bfloat16
    out_bytes = jnp.dtype(out_dtype).itemsize

    cap = _tpu_vmem_capacity_bytes()
    Tt = _choose_time_chunk(T, Bb, Din, H, out_feat, out_bytes, fuse_fc, cap)
    unroll = _unroll_for(Bb, H)
    vmem_limit = max(32 * 1024 * 1024, int(cap * 0.85))

    in_specs = [
        pl.BlockSpec((Tt, Bb, Din), lambda b_, t_: (t_, b_, 0)),
        _const_spec((Din, 4 * H)),
        _const_spec((H, 4 * H)),
        _const_spec((1, 4 * H)),
    ]
    operands = [x_tm, w_ih_t, w_hh_t, bias]
    scratch = [
        pltpu.VMEM((Tt, Bb, 4 * H), jnp.bfloat16),   # hoisted input projection
        pltpu.VMEM((Bb, H), jnp.float32),            # h state (carried)
        pltpu.VMEM((Bb, H), jnp.float32),            # c state (carried)
    ]
    if fuse_fc:
        fc_w_t, fc_b = fc
        C = fc_w_t.shape[1]
        in_specs += [_const_spec((H, C)), _const_spec((1, C))]
        operands += [fc_w_t, fc_b]
        scratch += [pltpu.VMEM((Tt, Bb, H), jnp.bfloat16)]   # chunk hidden seq

    return pl.pallas_call(
        _make_lstm_kernel(fuse_fc, unroll),
        out_shape=jax.ShapeDtypeStruct((T, B, out_feat), out_dtype),
        grid_spec=pltpu.PrefetchScalarGridSpec(
            num_scalar_prefetch=0,
            # Time axis is the inner, sequential ("arbitrary") axis; (h,c)
            # scratch is carried across its chunks. Do not reorder.
            grid=(nb, T // Tt),
            in_specs=in_specs,
            out_specs=pl.BlockSpec((Tt, Bb, out_feat),
                                   lambda b_, t_: (t_, b_, 0)),
            scratch_shapes=scratch,
        ),
        compiler_params=pltpu.CompilerParams(
            dimension_semantics=("parallel", "arbitrary"),
            vmem_limit_bytes=vmem_limit,
        ),
    )(*operands)


@functools.partial(jax.jit, static_argnames=("num_classes",))
def lstm_rnn_forward(x, params, *, num_classes):
    """Forward pass matching LSTM_RNN.forward.

    x: (B, T, input_size) float32 (batch_first, like PyTorch)
    returns: (B, T, num_classes) float32
    """
    layers = params["layers"]
    n_layers = len(layers)

    h = jnp.transpose(x, (1, 0, 2)).astype(jnp.bfloat16)   # time-major, bf16
    for l, layer in enumerate(layers):
        fc = (params["fc_w_t"], params["fc_b"]) if l == n_layers - 1 else None
        h = _lstm_layer(h, layer["w_ih_t"], layer["w_hh_t"], layer["b"], fc=fc)
    out = h[:, :, :num_classes]          # drop the lane padding of the fc out
    return jnp.transpose(out, (1, 0, 2))  # (B, T, C)


def init_params(key, input_size, hidden_size, num_layers, num_classes):
    """PyTorch-style uniform(-1/sqrt(H), 1/sqrt(H)) init.

    Kernel params: bf16 weights, pre-transposed, with the hidden size and
    num_classes zero-padded up to multiples of 128 so all in-kernel slices /
    stores are lane-aligned (padding is exact: padded units stay 0).
    Also returns unpadded f32 reference params using the SAME bf16-quantized
    weight values.
    """
    H = hidden_size
    Hp = _round_up(H, _LANE)
    Cp = _round_up(num_classes, _LANE)
    bound = 1.0 / float(H) ** 0.5

    layers, ref_layers = [], []
    for l in range(num_layers):
        din = input_size if l == 0 else H
        din_pad = input_size if l == 0 else Hp
        key, k1, k2, k3, k4 = jax.random.split(key, 5)
        w_ih = jax.random.uniform(k1, (4 * H, din), jnp.float32, -bound, bound)
        w_hh = jax.random.uniform(k2, (4 * H, H), jnp.float32, -bound, bound)
        b_ih = jax.random.uniform(k3, (4 * H,), jnp.float32, -bound, bound)
        b_hh = jax.random.uniform(k4, (4 * H,), jnp.float32, -bound, bound)
        w_ih_bf = w_ih.astype(jnp.bfloat16)
        w_hh_bf = w_hh.astype(jnp.bfloat16)
        b = b_ih + b_hh

        wih_t_pad = jnp.zeros((din_pad, 4 * Hp), jnp.bfloat16)
        whh_t_pad = jnp.zeros((Hp, 4 * Hp), jnp.bfloat16)
        b_pad = jnp.zeros((1, 4 * Hp), jnp.float32)
        for g in range(4):                          # gate g -> lane-aligned cols
            wih_t_pad = wih_t_pad.at[:din, g * Hp:g * Hp + H].set(
                w_ih_bf[g * H:(g + 1) * H, :].T)
            whh_t_pad = whh_t_pad.at[:H, g * Hp:g * Hp + H].set(
                w_hh_bf[g * H:(g + 1) * H, :].T)
            b_pad = b_pad.at[0, g * Hp:g * Hp + H].set(b[g * H:(g + 1) * H])
        layers.append({"w_ih_t": wih_t_pad, "w_hh_t": whh_t_pad, "b": b_pad})
        ref_layers.append({"w_ih_t": w_ih_bf.T.astype(jnp.float32),
                           "w_hh_t": w_hh_bf.T.astype(jnp.float32),
                           "b": b.reshape(1, 4 * H)})

    key, k1, k2 = jax.random.split(key, 3)
    fc_w = jax.random.uniform(k1, (num_classes, H), jnp.float32, -bound, bound)
    fc_b = jax.random.uniform(k2, (num_classes,), jnp.float32, -bound, bound)
    fc_w_bf = fc_w.astype(jnp.bfloat16)
    fc_w_t_pad = jnp.zeros((Hp, Cp), jnp.bfloat16).at[:H, :num_classes].set(
        fc_w_bf.T)
    fc_b_pad = jnp.zeros((1, Cp), jnp.float32).at[0, :num_classes].set(fc_b)

    params = {"layers": layers, "fc_w_t": fc_w_t_pad, "fc_b": fc_b_pad}
    ref_params = {"layers": ref_layers,
                  "fc_w_t": fc_w_bf.T.astype(jnp.float32),
                  "fc_b": fc_b.reshape(1, num_classes)}
    return params, ref_params


# --------------------------- pure-JAX reference ------------------------------


def lstm_rnn_reference(x, ref_params):
    B, T, _ = x.shape
    H = ref_params["layers"][0]["w_hh_t"].shape[0]
    h_in = x
    for layer in ref_params["layers"]:
        w_ih_t, w_hh_t, b = layer["w_ih_t"], layer["w_hh_t"], layer["b"]
        h = jnp.zeros((B, H), jnp.float32)
        c = jnp.zeros((B, H), jnp.float32)
        outs = []
        for t in range(T):
            gates = h_in[:, t, :] @ w_ih_t + h @ w_hh_t + b
            i_g = jax.nn.sigmoid(gates[:, 0 * H:1 * H])
            f_g = jax.nn.sigmoid(gates[:, 1 * H:2 * H])
            g_g = jnp.tanh(gates[:, 2 * H:3 * H])
            o_g = jax.nn.sigmoid(gates[:, 3 * H:4 * H])
            c = f_g * c + i_g * g_g
            h = o_g * jnp.tanh(c)
            outs.append(h)
        h_in = jnp.stack(outs, axis=1)
    return h_in @ ref_params["fc_w_t"] + ref_params["fc_b"]


# ---------------------------------- main -------------------------------------


if __name__ == "__main__":
    input_size, hidden_size, num_layers, num_classes = 32, 32, 2, 1
    B, T = 8, 8

    key = jax.random.PRNGKey(0)
    key, kx, kp = jax.random.split(key, 3)
    x = jax.random.normal(kx, (B, T, input_size), jnp.float32)
    params, ref_params = init_params(kp, input_size, hidden_size, num_layers,
                                     num_classes)

    out = jax.block_until_ready(
        lstm_rnn_forward(x, params, num_classes=num_classes))
    assert out.shape == (B, T, num_classes), out.shape

    ref = lstm_rnn_reference(x, ref_params)
    max_err = float(jnp.max(jnp.abs(out - ref)))
    # bf16 MXU operands / bf16 activation scratch vs. the f32 reference
    # (which shares the same bf16-quantized weights): loose tolerance.
    assert max_err < 5e-2, max_err

    print("KERNEL_OK")
</pallas_src>

<mosaic_0001>
module attributes {stable_mosaic.version = 11 : i64} {
  func.func @kernel(%arg0: i32, %arg1: i32, %arg2: memref<8x8x32xbf16, #tpu.memory_space<vmem>>, %arg3: memref<32x512xbf16, #tpu.memory_space<vmem>>, %arg4: memref<128x512xbf16, #tpu.memory_space<vmem>>, %arg5: memref<1x512xf32, #tpu.memory_space<vmem>>, %arg6: memref<8x8x128xbf16, #tpu.memory_space<vmem>>, %arg7: memref<8x8x512xbf16, #tpu.memory_space<vmem>>, %arg8: memref<8x128xf32, #tpu.memory_space<vmem>>, %arg9: memref<8x128xf32, #tpu.memory_space<vmem>>) attributes {dimension_semantics = [#tpu.dimension_semantics<parallel>, #tpu.dimension_semantics<arbitrary>], iteration_bounds = array<i64: 1, 1>, scalar_prefetch = 0 : i64, scratch_operands = 3 : i64, tpu.core_type = #tpu.core_type<tc>, window_params = [{transform_indices = @transform_0, window_bounds = array<i64: 8, 8, 32>}, {pipeline_mode = #tpu.pipeline_mode<synchronous>, transform_indices = @transform_1, window_bounds = array<i64: 32, 512>}, {pipeline_mode = #tpu.pipeline_mode<synchronous>, transform_indices = @transform_2, window_bounds = array<i64: 128, 512>}, {pipeline_mode = #tpu.pipeline_mode<synchronous>, transform_indices = @transform_3, window_bounds = array<i64: 1, 512>}, {transform_indices = @transform_4, window_bounds = array<i64: 8, 8, 128>}]} {
    %c0_i32 = arith.constant 0 : i32
    %0 = arith.cmpi eq, %arg1, %c0_i32 : i32
    %1 = arith.extui %0 : i1 to i32
    %c0_i32_0 = arith.constant 0 : i32
    %2 = arith.cmpi ne, %1, %c0_i32_0 : i32
    scf.if %2 {
      %cst_141 = arith.constant 0.000000e+00 : f32
      %342 = vector.broadcast %cst_141 : f32 to vector<8x128xf32>
      %c0_142 = arith.constant 0 : index
      %c0_143 = arith.constant 0 : index
      %343 = vector.load %arg8[%c0_142, %c0_143] : memref<8x128xf32, #tpu.memory_space<vmem>>, vector<8x128xf32>
      tpu.vector_store %arg8[%c0_142, %c0_143], %342 {strides = array<i32>} : memref<8x128xf32, #tpu.memory_space<vmem>>, vector<8x128xf32>,
      %cst_144 = arith.constant 0.000000e+00 : f32
      %344 = vector.broadcast %cst_144 : f32 to vector<8x128xf32>
      %c0_145 = arith.constant 0 : index
      %c0_146 = arith.constant 0 : index
      %345 = vector.load %arg9[%c0_145, %c0_146] : memref<8x128xf32, #tpu.memory_space<vmem>>, vector<8x128xf32>
      tpu.vector_store %arg9[%c0_145, %c0_146], %344 {strides = array<i32>} : memref<8x128xf32, #tpu.memory_space<vmem>>, vector<8x128xf32>,
    } else {
    }
    %c0 = arith.constant 0 : index
    %c0_1 = arith.constant 0 : index
    %c0_2 = arith.constant 0 : index
    %3 = vector.load %arg2[%c0, %c0_1, %c0_2] : memref<8x8x32xbf16, #tpu.memory_space<vmem>>, vector<8x8x32xbf16>
    %4 = vector.shape_cast %3 : vector<8x8x32xbf16> to vector<64x32xbf16>
    %c0_3 = arith.constant 0 : index
    %c0_4 = arith.constant 0 : index
    %5 = vector.load %arg3[%c0_3, %c0_4] : memref<32x512xbf16, #tpu.memory_space<vmem>>, vector<32x512xbf16>
    %cst = arith.constant dense<0.000000e+00> : vector<64x512xf32>
    %6 = tpu.matmul %4, %5, %cst {dimension_numbers = #tpu.dot_dimension_numbers<[1], [0], [0], [1], [0, 0, 1, 1], [], []>} : vector<64x32xbf16>, vector<32x512xbf16>, vector<64x512xf32> -> vector<64x512xf32>
    %c0_5 = arith.constant 0 : index
    %c0_6 = arith.constant 0 : index
    %7 = vector.load %arg5[%c0_5, %c0_6] : memref<1x512xf32, #tpu.memory_space<vmem>>, vector<1x512xf32>
    %8 = vector.broadcast %7 : vector<1x512xf32> to vector<64x512xf32>
    %9 = arith.addf %6, %8 : vector<64x512xf32>
    %10 = vector.shape_cast %9 : vector<64x512xf32> to vector<8x8x512xf32>
    %11 = arith.truncf %10 : vector<8x8x512xf32> to vector<8x8x512xbf16>
    %c0_7 = arith.constant 0 : index
    %c0_8 = arith.constant 0 : index
    %c0_9 = arith.constant 0 : index
    %12 = vector.load %arg7[%c0_7, %c0_8, %c0_9] : memref<8x8x512xbf16, #tpu.memory_space<vmem>>, vector<8x8x512xbf16>
    tpu.vector_store %arg7[%c0_7, %c0_8, %c0_9], %11 {strides = array<i32>} : memref<8x8x512xbf16, #tpu.memory_space<vmem>>, vector<8x8x512xbf16>,
    %c0_10 = arith.constant 0 : index
    %c0_11 = arith.constant 0 : index
    %13 = vector.load %arg4[%c0_10, %c0_11] : memref<128x512xbf16, #tpu.memory_space<vmem>>, vector<128x512xbf16>
    %c0_i32_12 = arith.constant 0 : i32
    %c0_13 = arith.constant 0 : index
    %c0_14 = arith.constant 0 : index
    %14 = vector.load %arg8[%c0_13, %c0_14] : memref<8x128xf32, #tpu.memory_space<vmem>>, vector<8x128xf32>
    %15 = arith.truncf %14 : vector<8x128xf32> to vector<8x128xbf16>
    %cst_15 = arith.constant dense<0.000000e+00> : vector<8x512xf32>
    %16 = tpu.matmul %15, %13, %cst_15 {dimension_numbers = #tpu.dot_dimension_numbers<[1], [0], [0], [1], [0, 0, 1, 1], [], []>} : vector<8x128xbf16>, vector<128x512xbf16>, vector<8x512xf32> -> vector<8x512xf32>
    %17 = arith.index_cast %c0_i32_12 : i32 to index
    %c0_16 = arith.constant 0 : index
    %c0_17 = arith.constant 0 : index
    %18 = vector.load %arg7[%17, %c0_16, %c0_17] : memref<8x8x512xbf16, #tpu.memory_space<vmem>>, vector<1x8x512xbf16>
    %19 = vector.shape_cast %18 : vector<1x8x512xbf16> to vector<8x512xbf16>
    %20 = arith.extf %19 : vector<8x512xbf16> to vector<8x512xf32>
    %21 = arith.addf %20, %16 : vector<8x512xf32>
    %22 = vector.extract_strided_slice %21 {offsets = [0, 0], sizes = [8, 128], strides = [1, 1]} : vector<8x512xf32> to vector<8x128xf32>
    %23 = arith.negf %22 : vector<8x128xf32>
    %24 = math.exp %23 : vector<8x128xf32>
    %cst_18 = arith.constant 1.000000e+00 : f32
    %25 = vector.broadcast %cst_18 : f32 to vector<8x128xf32>
    %26 = arith.addf %25, %24 : vector<8x128xf32>
    %27 = arith.divf %25, %26 : vector<8x128xf32>
    %28 = vector.extract_strided_slice %21 {offsets = [0, 128], sizes = [8, 128], strides = [1, 1]} : vector<8x512xf32> to vector<8x128xf32>
    %29 = arith.negf %28 : vector<8x128xf32>
    %30 = math.exp %29 : vector<8x128xf32>
    %cst_19 = arith.constant 1.000000e+00 : f32
    %31 = vector.broadcast %cst_19 : f32 to vector<8x128xf32>
    %32 = arith.addf %31, %30 : vector<8x128xf32>
    %33 = arith.divf %31, %32 : vector<8x128xf32>
    %34 = vector.extract_strided_slice %21 {offsets = [0, 256], sizes = [8, 128], strides = [1, 1]} : vector<8x512xf32> to vector<8x128xf32>
    %35 = math.tanh %34 : vector<8x128xf32>
    %36 = vector.extract_strided_slice %21 {offsets = [0, 384], sizes = [8, 128], strides = [1, 1]} : vector<8x512xf32> to vector<8x128xf32>
    %37 = arith.negf %36 : vector<8x128xf32>
    %38 = math.exp %37 : vector<8x128xf32>
    %cst_20 = arith.constant 1.000000e+00 : f32
    %39 = vector.broadcast %cst_20 : f32 to vector<8x128xf32>
    %40 = arith.addf %39, %38 : vector<8x128xf32>
    %41 = arith.divf %39, %40 : vector<8x128xf32>
    %c0_21 = arith.constant 0 : index
    %c0_22 = arith.constant 0 : index
    %42 = vector.load %arg9[%c0_21, %c0_22] : memref<8x128xf32, #tpu.memory_space<vmem>>, vector<8x128xf32>
    %43 = arith.mulf %33, %42 : vector<8x128xf32>
    %44 = arith.mulf %27, %35 : vector<8x128xf32>
    %45 = arith.addf %43, %44 : vector<8x128xf32>
    %46 = math.tanh %45 : vector<8x128xf32>
    %47 = arith.mulf %41, %46 : vector<8x128xf32>
    %c0_23 = arith.constant 0 : index
    %c0_24 = arith.constant 0 : index
    %48 = vector.load %arg9[%c0_23, %c0_24] : memref<8x128xf32, #tpu.memory_space<vmem>>, vector<8x128xf32>
    tpu.vector_store %arg9[%c0_23, %c0_24], %45 {strides = array<i32>} : memref<8x128xf32, #tpu.memory_space<vmem>>, vector<8x128xf32>,
    %c0_25 = arith.constant 0 : index
    %c0_26 = arith.constant 0 : index
    %49 = vector.load %arg8[%c0_25, %c0_26] : memref<8x128xf32, #tpu.memory_space<vmem>>, vector<8x128xf32>
    tpu.vector_store %arg8[%c0_25, %c0_26], %47 {strides = array<i32>} : memref<8x128xf32, #tpu.memory_space<vmem>>, vector<8x128xf32>,
    %50 = arith.truncf %47 : vector<8x128xf32> to vector<8x128xbf16>
    %51 = arith.index_cast %c0_i32_12 : i32 to index
    %c0_27 = arith.constant 0 : index
    %c0_28 = arith.constant 0 : index
    %52 = vector.load %arg6[%51, %c0_27, %c0_28] : memref<8x8x128xbf16, #tpu.memory_space<vmem>>, vector<1x8x128xbf16>
    %53 = vector.shape_cast %52 : vector<1x8x128xbf16> to vector<8x128xbf16>
    %54 = vector.shape_cast %50 : vector<8x128xbf16> to vector<1x8x128xbf16>
    tpu.vector_store %arg6[%51, %c0_27, %c0_28], %54 {strides = array<i32>} : memref<8x8x128xbf16, #tpu.memory_space<vmem>>, vector<1x8x128xbf16>,
    %c1_i32 = arith.constant 1 : i32
    %c0_29 = arith.constant 0 : index
    %c0_30 = arith.constant 0 : index
    %55 = vector.load %arg8[%c0_29, %c0_30] : memref<8x128xf32, #tpu.memory_space<vmem>>, vector<8x128xf32>
    %56 = arith.truncf %55 : vector<8x128xf32> to vector<8x128xbf16>
    %cst_31 = arith.constant dense<0.000000e+00> : vector<8x512xf32>
    %57 = tpu.matmul %56, %13, %cst_31 {dimension_numbers = #tpu.dot_dimension_numbers<[1], [0], [0], [1], [0, 0, 1, 1], [], []>} : vector<8x128xbf16>, vector<128x512xbf16>, vector<8x512xf32> -> vector<8x512xf32>
    %58 = arith.index_cast %c1_i32 : i32 to index
    %c0_32 = arith.constant 0 : index
    %c0_33 = arith.constant 0 : index
    %59 = vector.load %arg7[%58, %c0_32, %c0_33] : memref<8x8x512xbf16, #tpu.memory_space<vmem>>, vector<1x8x512xbf16>
    %60 = vector.shape_cast %59 : vector<1x8x512xbf16> to vector<8x512xbf16>
    %61 = arith.extf %60 : vector<8x512xbf16> to vector<8x512xf32>
    %62 = arith.addf %61, %57 : vector<8x512xf32>
    %63 = vector.extract_strided_slice %62 {offsets = [0, 0], sizes = [8, 128], strides = [1, 1]} : vector<8x512xf32> to vector<8x128xf32>
    %64 = arith.negf %63 : vector<8x128xf32>
    %65 = math.exp %64 : vector<8x128xf32>
    %cst_34 = arith.constant 1.000000e+00 : f32
    %66 = vector.broadcast %cst_34 : f32 to vector<8x128xf32>
    %67 = arith.addf %66, %65 : vector<8x128xf32>
    %68 = arith.divf %66, %67 : vector<8x128xf32>
    %69 = vector.extract_strided_slice %62 {offsets = [0, 128], sizes = [8, 128], strides = [1, 1]} : vector<8x512xf32> to vector<8x128xf32>
    %70 = arith.negf %69 : vector<8x128xf32>
    %71 = math.exp %70 : vector<8x128xf32>
    %cst_35 = arith.constant 1.000000e+00 : f32
    %72 = vector.broadcast %cst_35 : f32 to vector<8x128xf32>
    %73 = arith.addf %72, %71 : vector<8x128xf32>
    %74 = arith.divf %72, %73 : vector<8x128xf32>
    %75 = vector.extract_strided_slice %62 {offsets = [0, 256], sizes = [8, 128], strides = [1, 1]} : vector<8x512xf32> to vector<8x128xf32>
    %76 = math.tanh %75 : vector<8x128xf32>
    %77 = vector.extract_strided_slice %62 {offsets = [0, 384], sizes = [8, 128], strides = [1, 1]} : vector<8x512xf32> to vector<8x128xf32>
    %78 = arith.negf %77 : vector<8x128xf32>
    %79 = math.exp %78 : vector<8x128xf32>
    %cst_36 = arith.constant 1.000000e+00 : f32
    %80 = vector.broadcast %cst_36 : f32 to vector<8x128xf32>
    %81 = arith.addf %80, %79 : vector<8x128xf32>
    %82 = arith.divf %80, %81 : vector<8x128xf32>
    %c0_37 = arith.constant 0 : index
    %c0_38 = arith.constant 0 : index
    %83 = vector.load %arg9[%c0_37, %c0_38] : memref<8x128xf32, #tpu.memory_space<vmem>>, vector<8x128xf32>
    %84 = arith.mulf %74, %83 : vector<8x128xf32>
    %85 = arith.mulf %68, %76 : vector<8x128xf32>
    %86 = arith.addf %84, %85 : vector<8x128xf32>
    %87 = math.tanh %86 : vector<8x128xf32>
    %88 = arith.mulf %82, %87 : vector<8x128xf32>
    %c0_39 = arith.constant 0 : index
    %c0_40 = arith.constant 0 : index
    %89 = vector.load %arg9[%c0_39, %c0_40] : memref<8x128xf32, #tpu.memory_space<vmem>>, vector<8x128xf32>
    tpu.vector_store %arg9[%c0_39, %c0_40], %86 {strides = array<i32>} : memref<8x128xf32, #tpu.memory_space<vmem>>, vector<8x128xf32>,
    %c0_41 = arith.constant 0 : index
    %c0_42 = arith.constant 0 : index
    %90 = vector.load %arg8[%c0_41, %c0_42] : memref<8x128xf32, #tpu.memory_space<vmem>>, vector<8x128xf32>
    tpu.vector_store %arg8[%c0_41, %c0_42], %88 {strides = array<i32>} : memref<8x128xf32, #tpu.memory_space<vmem>>, vector<8x128xf32>,
    %91 = arith.truncf %88 : vector<8x128xf32> to vector<8x128xbf16>
    %92 = arith.index_cast %c1_i32 : i32 to index
    %c0_43 = arith.constant 0 : index
    %c0_44 = arith.constant 0 : index
    %93 = vector.load %arg6[%92, %c0_43, %c0_44] : memref<8x8x128xbf16, #tpu.memory_space<vmem>>, vector<1x8x128xbf16>
    %94 = vector.shape_cast %93 : vector<1x8x128xbf16> to vector<8x128xbf16>
    %95 = vector.shape_cast %91 : vector<8x128xbf16> to vector<1x8x128xbf16>
    tpu.vector_store %arg6[%92, %c0_43, %c0_44], %95 {strides = array<i32>} : memref<8x8x128xbf16, #tpu.memory_space<vmem>>, vector<1x8x128xbf16>,
    %c2_i32 = arith.constant 2 : i32
    %c0_45 = arith.constant 0 : index
    %c0_46 = arith.constant 0 : index
    %96 = vector.load %arg8[%c0_45, %c0_46] : memref<8x128xf32, #tpu.memory_space<vmem>>, vector<8x128xf32>
    %97 = arith.truncf %96 : vector<8x128xf32> to vector<8x128xbf16>
    %cst_47 = arith.constant dense<0.000000e+00> : vector<8x512xf32>
    %98 = tpu.matmul %97, %13, %cst_47 {dimension_numbers = #tpu.dot_dimension_numbers<[1], [0], [0], [1], [0, 0, 1, 1], [], []>} : vector<8x128xbf16>, vector<128x512xbf16>, vector<8x512xf32> -> vector<8x512xf32>
    %99 = arith.index_cast %c2_i32 : i32 to index
    %c0_48 = arith.constant 0 : index
    %c0_49 = arith.constant 0 : index
    %100 = vector.load %arg7[%99, %c0_48, %c0_49] : memref<8x8x512xbf16, #tpu.memory_space<vmem>>, vector<1x8x512xbf16>
    %101 = vector.shape_cast %100 : vector<1x8x512xbf16> to vector<8x512xbf16>
    %102 = arith.extf %101 : vector<8x512xbf16> to vector<8x512xf32>
    %103 = arith.addf %102, %98 : vector<8x512xf32>
    %104 = vector.extract_strided_slice %103 {offsets = [0, 0], sizes = [8, 128], strides = [1, 1]} : vector<8x512xf32> to vector<8x128xf32>
    %105 = arith.negf %104 : vector<8x128xf32>
    %106 = math.exp %105 : vector<8x128xf32>
    %cst_50 = arith.constant 1.000000e+00 : f32
    %107 = vector.broadcast %cst_50 : f32 to vector<8x128xf32>
    %108 = arith.addf %107, %106 : vector<8x128xf32>
    %109 = arith.divf %107, %108 : vector<8x128xf32>
    %110 = vector.extract_strided_slice %103 {offsets = [0, 128], sizes = [8, 128], strides = [1, 1]} : vector<8x512xf32> to vector<8x128xf32>
    %111 = arith.negf %110 : vector<8x128xf32>
    %112 = math.exp %111 : vector<8x128xf32>
    %cst_51 = arith.constant 1.000000e+00 : f32
    %113 = vector.broadcast %cst_51 : f32 to vector<8x128xf32>
    %114 = arith.addf %113, %112 : vector<8x128xf32>
    %115 = arith.divf %113, %114 : vector<8x128xf32>
    %116 = vector.extract_strided_slice %103 {offsets = [0, 256], sizes = [8, 128], strides = [1, 1]} : vector<8x512xf32> to vector<8x128xf32>
    %117 = math.tanh %116 : vector<8x128xf32>
    %118 = vector.extract_strided_slice %103 {offsets = [0, 384], sizes = [8, 128], strides = [1, 1]} : vector<8x512xf32> to vector<8x128xf32>
    %119 = arith.negf %118 : vector<8x128xf32>
    %120 = math.exp %119 : vector<8x128xf32>
    %cst_52 = arith.constant 1.000000e+00 : f32
    %121 = vector.broadcast %cst_52 : f32 to vector<8x128xf32>
    %122 = arith.addf %121, %120 : vector<8x128xf32>
    %123 = arith.divf %121, %122 : vector<8x128xf32>
    %c0_53 = arith.constant 0 : index
    %c0_54 = arith.constant 0 : index
    %124 = vector.load %arg9[%c0_53, %c0_54] : memref<8x128xf32, #tpu.memory_space<vmem>>, vector<8x128xf32>
    %125 = arith.mulf %115, %124 : vector<8x128xf32>
    %126 = arith.mulf %109, %117 : vector<8x128xf32>
    %127 = arith.addf %125, %126 : vector<8x128xf32>
    %128 = math.tanh %127 : vector<8x128xf32>
    %129 = arith.mulf %123, %128 : vector<8x128xf32>
    %c0_55 = arith.constant 0 : index
    %c0_56 = arith.constant 0 : index
    %130 = vector.load %arg9[%c0_55, %c0_56] : memref<8x128xf32, #tpu.memory_space<vmem>>, vector<8x128xf32>
    tpu.vector_store %arg9[%c0_55, %c0_56], %127 {strides = array<i32>} : memref<8x128xf32, #tpu.memory_space<vmem>>, vector<8x128xf32>,
    %c0_57 = arith.constant 0 : index
    %c0_58 = arith.constant 0 : index
    %131 = vector.load %arg8[%c0_57, %c0_58] : memref<8x128xf32, #tpu.memory_space<vmem>>, vector<8x128xf32>
    tpu.vector_store %arg8[%c0_57, %c0_58], %129 {strides = array<i32>} : memref<8x128xf32, #tpu.memory_space<vmem>>, vector<8x128xf32>,
    %132 = arith.truncf %129 : vector<8x128xf32> to vector<8x128xbf16>
    %133 = arith.index_cast %c2_i32 : i32 to index
    %c0_59 = arith.constant 0 : index
    %c0_60 = arith.constant 0 : index
    %134 = vector.load %arg6[%133, %c0_59, %c0_60] : memref<8x8x128xbf16, #tpu.memory_space<vmem>>, vector<1x8x128xbf16>
    %135 = vector.shape_cast %134 : vector<1x8x128xbf16> to vector<8x128xbf16>
    %136 = vector.shape_cast %132 : vector<8x128xbf16> to vector<1x8x128xbf16>
    tpu.vector_store %arg6[%133, %c0_59, %c0_60], %136 {strides = array<i32>} : memref<8x8x128xbf16, #tpu.memory_space<vmem>>, vector<1x8x128xbf16>,
    %c3_i32 = arith.constant 3 : i32
    %c0_61 = arith.constant 0 : index
    %c0_62 = arith.constant 0 : index
    %137 = vector.load %arg8[%c0_61, %c0_62] : memref<8x128xf32, #tpu.memory_space<vmem>>, vector<8x128xf32>
    %138 = arith.truncf %137 : vector<8x128xf32> to vector<8x128xbf16>
    %cst_63 = arith.constant dense<0.000000e+00> : vector<8x512xf32>
    %139 = tpu.matmul %138, %13, %cst_63 {dimension_numbers = #tpu.dot_dimension_numbers<[1], [0], [0], [1], [0, 0, 1, 1], [], []>} : vector<8x128xbf16>, vector<128x512xbf16>, vector<8x512xf32> -> vector<8x512xf32>
    %140 = arith.index_cast %c3_i32 : i32 to index
    %c0_64 = arith.constant 0 : index
    %c0_65 = arith.constant 0 : index
    %141 = vector.load %arg7[%140, %c0_64, %c0_65] : memref<8x8x512xbf16, #tpu.memory_space<vmem>>, vector<1x8x512xbf16>
    %142 = vector.shape_cast %141 : vector<1x8x512xbf16> to vector<8x512xbf16>
    %143 = arith.extf %142 : vector<8x512xbf16> to vector<8x512xf32>
    %144 = arith.addf %143, %139 : vector<8x512xf32>
    %145 = vector.extract_strided_slice %144 {offsets = [0, 0], sizes = [8, 128], strides = [1, 1]} : vector<8x512xf32> to vector<8x128xf32>
    %146 = arith.negf %145 : vector<8x128xf32>
    %147 = math.exp %146 : vector<8x128xf32>
    %cst_66 = arith.constant 1.000000e+00 : f32
    %148 = vector.broadcast %cst_66 : f32 to vector<8x128xf32>
    %149 = arith.addf %148, %147 : vector<8x128xf32>
    %150 = arith.divf %148, %149 : vector<8x128xf32>
    %151 = vector.extract_strided_slice %144 {offsets = [0, 128], sizes = [8, 128], strides = [1, 1]} : vector<8x512xf32> to vector<8x128xf32>
    %152 = arith.negf %151 : vector<8x128xf32>
    %153 = math.exp %152 : vector<8x128xf32>
    %cst_67 = arith.constant 1.000000e+00 : f32
    %154 = vector.broadcast %cst_67 : f32 to vector<8x128xf32>
    %155 = arith.addf %154, %153 : vector<8x128xf32>
    %156 = arith.divf %154, %155 : vector<8x128xf32>
    %157 = vector.extract_strided_slice %144 {offsets = [0, 256], sizes = [8, 128], strides = [1, 1]} : vector<8x512xf32> to vector<8x128xf32>
    %158 = math.tanh %157 : vector<8x128xf32>
    %159 = vector.extract_strided_slice %144 {offsets = [0, 384], sizes = [8, 128], strides = [1, 1]} : vector<8x512xf32> to vector<8x128xf32>
    %160 = arith.negf %159 : vector<8x128xf32>
    %161 = math.exp %160 : vector<8x128xf32>
    %cst_68 = arith.constant 1.000000e+00 : f32
    %162 = vector.broadcast %cst_68 : f32 to vector<8x128xf32>
    %163 = arith.addf %162, %161 : vector<8x128xf32>
    %164 = arith.divf %162, %163 : vector<8x128xf32>
    %c0_69 = arith.constant 0 : index
    %c0_70 = arith.constant 0 : index
    %165 = vector.load %arg9[%c0_69, %c0_70] : memref<8x128xf32, #tpu.memory_space<vmem>>, vector<8x128xf32>
    %166 = arith.mulf %156, %165 : vector<8x128xf32>
    %167 = arith.mulf %150, %158 : vector<8x128xf32>
    %168 = arith.addf %166, %167 : vector<8x128xf32>
    %169 = math.tanh %168 : vector<8x128xf32>
    %170 = arith.mulf %164, %169 : vector<8x128xf32>
    %c0_71 = arith.constant 0 : index
    %c0_72 = arith.constant 0 : index
    %171 = vector.load %arg9[%c0_71, %c0_72] : memref<8x128xf32, #tpu.memory_space<vmem>>, vector<8x128xf32>
    tpu.vector_store %arg9[%c0_71, %c0_72], %168 {strides = array<i32>} : memref<8x128xf32, #tpu.memory_space<vmem>>, vector<8x128xf32>,
    %c0_73 = arith.constant 0 : index
    %c0_74 = arith.constant 0 : index
    %172 = vector.load %arg8[%c0_73, %c0_74] : memref<8x128xf32, #tpu.memory_space<vmem>>, vector<8x128xf32>
    tpu.vector_store %arg8[%c0_73, %c0_74], %170 {strides = array<i32>} : memref<8x128xf32, #tpu.memory_space<vmem>>, vector<8x128xf32>,
    %173 = arith.truncf %170 : vector<8x128xf32> to vector<8x128xbf16>
    %174 = arith.index_cast %c3_i32 : i32 to index
    %c0_75 = arith.constant 0 : index
    %c0_76 = arith.constant 0 : index
    %175 = vector.load %arg6[%174, %c0_75, %c0_76] : memref<8x8x128xbf16, #tpu.memory_space<vmem>>, vector<1x8x128xbf16>
    %176 = vector.shape_cast %175 : vector<1x8x128xbf16> to vector<8x128xbf16>
    %177 = vector.shape_cast %173 : vector<8x128xbf16> to vector<1x8x128xbf16>
    tpu.vector_store %arg6[%174, %c0_75, %c0_76], %177 {strides = array<i32>} : memref<8x8x128xbf16, #tpu.memory_space<vmem>>, vector<1x8x128xbf16>,
    %c4_i32 = arith.constant 4 : i32
    %c0_77 = arith.constant 0 : index
    %c0_78 = arith.constant 0 : index
    %178 = vector.load %arg8[%c0_77, %c0_78] : memref<8x128xf32, #tpu.memory_space<vmem>>, vector<8x128xf32>
    %179 = arith.truncf %178 : vector<8x128xf32> to vector<8x128xbf16>
    %cst_79 = arith.constant dense<0.000000e+00> : vector<8x512xf32>
    %180 = tpu.matmul %179, %13, %cst_79 {dimension_numbers = #tpu.dot_dimension_numbers<[1], [0], [0], [1], [0, 0, 1, 1], [], []>} : vector<8x128xbf16>, vector<128x512xbf16>, vector<8x512xf32> -> vector<8x512xf32>
    %181 = arith.index_cast %c4_i32 : i32 to index
    %c0_80 = arith.constant 0 : index
    %c0_81 = arith.constant 0 : index
    %182 = vector.load %arg7[%181, %c0_80, %c0_81] : memref<8x8x512xbf16, #tpu.memory_space<vmem>>, vector<1x8x512xbf16>
    %183 = vector.shape_cast %182 : vector<1x8x512xbf16> to vector<8x512xbf16>
    %184 = arith.extf %183 : vector<8x512xbf16> to vector<8x512xf32>
    %185 = arith.addf %184, %180 : vector<8x512xf32>
    %186 = vector.extract_strided_slice %185 {offsets = [0, 0], sizes = [8, 128], strides = [1, 1]} : vector<8x512xf32> to vector<8x128xf32>
    %187 = arith.negf %186 : vector<8x128xf32>
    %188 = math.exp %187 : vector<8x128xf32>
    %cst_82 = arith.constant 1.000000e+00 : f32
    %189 = vector.broadcast %cst_82 : f32 to vector<8x128xf32>
    %190 = arith.addf %189, %188 : vector<8x128xf32>
    %191 = arith.divf %189, %190 : vector<8x128xf32>
    %192 = vector.extract_strided_slice %185 {offsets = [0, 128], sizes = [8, 128], strides = [1, 1]} : vector<8x512xf32> to vector<8x128xf32>
    %193 = arith.negf %192 : vector<8x128xf32>
    %194 = math.exp %193 : vector<8x128xf32>
    %cst_83 = arith.constant 1.000000e+00 : f32
    %195 = vector.broadcast %cst_83 : f32 to vector<8x128xf32>
    %196 = arith.addf %195, %194 : vector<8x128xf32>
    %197 = arith.divf %195, %196 : vector<8x128xf32>
    %198 = vector.extract_strided_slice %185 {offsets = [0, 256], sizes = [8, 128], strides = [1, 1]} : vector<8x512xf32> to vector<8x128xf32>
    %199 = math.tanh %198 : vector<8x128xf32>
    %200 = vector.extract_strided_slice %185 {offsets = [0, 384], sizes = [8, 128], strides = [1, 1]} : vector<8x512xf32> to vector<8x128xf32>
    %201 = arith.negf %200 : vector<8x128xf32>
    %202 = math.exp %201 : vector<8x128xf32>
    %cst_84 = arith.constant 1.000000e+00 : f32
    %203 = vector.broadcast %cst_84 : f32 to vector<8x128xf32>
    %204 = arith.addf %203, %202 : vector<8x128xf32>
    %205 = arith.divf %203, %204 : vector<8x128xf32>
    %c0_85 = arith.constant 0 : index
    %c0_86 = arith.constant 0 : index
    %206 = vector.load %arg9[%c0_85, %c0_86] : memref<8x128xf32, #tpu.memory_space<vmem>>, vector<8x128xf32>
    %207 = arith.mulf %197, %206 : vector<8x128xf32>
    %208 = arith.mulf %191, %199 : vector<8x128xf32>
    %209 = arith.addf %207, %208 : vector<8x128xf32>
    %210 = math.tanh %209 : vector<8x128xf32>
    %211 = arith.mulf %205, %210 : vector<8x128xf32>
    %c0_87 = arith.constant 0 : index
    %c0_88 = arith.constant 0 : index
    %212 = vector.load %arg9[%c0_87, %c0_88] : memref<8x128xf32, #tpu.memory_space<vmem>>, vector<8x128xf32>
    tpu.vector_store %arg9[%c0_87, %c0_88], %209 {strides = array<i32>} : memref<8x128xf32, #tpu.memory_space<vmem>>, vector<8x128xf32>,
    %c0_89 = arith.constant 0 : index
    %c0_90 = arith.constant 0 : index
    %213 = vector.load %arg8[%c0_89, %c0_90] : memref<8x128xf32, #tpu.memory_space<vmem>>, vector<8x128xf32>
    tpu.vector_store %arg8[%c0_89, %c0_90], %211 {strides = array<i32>} : memref<8x128xf32, #tpu.memory_space<vmem>>, vector<8x128xf32>,
    %214 = arith.truncf %211 : vector<8x128xf32> to vector<8x128xbf16>
    %215 = arith.index_cast %c4_i32 : i32 to index
    %c0_91 = arith.constant 0 : index
    %c0_92 = arith.constant 0 : index
    %216 = vector.load %arg6[%215, %c0_91, %c0_92] : memref<8x8x128xbf16, #tpu.memory_space<vmem>>, vector<1x8x128xbf16>
    %217 = vector.shape_cast %216 : vector<1x8x128xbf16> to vector<8x128xbf16>
    %218 = vector.shape_cast %214 : vector<8x128xbf16> to vector<1x8x128xbf16>
    tpu.vector_store %arg6[%215, %c0_91, %c0_92], %218 {strides = array<i32>} : memref<8x8x128xbf16, #tpu.memory_space<vmem>>, vector<1x8x128xbf16>,
    %c5_i32 = arith.constant 5 : i32
    %c0_93 = arith.constant 0 : index
    %c0_94 = arith.constant 0 : index
    %219 = vector.load %arg8[%c0_93, %c0_94] : memref<8x128xf32, #tpu.memory_space<vmem>>, vector<8x128xf32>
    %220 = arith.truncf %219 : vector<8x128xf32> to vector<8x128xbf16>
    %cst_95 = arith.constant dense<0.000000e+00> : vector<8x512xf32>
    %221 = tpu.matmul %220, %13, %cst_95 {dimension_numbers = #tpu.dot_dimension_numbers<[1], [0], [0], [1], [0, 0, 1, 1], [], []>} : vector<8x128xbf16>, vector<128x512xbf16>, vector<8x512xf32> -> vector<8x512xf32>
    %222 = arith.index_cast %c5_i32 : i32 to index
    %c0_96 = arith.constant 0 : index
    %c0_97 = arith.constant 0 : index
    %223 = vector.load %arg7[%222, %c0_96, %c0_97] : memref<8x8x512xbf16, #tpu.memory_space<vmem>>, vector<1x8x512xbf16>
    %224 = vector.shape_cast %223 : vector<1x8x512xbf16> to vector<8x512xbf16>
    %225 = arith.extf %224 : vector<8x512xbf16> to vector<8x512xf32>
    %226 = arith.addf %225, %221 : vector<8x512xf32>
    %227 = vector.extract_strided_slice %226 {offsets = [0, 0], sizes = [8, 128], strides = [1, 1]} : vector<8x512xf32> to vector<8x128xf32>
    %228 = arith.negf %227 : vector<8x128xf32>
    %229 = math.exp %228 : vector<8x128xf32>
    %cst_98 = arith.constant 1.000000e+00 : f32
    %230 = vector.broadcast %cst_98 : f32 to vector<8x128xf32>
    %231 = arith.addf %230, %229 : vector<8x128xf32>
    %232 = arith.divf %230, %231 : vector<8x128xf32>
    %233 = vector.extract_strided_slice %226 {offsets = [0, 128], sizes = [8, 128], strides = [1, 1]} : vector<8x512xf32> to vector<8x128xf32>
    %234 = arith.negf %233 : vector<8x128xf32>
    %235 = math.exp %234 : vector<8x128xf32>
    %cst_99 = arith.constant 1.000000e+00 : f32
    %236 = vector.broadcast %cst_99 : f32 to vector<8x128xf32>
    %237 = arith.addf %236, %235 : vector<8x128xf32>
    %238 = arith.divf %236, %237 : vector<8x128xf32>
    %239 = vector.extract_strided_slice %226 {offsets = [0, 256], sizes = [8, 128], strides = [1, 1]} : vector<8x512xf32> to vector<8x128xf32>
    %240 = math.tanh %239 : vector<8x128xf32>
    %241 = vector.extract_strided_slice %226 {offsets = [0, 384], sizes = [8, 128], strides = [1, 1]} : vector<8x512xf32> to vector<8x128xf32>
    %242 = arith.negf %241 : vector<8x128xf32>
    %243 = math.exp %242 : vector<8x128xf32>
    %cst_100 = arith.constant 1.000000e+00 : f32
    %244 = vector.broadcast %cst_100 : f32 to vector<8x128xf32>
    %245 = arith.addf %244, %243 : vector<8x128xf32>
    %246 = arith.divf %244, %245 : vector<8x128xf32>
    %c0_101 = arith.constant 0 : index
    %c0_102 = arith.constant 0 : index
    %247 = vector.load %arg9[%c0_101, %c0_102] : memref<8x128xf32, #tpu.memory_space<vmem>>, vector<8x128xf32>
    %248 = arith.mulf %238, %247 : vector<8x128xf32>
    %249 = arith.mulf %232, %240 : vector<8x128xf32>
    %250 = arith.addf %248, %249 : vector<8x128xf32>
    %251 = math.tanh %250 : vector<8x128xf32>
    %252 = arith.mulf %246, %251 : vector<8x128xf32>
    %c0_103 = arith.constant 0 : index
    %c0_104 = arith.constant 0 : index
    %253 = vector.load %arg9[%c0_103, %c0_104] : memref<8x128xf32, #tpu.memory_space<vmem>>, vector<8x128xf32>
    tpu.vector_store %arg9[%c0_103, %c0_104], %250 {strides = array<i32>} : memref<8x128xf32, #tpu.memory_space<vmem>>, vector<8x128xf32>,
    %c0_105 = arith.constant 0 : index
    %c0_106 = arith.constant 0 : index
    %254 = vector.load %arg8[%c0_105, %c0_106] : memref<8x128xf32, #tpu.memory_space<vmem>>, vector<8x128xf32>
    tpu.vector_store %arg8[%c0_105, %c0_106], %252 {strides = array<i32>} : memref<8x128xf32, #tpu.memory_space<vmem>>, vector<8x128xf32>,
    %255 = arith.truncf %252 : vector<8x128xf32> to vector<8x128xbf16>
    %256 = arith.index_cast %c5_i32 : i32 to index
    %c0_107 = arith.constant 0 : index
    %c0_108 = arith.constant 0 : index
    %257 = vector.load %arg6[%256, %c0_107, %c0_108] : memref<8x8x128xbf16, #tpu.memory_space<vmem>>, vector<1x8x128xbf16>
    %258 = vector.shape_cast %257 : vector<1x8x128xbf16> to vector<8x128xbf16>
    %259 = vector.shape_cast %255 : vector<8x128xbf16> to vector<1x8x128xbf16>
    tpu.vector_store %arg6[%256, %c0_107, %c0_108], %259 {strides = array<i32>} : memref<8x8x128xbf16, #tpu.memory_space<vmem>>, vector<1x8x128xbf16>,
    %c6_i32 = arith.constant 6 : i32
    %c0_109 = arith.constant 0 : index
    %c0_110 = arith.constant 0 : index
    %260 = vector.load %arg8[%c0_109, %c0_110] : memref<8x128xf32, #tpu.memory_space<vmem>>, vector<8x128xf32>
    %261 = arith.truncf %260 : vector<8x128xf32> to vector<8x128xbf16>
    %cst_111 = arith.constant dense<0.000000e+00> : vector<8x512xf32>
    %262 = tpu.matmul %261, %13, %cst_111 {dimension_numbers = #tpu.dot_dimension_numbers<[1], [0], [0], [1], [0, 0, 1, 1], [], []>} : vector<8x128xbf16>, vector<128x512xbf16>, vector<8x512xf32> -> vector<8x512xf32>
    %263 = arith.index_cast %c6_i32 : i32 to index
    %c0_112 = arith.constant 0 : index
    %c0_113 = arith.constant 0 : index
    %264 = vector.load %arg7[%263, %c0_112, %c0_113] : memref<8x8x512xbf16, #tpu.memory_space<vmem>>, vector<1x8x512xbf16>
    %265 = vector.shape_cast %264 : vector<1x8x512xbf16> to vector<8x512xbf16>
    %266 = arith.extf %265 : vector<8x512xbf16> to vector<8x512xf32>
    %267 = arith.addf %266, %262 : vector<8x512xf32>
    %268 = vector.extract_strided_slice %267 {offsets = [0, 0], sizes = [8, 128], strides = [1, 1]} : vector<8x512xf32> to vector<8x128xf32>
    %269 = arith.negf %268 : vector<8x128xf32>
    %270 = math.exp %269 : vector<8x128xf32>
    %cst_114 = arith.constant 1.000000e+00 : f32
    %271 = vector.broadcast %cst_114 : f32 to vector<8x128xf32>
    %272 = arith.addf %271, %270 : vector<8x128xf32>
    %273 = arith.divf %271, %272 : vector<8x128xf32>
    %274 = vector.extract_strided_slice %267 {offsets = [0, 128], sizes = [8, 128], strides = [1, 1]} : vector<8x512xf32> to vector<8x128xf32>
    %275 = arith.negf %274 : vector<8x128xf32>
    %276 = math.exp %275 : vector<8x128xf32>
    %cst_115 = arith.constant 1.000000e+00 : f32
    %277 = vector.broadcast %cst_115 : f32 to vector<8x128xf32>
    %278 = arith.addf %277, %276 : vector<8x128xf32>
    %279 = arith.divf %277, %278 : vector<8x128xf32>
    %280 = vector.extract_strided_slice %267 {offsets = [0, 256], sizes = [8, 128], strides = [1, 1]} : vector<8x512xf32> to vector<8x128xf32>
    %281 = math.tanh %280 : vector<8x128xf32>
    %282 = vector.extract_strided_slice %267 {offsets = [0, 384], sizes = [8, 128], strides = [1, 1]} : vector<8x512xf32> to vector<8x128xf32>
    %283 = arith.negf %282 : vector<8x128xf32>
    %284 = math.exp %283 : vector<8x128xf32>
    %cst_116 = arith.constant 1.000000e+00 : f32
    %285 = vector.broadcast %cst_116 : f32 to vector<8x128xf32>
    %286 = arith.addf %285, %284 : vector<8x128xf32>
    %287 = arith.divf %285, %286 : vector<8x128xf32>
    %c0_117 = arith.constant 0 : index
    %c0_118 = arith.constant 0 : index
    %288 = vector.load %arg9[%c0_117, %c0_118] : memref<8x128xf32, #tpu.memory_space<vmem>>, vector<8x128xf32>
    %289 = arith.mulf %279, %288 : vector<8x128xf32>
    %290 = arith.mulf %273, %281 : vector<8x128xf32>
    %291 = arith.addf %289, %290 : vector<8x128xf32>
    %292 = math.tanh %291 : vector<8x128xf32>
    %293 = arith.mulf %287, %292 : vector<8x128xf32>
    %c0_119 = arith.constant 0 : index
    %c0_120 = arith.constant 0 : index
    %294 = vector.load %arg9[%c0_119, %c0_120] : memref<8x128xf32, #tpu.memory_space<vmem>>, vector<8x128xf32>
    tpu.vector_store %arg9[%c0_119, %c0_120], %291 {strides = array<i32>} : memref<8x128xf32, #tpu.memory_space<vmem>>, vector<8x128xf32>,
    %c0_121 = arith.constant 0 : index
    %c0_122 = arith.constant 0 : index
    %295 = vector.load %arg8[%c0_121, %c0_122] : memref<8x128xf32, #tpu.memory_space<vmem>>, vector<8x128xf32>
    tpu.vector_store %arg8[%c0_121, %c0_122], %293 {strides = array<i32>} : memref<8x128xf32, #tpu.memory_space<vmem>>, vector<8x128xf32>,
    %296 = arith.truncf %293 : vector<8x128xf32> to vector<8x128xbf16>
    %297 = arith.index_cast %c6_i32 : i32 to index
    %c0_123 = arith.constant 0 : index
    %c0_124 = arith.constant 0 : index
    %298 = vector.load %arg6[%297, %c0_123, %c0_124] : memref<8x8x128xbf16, #tpu.memory_space<vmem>>, vector<1x8x128xbf16>
    %299 = vector.shape_cast %298 : vector<1x8x128xbf16> to vector<8x128xbf16>
    %300 = vector.shape_cast %296 : vector<8x128xbf16> to vector<1x8x128xbf16>
    tpu.vector_store %arg6[%297, %c0_123, %c0_124], %300 {strides = array<i32>} : memref<8x8x128xbf16, #tpu.memory_space<vmem>>, vector<1x8x128xbf16>,
    %c7_i32 = arith.constant 7 : i32
    %c0_125 = arith.constant 0 : index
    %c0_126 = arith.constant 0 : index
    %301 = vector.load %arg8[%c0_125, %c0_126] : memref<8x128xf32, #tpu.memory_space<vmem>>, vector<8x128xf32>
    %302 = arith.truncf %301 : vector<8x128xf32> to vector<8x128xbf16>
    %cst_127 = arith.constant dense<0.000000e+00> : vector<8x512xf32>
    %303 = tpu.matmul %302, %13, %cst_127 {dimension_numbers = #tpu.dot_dimension_numbers<[1], [0], [0], [1], [0, 0, 1, 1], [], []>} : vector<8x128xbf16>, vector<128x512xbf16>, vector<8x512xf32> -> vector<8x512xf32>
    %304 = arith.index_cast %c7_i32 : i32 to index
    %c0_128 = arith.constant 0 : index
    %c0_129 = arith.constant 0 : index
    %305 = vector.load %arg7[%304, %c0_128, %c0_129] : memref<8x8x512xbf16, #tpu.memory_space<vmem>>, vector<1x8x512xbf16>
    %306 = vector.shape_cast %305 : vector<1x8x512xbf16> to vector<8x512xbf16>
    %307 = arith.extf %306 : vector<8x512xbf16> to vector<8x512xf32>
    %308 = arith.addf %307, %303 : vector<8x512xf32>
    %309 = vector.extract_strided_slice %308 {offsets = [0, 0], sizes = [8, 128], strides = [1, 1]} : vector<8x512xf32> to vector<8x128xf32>
    %310 = arith.negf %309 : vector<8x128xf32>
    %311 = math.exp %310 : vector<8x128xf32>
    %cst_130 = arith.constant 1.000000e+00 : f32
    %312 = vector.broadcast %cst_130 : f32 to vector<8x128xf32>
    %313 = arith.addf %312, %311 : vector<8x128xf32>
    %314 = arith.divf %312, %313 : vector<8x128xf32>
    %315 = vector.extract_strided_slice %308 {offsets = [0, 128], sizes = [8, 128], strides = [1, 1]} : vector<8x512xf32> to vector<8x128xf32>
    %316 = arith.negf %315 : vector<8x128xf32>
    %317 = math.exp %316 : vector<8x128xf32>
    %cst_131 = arith.constant 1.000000e+00 : f32
    %318 = vector.broadcast %cst_131 : f32 to vector<8x128xf32>
    %319 = arith.addf %318, %317 : vector<8x128xf32>
    %320 = arith.divf %318, %319 : vector<8x128xf32>
    %321 = vector.extract_strided_slice %308 {offsets = [0, 256], sizes = [8, 128], strides = [1, 1]} : vector<8x512xf32> to vector<8x128xf32>
    %322 = math.tanh %321 : vector<8x128xf32>
    %323 = vector.extract_strided_slice %308 {offsets = [0, 384], sizes = [8, 128], strides = [1, 1]} : vector<8x512xf32> to vector<8x128xf32>
    %324 = arith.negf %323 : vector<8x128xf32>
    %325 = math.exp %324 : vector<8x128xf32>
    %cst_132 = arith.constant 1.000000e+00 : f32
    %326 = vector.broadcast %cst_132 : f32 to vector<8x128xf32>
    %327 = arith.addf %326, %325 : vector<8x128xf32>
    %328 = arith.divf %326, %327 : vector<8x128xf32>
    %c0_133 = arith.constant 0 : index
    %c0_134 = arith.constant 0 : index
    %329 = vector.load %arg9[%c0_133, %c0_134] : memref<8x128xf32, #tpu.memory_space<vmem>>, vector<8x128xf32>
    %330 = arith.mulf %320, %329 : vector<8x128xf32>
    %331 = arith.mulf %314, %322 : vector<8x128xf32>
    %332 = arith.addf %330, %331 : vector<8x128xf32>
    %333 = math.tanh %332 : vector<8x128xf32>
    %334 = arith.mulf %328, %333 : vector<8x128xf32>
    %c0_135 = arith.constant 0 : index
    %c0_136 = arith.constant 0 : index
    %335 = vector.load %arg9[%c0_135, %c0_136] : memref<8x128xf32, #tpu.memory_space<vmem>>, vector<8x128xf32>
    tpu.vector_store %arg9[%c0_135, %c0_136], %332 {strides = array<i32>} : memref<8x128xf32, #tpu.memory_space<vmem>>, vector<8x128xf32>,
    %c0_137 = arith.constant 0 : index
    %c0_138 = arith.constant 0 : index
    %336 = vector.load %arg8[%c0_137, %c0_138] : memref<8x128xf32, #tpu.memory_space<vmem>>, vector<8x128xf32>
    tpu.vector_store %arg8[%c0_137, %c0_138], %334 {strides = array<i32>} : memref<8x128xf32, #tpu.memory_space<vmem>>, vector<8x128xf32>,
    %337 = arith.truncf %334 : vector<8x128xf32> to vector<8x128xbf16>
    %338 = arith.index_cast %c7_i32 : i32 to index
    %c0_139 = arith.constant 0 : index
    %c0_140 = arith.constant 0 : index
    %339 = vector.load %arg6[%338, %c0_139, %c0_140] : memref<8x8x128xbf16, #tpu.memory_space<vmem>>, vector<1x8x128xbf16>
    %340 = vector.shape_cast %339 : vector<1x8x128xbf16> to vector<8x128xbf16>
    %341 = vector.shape_cast %337 : vector<8x128xbf16> to vector<1x8x128xbf16>
    tpu.vector_store %arg6[%338, %c0_139, %c0_140], %341 {strides = array<i32>} : memref<8x8x128xbf16, #tpu.memory_space<vmem>>, vector<1x8x128xbf16>,
    %c8_i32 = arith.constant 8 : i32
    return
  }
  func.func @transform_0(%arg0: i32, %arg1: i32) -> (i32, i32, i32) {
    %c0_i32 = arith.constant 0 : i32
    %c0_i32_0 = arith.constant 0 : i32
    return %arg1, %arg0, %c0_i32 : i32, i32, i32
  }
  func.func @transform_1(%arg0: i32, %arg1: i32) -> (i32, i32) {
    %c0_i32 = arith.constant 0 : i32
    %c0_i32_0 = arith.constant 0 : i32
    %c0_i32_1 = arith.constant 0 : i32
    return %c0_i32, %c0_i32_0 : i32, i32
  }
  func.func @transform_2(%arg0: i32, %arg1: i32) -> (i32, i32) {
    %c0_i32 = arith.constant 0 : i32
    %c0_i32_0 = arith.constant 0 : i32
    %c0_i32_1 = arith.constant 0 : i32
    return %c0_i32, %c0_i32_0 : i32, i32
  }
  func.func @transform_3(%arg0: i32, %arg1: i32) -> (i32, i32) {
    %c0_i32 = arith.constant 0 : i32
    %c0_i32_0 = arith.constant 0 : i32
    %c0_i32_1 = arith.constant 0 : i32
    return %c0_i32, %c0_i32_0 : i32, i32
  }
  func.func @transform_4(%arg0: i32, %arg1: i32) -> (i32, i32, i32) {
    %c0_i32 = arith.constant 0 : i32
    %c0_i32_0 = arith.constant 0 : i32
    return %arg1, %arg0, %c0_i32 : i32, i32, i32
  }
}

module attributes {stable_mosaic.version = 11 : i64} {
  func.func @kernel(%arg0: i32, %arg1: i32, %arg2: memref<8x8x128xbf16, #tpu.memory_space<vmem>>, %arg3: memref<128x512xbf16, #tpu.memory_space<vmem>>, %arg4: memref<128x512xbf16, #tpu.memory_space<vmem>>, %arg5: memref<1x512xf32, #tpu.memory_space<vmem>>, %arg6: memref<128x128xbf16, #tpu.memory_space<vmem>>, %arg7: memref<1x128xf32, #tpu.memory_space<vmem>>, %arg8: memref<8x8x128xf32, #tpu.memory_space<vmem>>, %arg9: memref<8x8x512xbf16, #tpu.memory_space<vmem>>, %arg10: memref<8x128xf32, #tpu.memory_space<vmem>>, %arg11: memref<8x128xf32, #tpu.memory_space<vmem>>, %arg12: memref<8x8x128xbf16, #tpu.memory_space<vmem>>) attributes {dimension_semantics = [#tpu.dimension_semantics<parallel>, #tpu.dimension_semantics<arbitrary>], iteration_bounds = array<i64: 1, 1>, scalar_prefetch = 0 : i64, scratch_operands = 4 : i64, tpu.core_type = #tpu.core_type<tc>, window_params = [{transform_indices = @transform_0, window_bounds = array<i64: 8, 8, 128>}, {pipeline_mode = #tpu.pipeline_mode<synchronous>, transform_indices = @transform_1, window_bounds = array<i64: 128, 512>}, {pipeline_mode = #tpu.pipeline_mode<synchronous>, transform_indices = @transform_2, window_bounds = array<i64: 128, 512>}, {pipeline_mode = #tpu.pipeline_mode<synchronous>, transform_indices = @transform_3, window_bounds = array<i64: 1, 512>}, {pipeline_mode = #tpu.pipeline_mode<synchronous>, transform_indices = @transform_4, window_bounds = array<i64: 128, 128>}, {pipeline_mode = #tpu.pipeline_mode<synchronous>, transform_indices = @transform_5, window_bounds = array<i64: 1, 128>}, {transform_indices = @transform_6, window_bounds = array<i64: 8, 8, 128>}]} {
    %c0_i32 = arith.constant 0 : i32
    %0 = arith.cmpi eq, %arg1, %c0_i32 : i32
    %1 = arith.extui %0 : i1 to i32
    %c0_i32_0 = arith.constant 0 : i32
    %2 = arith.cmpi ne, %1, %c0_i32_0 : i32
    scf.if %2 {
      %cst_152 = arith.constant 0.000000e+00 : f32
      %351 = vector.broadcast %cst_152 : f32 to vector<8x128xf32>
      %c0_153 = arith.constant 0 : index
      %c0_154 = arith.constant 0 : index
      %352 = vector.load %arg10[%c0_153, %c0_154] : memref<8x128xf32, #tpu.memory_space<vmem>>, vector<8x128xf32>
      tpu.vector_store %arg10[%c0_153, %c0_154], %351 {strides = array<i32>} : memref<8x128xf32, #tpu.memory_space<vmem>>, vector<8x128xf32>,
      %cst_155 = arith.constant 0.000000e+00 : f32
      %353 = vector.broadcast %cst_155 : f32 to vector<8x128xf32>
      %c0_156 = arith.constant 0 : index
      %c0_157 = arith.constant 0 : index
      %354 = vector.load %arg11[%c0_156, %c0_157] : memref<8x128xf32, #tpu.memory_space<vmem>>, vector<8x128xf32>
      tpu.vector_store %arg11[%c0_156, %c0_157], %353 {strides = array<i32>} : memref<8x128xf32, #tpu.memory_space<vmem>>, vector<8x128xf32>,
    } else {
    }
    %c0 = arith.constant 0 : index
    %c0_1 = arith.constant 0 : index
    %c0_2 = arith.constant 0 : index
    %3 = vector.load %arg2[%c0, %c0_1, %c0_2] : memref<8x8x128xbf16, #tpu.memory_space<vmem>>, vector<8x8x128xbf16>
    %4 = vector.shape_cast %3 : vector<8x8x128xbf16> to vector<64x128xbf16>
    %c0_3 = arith.constant 0 : index
    %c0_4 = arith.constant 0 : index
    %5 = vector.load %arg3[%c0_3, %c0_4] : memref<128x512xbf16, #tpu.memory_space<vmem>>, vector<128x512xbf16>
    %cst = arith.constant dense<0.000000e+00> : vector<64x512xf32>
    %6 = tpu.matmul %4, %5, %cst {dimension_numbers = #tpu.dot_dimension_numbers<[1], [0], [0], [1], [0, 0, 1, 1], [], []>} : vector<64x128xbf16>, vector<128x512xbf16>, vector<64x512xf32> -> vector<64x512xf32>
    %c0_5 = arith.constant 0 : index
    %c0_6 = arith.constant 0 : index
    %7 = vector.load %arg5[%c0_5, %c0_6] : memref<1x512xf32, #tpu.memory_space<vmem>>, vector<1x512xf32>
    %8 = vector.broadcast %7 : vector<1x512xf32> to vector<64x512xf32>
    %9 = arith.addf %6, %8 : vector<64x512xf32>
    %10 = vector.shape_cast %9 : vector<64x512xf32> to vector<8x8x512xf32>
    %11 = arith.truncf %10 : vector<8x8x512xf32> to vector<8x8x512xbf16>
    %c0_7 = arith.constant 0 : index
    %c0_8 = arith.constant 0 : index
    %c0_9 = arith.constant 0 : index
    %12 = vector.load %arg9[%c0_7, %c0_8, %c0_9] : memref<8x8x512xbf16, #tpu.memory_space<vmem>>, vector<8x8x512xbf16>
    tpu.vector_store %arg9[%c0_7, %c0_8, %c0_9], %11 {strides = array<i32>} : memref<8x8x512xbf16, #tpu.memory_space<vmem>>, vector<8x8x512xbf16>,
    %c0_10 = arith.constant 0 : index
    %c0_11 = arith.constant 0 : index
    %13 = vector.load %arg4[%c0_10, %c0_11] : memref<128x512xbf16, #tpu.memory_space<vmem>>, vector<128x512xbf16>
    %c0_i32_12 = arith.constant 0 : i32
    %c0_13 = arith.constant 0 : index
    %c0_14 = arith.constant 0 : index
    %14 = vector.load %arg10[%c0_13, %c0_14] : memref<8x128xf32, #tpu.memory_space<vmem>>, vector<8x128xf32>
    %15 = arith.truncf %14 : vector<8x128xf32> to vector<8x128xbf16>
    %cst_15 = arith.constant dense<0.000000e+00> : vector<8x512xf32>
    %16 = tpu.matmul %15, %13, %cst_15 {dimension_numbers = #tpu.dot_dimension_numbers<[1], [0], [0], [1], [0, 0, 1, 1], [], []>} : vector<8x128xbf16>, vector<128x512xbf16>, vector<8x512xf32> -> vector<8x512xf32>
    %17 = arith.index_cast %c0_i32_12 : i32 to index
    %c0_16 = arith.constant 0 : index
    %c0_17 = arith.constant 0 : index
    %18 = vector.load %arg9[%17, %c0_16, %c0_17] : memref<8x8x512xbf16, #tpu.memory_space<vmem>>, vector<1x8x512xbf16>
    %19 = vector.shape_cast %18 : vector<1x8x512xbf16> to vector<8x512xbf16>
    %20 = arith.extf %19 : vector<8x512xbf16> to vector<8x512xf32>
    %21 = arith.addf %20, %16 : vector<8x512xf32>
    %22 = vector.extract_strided_slice %21 {offsets = [0, 0], sizes = [8, 128], strides = [1, 1]} : vector<8x512xf32> to vector<8x128xf32>
    %23 = arith.negf %22 : vector<8x128xf32>
    %24 = math.exp %23 : vector<8x128xf32>
    %cst_18 = arith.constant 1.000000e+00 : f32
    %25 = vector.broadcast %cst_18 : f32 to vector<8x128xf32>
    %26 = arith.addf %25, %24 : vector<8x128xf32>
    %27 = arith.divf %25, %26 : vector<8x128xf32>
    %28 = vector.extract_strided_slice %21 {offsets = [0, 128], sizes = [8, 128], strides = [1, 1]} : vector<8x512xf32> to vector<8x128xf32>
    %29 = arith.negf %28 : vector<8x128xf32>
    %30 = math.exp %29 : vector<8x128xf32>
    %cst_19 = arith.constant 1.000000e+00 : f32
    %31 = vector.broadcast %cst_19 : f32 to vector<8x128xf32>
    %32 = arith.addf %31, %30 : vector<8x128xf32>
    %33 = arith.divf %31, %32 : vector<8x128xf32>
    %34 = vector.extract_strided_slice %21 {offsets = [0, 256], sizes = [8, 128], strides = [1, 1]} : vector<8x512xf32> to vector<8x128xf32>
    %35 = math.tanh %34 : vector<8x128xf32>
    %36 = vector.extract_strided_slice %21 {offsets = [0, 384], sizes = [8, 128], strides = [1, 1]} : vector<8x512xf32> to vector<8x128xf32>
    %37 = arith.negf %36 : vector<8x128xf32>
    %38 = math.exp %37 : vector<8x128xf32>
    %cst_20 = arith.constant 1.000000e+00 : f32
    %39 = vector.broadcast %cst_20 : f32 to vector<8x128xf32>
    %40 = arith.addf %39, %38 : vector<8x128xf32>
    %41 = arith.divf %39, %40 : vector<8x128xf32>
    %c0_21 = arith.constant 0 : index
    %c0_22 = arith.constant 0 : index
    %42 = vector.load %arg11[%c0_21, %c0_22] : memref<8x128xf32, #tpu.memory_space<vmem>>, vector<8x128xf32>
    %43 = arith.mulf %33, %42 : vector<8x128xf32>
    %44 = arith.mulf %27, %35 : vector<8x128xf32>
    %45 = arith.addf %43, %44 : vector<8x128xf32>
    %46 = math.tanh %45 : vector<8x128xf32>
    %47 = arith.mulf %41, %46 : vector<8x128xf32>
    %c0_23 = arith.constant 0 : index
    %c0_24 = arith.constant 0 : index
    %48 = vector.load %arg11[%c0_23, %c0_24] : memref<8x128xf32, #tpu.memory_space<vmem>>, vector<8x128xf32>
    tpu.vector_store %arg11[%c0_23, %c0_24], %45 {strides = array<i32>} : memref<8x128xf32, #tpu.memory_space<vmem>>, vector<8x128xf32>,
    %c0_25 = arith.constant 0 : index
    %c0_26 = arith.constant 0 : index
    %49 = vector.load %arg10[%c0_25, %c0_26] : memref<8x128xf32, #tpu.memory_space<vmem>>, vector<8x128xf32>
    tpu.vector_store %arg10[%c0_25, %c0_26], %47 {strides = array<i32>} : memref<8x128xf32, #tpu.memory_space<vmem>>, vector<8x128xf32>,
    %50 = arith.truncf %47 : vector<8x128xf32> to vector<8x128xbf16>
    %51 = arith.index_cast %c0_i32_12 : i32 to index
    %c0_27 = arith.constant 0 : index
    %c0_28 = arith.constant 0 : index
    %52 = vector.load %arg12[%51, %c0_27, %c0_28] : memref<8x8x128xbf16, #tpu.memory_space<vmem>>, vector<1x8x128xbf16>
    %53 = vector.shape_cast %52 : vector<1x8x128xbf16> to vector<8x128xbf16>
    %54 = vector.shape_cast %50 : vector<8x128xbf16> to vector<1x8x128xbf16>
    tpu.vector_store %arg12[%51, %c0_27, %c0_28], %54 {strides = array<i32>} : memref<8x8x128xbf16, #tpu.memory_space<vmem>>, vector<1x8x128xbf16>,
    %c1_i32 = arith.constant 1 : i32
    %c0_29 = arith.constant 0 : index
    %c0_30 = arith.constant 0 : index
    %55 = vector.load %arg10[%c0_29, %c0_30] : memref<8x128xf32, #tpu.memory_space<vmem>>, vector<8x128xf32>
    %56 = arith.truncf %55 : vector<8x128xf32> to vector<8x128xbf16>
    %cst_31 = arith.constant dense<0.000000e+00> : vector<8x512xf32>
    %57 = tpu.matmul %56, %13, %cst_31 {dimension_numbers = #tpu.dot_dimension_numbers<[1], [0], [0], [1], [0, 0, 1, 1], [], []>} : vector<8x128xbf16>, vector<128x512xbf16>, vector<8x512xf32> -> vector<8x512xf32>
    %58 = arith.index_cast %c1_i32 : i32 to index
    %c0_32 = arith.constant 0 : index
    %c0_33 = arith.constant 0 : index
    %59 = vector.load %arg9[%58, %c0_32, %c0_33] : memref<8x8x512xbf16, #tpu.memory_space<vmem>>, vector<1x8x512xbf16>
    %60 = vector.shape_cast %59 : vector<1x8x512xbf16> to vector<8x512xbf16>
    %61 = arith.extf %60 : vector<8x512xbf16> to vector<8x512xf32>
    %62 = arith.addf %61, %57 : vector<8x512xf32>
    %63 = vector.extract_strided_slice %62 {offsets = [0, 0], sizes = [8, 128], strides = [1, 1]} : vector<8x512xf32> to vector<8x128xf32>
    %64 = arith.negf %63 : vector<8x128xf32>
    %65 = math.exp %64 : vector<8x128xf32>
    %cst_34 = arith.constant 1.000000e+00 : f32
    %66 = vector.broadcast %cst_34 : f32 to vector<8x128xf32>
    %67 = arith.addf %66, %65 : vector<8x128xf32>
    %68 = arith.divf %66, %67 : vector<8x128xf32>
    %69 = vector.extract_strided_slice %62 {offsets = [0, 128], sizes = [8, 128], strides = [1, 1]} : vector<8x512xf32> to vector<8x128xf32>
    %70 = arith.negf %69 : vector<8x128xf32>
    %71 = math.exp %70 : vector<8x128xf32>
    %cst_35 = arith.constant 1.000000e+00 : f32
    %72 = vector.broadcast %cst_35 : f32 to vector<8x128xf32>
    %73 = arith.addf %72, %71 : vector<8x128xf32>
    %74 = arith.divf %72, %73 : vector<8x128xf32>
    %75 = vector.extract_strided_slice %62 {offsets = [0, 256], sizes = [8, 128], strides = [1, 1]} : vector<8x512xf32> to vector<8x128xf32>
    %76 = math.tanh %75 : vector<8x128xf32>
    %77 = vector.extract_strided_slice %62 {offsets = [0, 384], sizes = [8, 128], strides = [1, 1]} : vector<8x512xf32> to vector<8x128xf32>
    %78 = arith.negf %77 : vector<8x128xf32>
    %79 = math.exp %78 : vector<8x128xf32>
    %cst_36 = arith.constant 1.000000e+00 : f32
    %80 = vector.broadcast %cst_36 : f32 to vector<8x128xf32>
    %81 = arith.addf %80, %79 : vector<8x128xf32>
    %82 = arith.divf %80, %81 : vector<8x128xf32>
    %c0_37 = arith.constant 0 : index
    %c0_38 = arith.constant 0 : index
    %83 = vector.load %arg11[%c0_37, %c0_38] : memref<8x128xf32, #tpu.memory_space<vmem>>, vector<8x128xf32>
    %84 = arith.mulf %74, %83 : vector<8x128xf32>
    %85 = arith.mulf %68, %76 : vector<8x128xf32>
    %86 = arith.addf %84, %85 : vector<8x128xf32>
    %87 = math.tanh %86 : vector<8x128xf32>
    %88 = arith.mulf %82, %87 : vector<8x128xf32>
    %c0_39 = arith.constant 0 : index
    %c0_40 = arith.constant 0 : index
    %89 = vector.load %arg11[%c0_39, %c0_40] : memref<8x128xf32, #tpu.memory_space<vmem>>, vector<8x128xf32>
    tpu.vector_store %arg11[%c0_39, %c0_40], %86 {strides = array<i32>} : memref<8x128xf32, #tpu.memory_space<vmem>>, vector<8x128xf32>,
    %c0_41 = arith.constant 0 : index
    %c0_42 = arith.constant 0 : index
    %90 = vector.load %arg10[%c0_41, %c0_42] : memref<8x128xf32, #tpu.memory_space<vmem>>, vector<8x128xf32>
    tpu.vector_store %arg10[%c0_41, %c0_42], %88 {strides = array<i32>} : memref<8x128xf32, #tpu.memory_space<vmem>>, vector<8x128xf32>,
    %91 = arith.truncf %88 : vector<8x128xf32> to vector<8x128xbf16>
    %92 = arith.index_cast %c1_i32 : i32 to index
    %c0_43 = arith.constant 0 : index
    %c0_44 = arith.constant 0 : index
    %93 = vector.load %arg12[%92, %c0_43, %c0_44] : memref<8x8x128xbf16, #tpu.memory_space<vmem>>, vector<1x8x128xbf16>
    %94 = vector.shape_cast %93 : vector<1x8x128xbf16> to vector<8x128xbf16>
    %95 = vector.shape_cast %91 : vector<8x128xbf16> to vector<1x8x128xbf16>
    tpu.vector_store %arg12[%92, %c0_43, %c0_44], %95 {strides = array<i32>} : memref<8x8x128xbf16, #tpu.memory_space<vmem>>, vector<1x8x128xbf16>,
    %c2_i32 = arith.constant 2 : i32
    %c0_45 = arith.constant 0 : index
    %c0_46 = arith.constant 0 : index
    %96 = vector.load %arg10[%c0_45, %c0_46] : memref<8x128xf32, #tpu.memory_space<vmem>>, vector<8x128xf32>
    %97 = arith.truncf %96 : vector<8x128xf32> to vector<8x128xbf16>
    %cst_47 = arith.constant dense<0.000000e+00> : vector<8x512xf32>
    %98 = tpu.matmul %97, %13, %cst_47 {dimension_numbers = #tpu.dot_dimension_numbers<[1], [0], [0], [1], [0, 0, 1, 1], [], []>} : vector<8x128xbf16>, vector<128x512xbf16>, vector<8x512xf32> -> vector<8x512xf32>
    %99 = arith.index_cast %c2_i32 : i32 to index
    %c0_48 = arith.constant 0 : index
    %c0_49 = arith.constant 0 : index
    %100 = vector.load %arg9[%99, %c0_48, %c0_49] : memref<8x8x512xbf16, #tpu.memory_space<vmem>>, vector<1x8x512xbf16>
    %101 = vector.shape_cast %100 : vector<1x8x512xbf16> to vector<8x512xbf16>
    %102 = arith.extf %101 : vector<8x512xbf16> to vector<8x512xf32>
    %103 = arith.addf %102, %98 : vector<8x512xf32>
    %104 = vector.extract_strided_slice %103 {offsets = [0, 0], sizes = [8, 128], strides = [1, 1]} : vector<8x512xf32> to vector<8x128xf32>
    %105 = arith.negf %104 : vector<8x128xf32>
    %106 = math.exp %105 : vector<8x128xf32>
    %cst_50 = arith.constant 1.000000e+00 : f32
    %107 = vector.broadcast %cst_50 : f32 to vector<8x128xf32>
    %108 = arith.addf %107, %106 : vector<8x128xf32>
    %109 = arith.divf %107, %108 : vector<8x128xf32>
    %110 = vector.extract_strided_slice %103 {offsets = [0, 128], sizes = [8, 128], strides = [1, 1]} : vector<8x512xf32> to vector<8x128xf32>
    %111 = arith.negf %110 : vector<8x128xf32>
    %112 = math.exp %111 : vector<8x128xf32>
    %cst_51 = arith.constant 1.000000e+00 : f32
    %113 = vector.broadcast %cst_51 : f32 to vector<8x128xf32>
    %114 = arith.addf %113, %112 : vector<8x128xf32>
    %115 = arith.divf %113, %114 : vector<8x128xf32>
    %116 = vector.extract_strided_slice %103 {offsets = [0, 256], sizes = [8, 128], strides = [1, 1]} : vector<8x512xf32> to vector<8x128xf32>
    %117 = math.tanh %116 : vector<8x128xf32>
    %118 = vector.extract_strided_slice %103 {offsets = [0, 384], sizes = [8, 128], strides = [1, 1]} : vector<8x512xf32> to vector<8x128xf32>
    %119 = arith.negf %118 : vector<8x128xf32>
    %120 = math.exp %119 : vector<8x128xf32>
    %cst_52 = arith.constant 1.000000e+00 : f32
    %121 = vector.broadcast %cst_52 : f32 to vector<8x128xf32>
    %122 = arith.addf %121, %120 : vector<8x128xf32>
    %123 = arith.divf %121, %122 : vector<8x128xf32>
    %c0_53 = arith.constant 0 : index
    %c0_54 = arith.constant 0 : index
    %124 = vector.load %arg11[%c0_53, %c0_54] : memref<8x128xf32, #tpu.memory_space<vmem>>, vector<8x128xf32>
    %125 = arith.mulf %115, %124 : vector<8x128xf32>
    %126 = arith.mulf %109, %117 : vector<8x128xf32>
    %127 = arith.addf %125, %126 : vector<8x128xf32>
    %128 = math.tanh %127 : vector<8x128xf32>
    %129 = arith.mulf %123, %128 : vector<8x128xf32>
    %c0_55 = arith.constant 0 : index
    %c0_56 = arith.constant 0 : index
    %130 = vector.load %arg11[%c0_55, %c0_56] : memref<8x128xf32, #tpu.memory_space<vmem>>, vector<8x128xf32>
    tpu.vector_store %arg11[%c0_55, %c0_56], %127 {strides = array<i32>} : memref<8x128xf32, #tpu.memory_space<vmem>>, vector<8x128xf32>,
    %c0_57 = arith.constant 0 : index
    %c0_58 = arith.constant 0 : index
    %131 = vector.load %arg10[%c0_57, %c0_58] : memref<8x128xf32, #tpu.memory_space<vmem>>, vector<8x128xf32>
    tpu.vector_store %arg10[%c0_57, %c0_58], %129 {strides = array<i32>} : memref<8x128xf32, #tpu.memory_space<vmem>>, vector<8x128xf32>,
    %132 = arith.truncf %129 : vector<8x128xf32> to vector<8x128xbf16>
    %133 = arith.index_cast %c2_i32 : i32 to index
    %c0_59 = arith.constant 0 : index
    %c0_60 = arith.constant 0 : index
    %134 = vector.load %arg12[%133, %c0_59, %c0_60] : memref<8x8x128xbf16, #tpu.memory_space<vmem>>, vector<1x8x128xbf16>
    %135 = vector.shape_cast %134 : vector<1x8x128xbf16> to vector<8x128xbf16>
    %136 = vector.shape_cast %132 : vector<8x128xbf16> to vector<1x8x128xbf16>
    tpu.vector_store %arg12[%133, %c0_59, %c0_60], %136 {strides = array<i32>} : memref<8x8x128xbf16, #tpu.memory_space<vmem>>, vector<1x8x128xbf16>,
    %c3_i32 = arith.constant 3 : i32
    %c0_61 = arith.constant 0 : index
    %c0_62 = arith.constant 0 : index
    %137 = vector.load %arg10[%c0_61, %c0_62] : memref<8x128xf32, #tpu.memory_space<vmem>>, vector<8x128xf32>
    %138 = arith.truncf %137 : vector<8x128xf32> to vector<8x128xbf16>
    %cst_63 = arith.constant dense<0.000000e+00> : vector<8x512xf32>
    %139 = tpu.matmul %138, %13, %cst_63 {dimension_numbers = #tpu.dot_dimension_numbers<[1], [0], [0], [1], [0, 0, 1, 1], [], []>} : vector<8x128xbf16>, vector<128x512xbf16>, vector<8x512xf32> -> vector<8x512xf32>
    %140 = arith.index_cast %c3_i32 : i32 to index
    %c0_64 = arith.constant 0 : index
    %c0_65 = arith.constant 0 : index
    %141 = vector.load %arg9[%140, %c0_64, %c0_65] : memref<8x8x512xbf16, #tpu.memory_space<vmem>>, vector<1x8x512xbf16>
    %142 = vector.shape_cast %141 : vector<1x8x512xbf16> to vector<8x512xbf16>
    %143 = arith.extf %142 : vector<8x512xbf16> to vector<8x512xf32>
    %144 = arith.addf %143, %139 : vector<8x512xf32>
    %145 = vector.extract_strided_slice %144 {offsets = [0, 0], sizes = [8, 128], strides = [1, 1]} : vector<8x512xf32> to vector<8x128xf32>
    %146 = arith.negf %145 : vector<8x128xf32>
    %147 = math.exp %146 : vector<8x128xf32>
    %cst_66 = arith.constant 1.000000e+00 : f32
    %148 = vector.broadcast %cst_66 : f32 to vector<8x128xf32>
    %149 = arith.addf %148, %147 : vector<8x128xf32>
    %150 = arith.divf %148, %149 : vector<8x128xf32>
    %151 = vector.extract_strided_slice %144 {offsets = [0, 128], sizes = [8, 128], strides = [1, 1]} : vector<8x512xf32> to vector<8x128xf32>
    %152 = arith.negf %151 : vector<8x128xf32>
    %153 = math.exp %152 : vector<8x128xf32>
    %cst_67 = arith.constant 1.000000e+00 : f32
    %154 = vector.broadcast %cst_67 : f32 to vector<8x128xf32>
    %155 = arith.addf %154, %153 : vector<8x128xf32>
    %156 = arith.divf %154, %155 : vector<8x128xf32>
    %157 = vector.extract_strided_slice %144 {offsets = [0, 256], sizes = [8, 128], strides = [1, 1]} : vector<8x512xf32> to vector<8x128xf32>
    %158 = math.tanh %157 : vector<8x128xf32>
    %159 = vector.extract_strided_slice %144 {offsets = [0, 384], sizes = [8, 128], strides = [1, 1]} : vector<8x512xf32> to vector<8x128xf32>
    %160 = arith.negf %159 : vector<8x128xf32>
    %161 = math.exp %160 : vector<8x128xf32>
    %cst_68 = arith.constant 1.000000e+00 : f32
    %162 = vector.broadcast %cst_68 : f32 to vector<8x128xf32>
    %163 = arith.addf %162, %161 : vector<8x128xf32>
    %164 = arith.divf %162, %163 : vector<8x128xf32>
    %c0_69 = arith.constant 0 : index
    %c0_70 = arith.constant 0 : index
    %165 = vector.load %arg11[%c0_69, %c0_70] : memref<8x128xf32, #tpu.memory_space<vmem>>, vector<8x128xf32>
    %166 = arith.mulf %156, %165 : vector<8x128xf32>
    %167 = arith.mulf %150, %158 : vector<8x128xf32>
    %168 = arith.addf %166, %167 : vector<8x128xf32>
    %169 = math.tanh %168 : vector<8x128xf32>
    %170 = arith.mulf %164, %169 : vector<8x128xf32>
    %c0_71 = arith.constant 0 : index
    %c0_72 = arith.constant 0 : index
    %171 = vector.load %arg11[%c0_71, %c0_72] : memref<8x128xf32, #tpu.memory_space<vmem>>, vector<8x128xf32>
    tpu.vector_store %arg11[%c0_71, %c0_72], %168 {strides = array<i32>} : memref<8x128xf32, #tpu.memory_space<vmem>>, vector<8x128xf32>,
    %c0_73 = arith.constant 0 : index
    %c0_74 = arith.constant 0 : index
    %172 = vector.load %arg10[%c0_73, %c0_74] : memref<8x128xf32, #tpu.memory_space<vmem>>, vector<8x128xf32>
    tpu.vector_store %arg10[%c0_73, %c0_74], %170 {strides = array<i32>} : memref<8x128xf32, #tpu.memory_space<vmem>>, vector<8x128xf32>,
    %173 = arith.truncf %170 : vector<8x128xf32> to vector<8x128xbf16>
    %174 = arith.index_cast %c3_i32 : i32 to index
    %c0_75 = arith.constant 0 : index
    %c0_76 = arith.constant 0 : index
    %175 = vector.load %arg12[%174, %c0_75, %c0_76] : memref<8x8x128xbf16, #tpu.memory_space<vmem>>, vector<1x8x128xbf16>
    %176 = vector.shape_cast %175 : vector<1x8x128xbf16> to vector<8x128xbf16>
    %177 = vector.shape_cast %173 : vector<8x128xbf16> to vector<1x8x128xbf16>
    tpu.vector_store %arg12[%174, %c0_75, %c0_76], %177 {strides = array<i32>} : memref<8x8x128xbf16, #tpu.memory_space<vmem>>, vector<1x8x128xbf16>,
    %c4_i32 = arith.constant 4 : i32
    %c0_77 = arith.constant 0 : index
    %c0_78 = arith.constant 0 : index
    %178 = vector.load %arg10[%c0_77, %c0_78] : memref<8x128xf32, #tpu.memory_space<vmem>>, vector<8x128xf32>
    %179 = arith.truncf %178 : vector<8x128xf32> to vector<8x128xbf16>
    %cst_79 = arith.constant dense<0.000000e+00> : vector<8x512xf32>
    %180 = tpu.matmul %179, %13, %cst_79 {dimension_numbers = #tpu.dot_dimension_numbers<[1], [0], [0], [1], [0, 0, 1, 1], [], []>} : vector<8x128xbf16>, vector<128x512xbf16>, vector<8x512xf32> -> vector<8x512xf32>
    %181 = arith.index_cast %c4_i32 : i32 to index
    %c0_80 = arith.constant 0 : index
    %c0_81 = arith.constant 0 : index
    %182 = vector.load %arg9[%181, %c0_80, %c0_81] : memref<8x8x512xbf16, #tpu.memory_space<vmem>>, vector<1x8x512xbf16>
    %183 = vector.shape_cast %182 : vector<1x8x512xbf16> to vector<8x512xbf16>
    %184 = arith.extf %183 : vector<8x512xbf16> to vector<8x512xf32>
    %185 = arith.addf %184, %180 : vector<8x512xf32>
    %186 = vector.extract_strided_slice %185 {offsets = [0, 0], sizes = [8, 128], strides = [1, 1]} : vector<8x512xf32> to vector<8x128xf32>
    %187 = arith.negf %186 : vector<8x128xf32>
    %188 = math.exp %187 : vector<8x128xf32>
    %cst_82 = arith.constant 1.000000e+00 : f32
    %189 = vector.broadcast %cst_82 : f32 to vector<8x128xf32>
    %190 = arith.addf %189, %188 : vector<8x128xf32>
    %191 = arith.divf %189, %190 : vector<8x128xf32>
    %192 = vector.extract_strided_slice %185 {offsets = [0, 128], sizes = [8, 128], strides = [1, 1]} : vector<8x512xf32> to vector<8x128xf32>
    %193 = arith.negf %192 : vector<8x128xf32>
    %194 = math.exp %193 : vector<8x128xf32>
    %cst_83 = arith.constant 1.000000e+00 : f32
    %195 = vector.broadcast %cst_83 : f32 to vector<8x128xf32>
    %196 = arith.addf %195, %194 : vector<8x128xf32>
    %197 = arith.divf %195, %196 : vector<8x128xf32>
    %198 = vector.extract_strided_slice %185 {offsets = [0, 256], sizes = [8, 128], strides = [1, 1]} : vector<8x512xf32> to vector<8x128xf32>
    %199 = math.tanh %198 : vector<8x128xf32>
    %200 = vector.extract_strided_slice %185 {offsets = [0, 384], sizes = [8, 128], strides = [1, 1]} : vector<8x512xf32> to vector<8x128xf32>
    %201 = arith.negf %200 : vector<8x128xf32>
    %202 = math.exp %201 : vector<8x128xf32>
    %cst_84 = arith.constant 1.000000e+00 : f32
    %203 = vector.broadcast %cst_84 : f32 to vector<8x128xf32>
    %204 = arith.addf %203, %202 : vector<8x128xf32>
    %205 = arith.divf %203, %204 : vector<8x128xf32>
    %c0_85 = arith.constant 0 : index
    %c0_86 = arith.constant 0 : index
    %206 = vector.load %arg11[%c0_85, %c0_86] : memref<8x128xf32, #tpu.memory_space<vmem>>, vector<8x128xf32>
    %207 = arith.mulf %197, %206 : vector<8x128xf32>
    %208 = arith.mulf %191, %199 : vector<8x128xf32>
    %209 = arith.addf %207, %208 : vector<8x128xf32>
    %210 = math.tanh %209 : vector<8x128xf32>
    %211 = arith.mulf %205, %210 : vector<8x128xf32>
    %c0_87 = arith.constant 0 : index
    %c0_88 = arith.constant 0 : index
    %212 = vector.load %arg11[%c0_87, %c0_88] : memref<8x128xf32, #tpu.memory_space<vmem>>, vector<8x128xf32>
    tpu.vector_store %arg11[%c0_87, %c0_88], %209 {strides = array<i32>} : memref<8x128xf32, #tpu.memory_space<vmem>>, vector<8x128xf32>,
    %c0_89 = arith.constant 0 : index
    %c0_90 = arith.constant 0 : index
    %213 = vector.load %arg10[%c0_89, %c0_90] : memref<8x128xf32, #tpu.memory_space<vmem>>, vector<8x128xf32>
    tpu.vector_store %arg10[%c0_89, %c0_90], %211 {strides = array<i32>} : memref<8x128xf32, #tpu.memory_space<vmem>>, vector<8x128xf32>,
    %214 = arith.truncf %211 : vector<8x128xf32> to vector<8x128xbf16>
    %215 = arith.index_cast %c4_i32 : i32 to index
    %c0_91 = arith.constant 0 : index
    %c0_92 = arith.constant 0 : index
    %216 = vector.load %arg12[%215, %c0_91, %c0_92] : memref<8x8x128xbf16, #tpu.memory_space<vmem>>, vector<1x8x128xbf16>
    %217 = vector.shape_cast %216 : vector<1x8x128xbf16> to vector<8x128xbf16>
    %218 = vector.shape_cast %214 : vector<8x128xbf16> to vector<1x8x128xbf16>
    tpu.vector_store %arg12[%215, %c0_91, %c0_92], %218 {strides = array<i32>} : memref<8x8x128xbf16, #tpu.memory_space<vmem>>, vector<1x8x128xbf16>,
    %c5_i32 = arith.constant 5 : i32
    %c0_93 = arith.constant 0 : index
    %c0_94 = arith.constant 0 : index
    %219 = vector.load %arg10[%c0_93, %c0_94] : memref<8x128xf32, #tpu.memory_space<vmem>>, vector<8x128xf32>
    %220 = arith.truncf %219 : vector<8x128xf32> to vector<8x128xbf16>
    %cst_95 = arith.constant dense<0.000000e+00> : vector<8x512xf32>
    %221 = tpu.matmul %220, %13, %cst_95 {dimension_numbers = #tpu.dot_dimension_numbers<[1], [0], [0], [1], [0, 0, 1, 1], [], []>} : vector<8x128xbf16>, vector<128x512xbf16>, vector<8x512xf32> -> vector<8x512xf32>
    %222 = arith.index_cast %c5_i32 : i32 to index
    %c0_96 = arith.constant 0 : index
    %c0_97 = arith.constant 0 : index
    %223 = vector.load %arg9[%222, %c0_96, %c0_97] : memref<8x8x512xbf16, #tpu.memory_space<vmem>>, vector<1x8x512xbf16>
    %224 = vector.shape_cast %223 : vector<1x8x512xbf16> to vector<8x512xbf16>
    %225 = arith.extf %224 : vector<8x512xbf16> to vector<8x512xf32>
    %226 = arith.addf %225, %221 : vector<8x512xf32>
    %227 = vector.extract_strided_slice %226 {offsets = [0, 0], sizes = [8, 128], strides = [1, 1]} : vector<8x512xf32> to vector<8x128xf32>
    %228 = arith.negf %227 : vector<8x128xf32>
    %229 = math.exp %228 : vector<8x128xf32>
    %cst_98 = arith.constant 1.000000e+00 : f32
    %230 = vector.broadcast %cst_98 : f32 to vector<8x128xf32>
    %231 = arith.addf %230, %229 : vector<8x128xf32>
    %232 = arith.divf %230, %231 : vector<8x128xf32>
    %233 = vector.extract_strided_slice %226 {offsets = [0, 128], sizes = [8, 128], strides = [1, 1]} : vector<8x512xf32> to vector<8x128xf32>
    %234 = arith.negf %233 : vector<8x128xf32>
    %235 = math.exp %234 : vector<8x128xf32>
    %cst_99 = arith.constant 1.000000e+00 : f32
    %236 = vector.broadcast %cst_99 : f32 to vector<8x128xf32>
    %237 = arith.addf %236, %235 : vector<8x128xf32>
    %238 = arith.divf %236, %237 : vector<8x128xf32>
    %239 = vector.extract_strided_slice %226 {offsets = [0, 256], sizes = [8, 128], strides = [1, 1]} : vector<8x512xf32> to vector<8x128xf32>
    %240 = math.tanh %239 : vector<8x128xf32>
    %241 = vector.extract_strided_slice %226 {offsets = [0, 384], sizes = [8, 128], strides = [1, 1]} : vector<8x512xf32> to vector<8x128xf32>
    %242 = arith.negf %241 : vector<8x128xf32>
    %243 = math.exp %242 : vector<8x128xf32>
    %cst_100 = arith.constant 1.000000e+00 : f32
    %244 = vector.broadcast %cst_100 : f32 to vector<8x128xf32>
    %245 = arith.addf %244, %243 : vector<8x128xf32>
    %246 = arith.divf %244, %245 : vector<8x128xf32>
    %c0_101 = arith.constant 0 : index
    %c0_102 = arith.constant 0 : index
    %247 = vector.load %arg11[%c0_101, %c0_102] : memref<8x128xf32, #tpu.memory_space<vmem>>, vector<8x128xf32>
    %248 = arith.mulf %238, %247 : vector<8x128xf32>
    %249 = arith.mulf %232, %240 : vector<8x128xf32>
    %250 = arith.addf %248, %249 : vector<8x128xf32>
    %251 = math.tanh %250 : vector<8x128xf32>
    %252 = arith.mulf %246, %251 : vector<8x128xf32>
    %c0_103 = arith.constant 0 : index
    %c0_104 = arith.constant 0 : index
    %253 = vector.load %arg11[%c0_103, %c0_104] : memref<8x128xf32, #tpu.memory_space<vmem>>, vector<8x128xf32>
    tpu.vector_store %arg11[%c0_103, %c0_104], %250 {strides = array<i32>} : memref<8x128xf32, #tpu.memory_space<vmem>>, vector<8x128xf32>,
    %c0_105 = arith.constant 0 : index
    %c0_106 = arith.constant 0 : index
    %254 = vector.load %arg10[%c0_105, %c0_106] : memref<8x128xf32, #tpu.memory_space<vmem>>, vector<8x128xf32>
    tpu.vector_store %arg10[%c0_105, %c0_106], %252 {strides = array<i32>} : memref<8x128xf32, #tpu.memory_space<vmem>>, vector<8x128xf32>,
    %255 = arith.truncf %252 : vector<8x128xf32> to vector<8x128xbf16>
    %256 = arith.index_cast %c5_i32 : i32 to index
    %c0_107 = arith.constant 0 : index
    %c0_108 = arith.constant 0 : index
    %257 = vector.load %arg12[%256, %c0_107, %c0_108] : memref<8x8x128xbf16, #tpu.memory_space<vmem>>, vector<1x8x128xbf16>
    %258 = vector.shape_cast %257 : vector<1x8x128xbf16> to vector<8x128xbf16>
    %259 = vector.shape_cast %255 : vector<8x128xbf16> to vector<1x8x128xbf16>
    tpu.vector_store %arg12[%256, %c0_107, %c0_108], %259 {strides = array<i32>} : memref<8x8x128xbf16, #tpu.memory_space<vmem>>, vector<1x8x128xbf16>,
    %c6_i32 = arith.constant 6 : i32
    %c0_109 = arith.constant 0 : index
    %c0_110 = arith.constant 0 : index
    %260 = vector.load %arg10[%c0_109, %c0_110] : memref<8x128xf32, #tpu.memory_space<vmem>>, vector<8x128xf32>
    %261 = arith.truncf %260 : vector<8x128xf32> to vector<8x128xbf16>
    %cst_111 = arith.constant dense<0.000000e+00> : vector<8x512xf32>
    %262 = tpu.matmul %261, %13, %cst_111 {dimension_numbers = #tpu.dot_dimension_numbers<[1], [0], [0], [1], [0, 0, 1, 1], [], []>} : vector<8x128xbf16>, vector<128x512xbf16>, vector<8x512xf32> -> vector<8x512xf32>
    %263 = arith.index_cast %c6_i32 : i32 to index
    %c0_112 = arith.constant 0 : index
    %c0_113 = arith.constant 0 : index
    %264 = vector.load %arg9[%263, %c0_112, %c0_113] : memref<8x8x512xbf16, #tpu.memory_space<vmem>>, vector<1x8x512xbf16>
    %265 = vector.shape_cast %264 : vector<1x8x512xbf16> to vector<8x512xbf16>
    %266 = arith.extf %265 : vector<8x512xbf16> to vector<8x512xf32>
    %267 = arith.addf %266, %262 : vector<8x512xf32>
    %268 = vector.extract_strided_slice %267 {offsets = [0, 0], sizes = [8, 128], strides = [1, 1]} : vector<8x512xf32> to vector<8x128xf32>
    %269 = arith.negf %268 : vector<8x128xf32>
    %270 = math.exp %269 : vector<8x128xf32>
    %cst_114 = arith.constant 1.000000e+00 : f32
    %271 = vector.broadcast %cst_114 : f32 to vector<8x128xf32>
    %272 = arith.addf %271, %270 : vector<8x128xf32>
    %273 = arith.divf %271, %272 : vector<8x128xf32>
    %274 = vector.extract_strided_slice %267 {offsets = [0, 128], sizes = [8, 128], strides = [1, 1]} : vector<8x512xf32> to vector<8x128xf32>
    %275 = arith.negf %274 : vector<8x128xf32>
    %276 = math.exp %275 : vector<8x128xf32>
    %cst_115 = arith.constant 1.000000e+00 : f32
    %277 = vector.broadcast %cst_115 : f32 to vector<8x128xf32>
    %278 = arith.addf %277, %276 : vector<8x128xf32>
    %279 = arith.divf %277, %278 : vector<8x128xf32>
    %280 = vector.extract_strided_slice %267 {offsets = [0, 256], sizes = [8, 128], strides = [1, 1]} : vector<8x512xf32> to vector<8x128xf32>
    %281 = math.tanh %280 : vector<8x128xf32>
    %282 = vector.extract_strided_slice %267 {offsets = [0, 384], sizes = [8, 128], strides = [1, 1]} : vector<8x512xf32> to vector<8x128xf32>
    %283 = arith.negf %282 : vector<8x128xf32>
    %284 = math.exp %283 : vector<8x128xf32>
    %cst_116 = arith.constant 1.000000e+00 : f32
    %285 = vector.broadcast %cst_116 : f32 to vector<8x128xf32>
    %286 = arith.addf %285, %284 : vector<8x128xf32>
    %287 = arith.divf %285, %286 : vector<8x128xf32>
    %c0_117 = arith.constant 0 : index
    %c0_118 = arith.constant 0 : index
    %288 = vector.load %arg11[%c0_117, %c0_118] : memref<8x128xf32, #tpu.memory_space<vmem>>, vector<8x128xf32>
    %289 = arith.mulf %279, %288 : vector<8x128xf32>
    %290 = arith.mulf %273, %281 : vector<8x128xf32>
    %291 = arith.addf %289, %290 : vector<8x128xf32>
    %292 = math.tanh %291 : vector<8x128xf32>
    %293 = arith.mulf %287, %292 : vector<8x128xf32>
    %c0_119 = arith.constant 0 : index
    %c0_120 = arith.constant 0 : index
    %294 = vector.load %arg11[%c0_119, %c0_120] : memref<8x128xf32, #tpu.memory_space<vmem>>, vector<8x128xf32>
    tpu.vector_store %arg11[%c0_119, %c0_120], %291 {strides = array<i32>} : memref<8x128xf32, #tpu.memory_space<vmem>>, vector<8x128xf32>,
    %c0_121 = arith.constant 0 : index
    %c0_122 = arith.constant 0 : index
    %295 = vector.load %arg10[%c0_121, %c0_122] : memref<8x128xf32, #tpu.memory_space<vmem>>, vector<8x128xf32>
    tpu.vector_store %arg10[%c0_121, %c0_122], %293 {strides = array<i32>} : memref<8x128xf32, #tpu.memory_space<vmem>>, vector<8x128xf32>,
    %296 = arith.truncf %293 : vector<8x128xf32> to vector<8x128xbf16>
    %297 = arith.index_cast %c6_i32 : i32 to index
    %c0_123 = arith.constant 0 : index
    %c0_124 = arith.constant 0 : index
    %298 = vector.load %arg12[%297, %c0_123, %c0_124] : memref<8x8x128xbf16, #tpu.memory_space<vmem>>, vector<1x8x128xbf16>
    %299 = vector.shape_cast %298 : vector<1x8x128xbf16> to vector<8x128xbf16>
    %300 = vector.shape_cast %296 : vector<8x128xbf16> to vector<1x8x128xbf16>
    tpu.vector_store %arg12[%297, %c0_123, %c0_124], %300 {strides = array<i32>} : memref<8x8x128xbf16, #tpu.memory_space<vmem>>, vector<1x8x128xbf16>,
    %c7_i32 = arith.constant 7 : i32
    %c0_125 = arith.constant 0 : index
    %c0_126 = arith.constant 0 : index
    %301 = vector.load %arg10[%c0_125, %c0_126] : memref<8x128xf32, #tpu.memory_space<vmem>>, vector<8x128xf32>
    %302 = arith.truncf %301 : vector<8x128xf32> to vector<8x128xbf16>
    %cst_127 = arith.constant dense<0.000000e+00> : vector<8x512xf32>
    %303 = tpu.matmul %302, %13, %cst_127 {dimension_numbers = #tpu.dot_dimension_numbers<[1], [0], [0], [1], [0, 0, 1, 1], [], []>} : vector<8x128xbf16>, vector<128x512xbf16>, vector<8x512xf32> -> vector<8x512xf32>
    %304 = arith.index_cast %c7_i32 : i32 to index
    %c0_128 = arith.constant 0 : index
    %c0_129 = arith.constant 0 : index
    %305 = vector.load %arg9[%304, %c0_128, %c0_129] : memref<8x8x512xbf16, #tpu.memory_space<vmem>>, vector<1x8x512xbf16>
    %306 = vector.shape_cast %305 : vector<1x8x512xbf16> to vector<8x512xbf16>
    %307 = arith.extf %306 : vector<8x512xbf16> to vector<8x512xf32>
    %308 = arith.addf %307, %303 : vector<8x512xf32>
    %309 = vector.extract_strided_slice %308 {offsets = [0, 0], sizes = [8, 128], strides = [1, 1]} : vector<8x512xf32> to vector<8x128xf32>
    %310 = arith.negf %309 : vector<8x128xf32>
    %311 = math.exp %310 : vector<8x128xf32>
    %cst_130 = arith.constant 1.000000e+00 : f32
    %312 = vector.broadcast %cst_130 : f32 to vector<8x128xf32>
    %313 = arith.addf %312, %311 : vector<8x128xf32>
    %314 = arith.divf %312, %313 : vector<8x128xf32>
    %315 = vector.extract_strided_slice %308 {offsets = [0, 128], sizes = [8, 128], strides = [1, 1]} : vector<8x512xf32> to vector<8x128xf32>
    %316 = arith.negf %315 : vector<8x128xf32>
    %317 = math.exp %316 : vector<8x128xf32>
    %cst_131 = arith.constant 1.000000e+00 : f32
    %318 = vector.broadcast %cst_131 : f32 to vector<8x128xf32>
    %319 = arith.addf %318, %317 : vector<8x128xf32>
    %320 = arith.divf %318, %319 : vector<8x128xf32>
    %321 = vector.extract_strided_slice %308 {offsets = [0, 256], sizes = [8, 128], strides = [1, 1]} : vector<8x512xf32> to vector<8x128xf32>
    %322 = math.tanh %321 : vector<8x128xf32>
    %323 = vector.extract_strided_slice %308 {offsets = [0, 384], sizes = [8, 128], strides = [1, 1]} : vector<8x512xf32> to vector<8x128xf32>
    %324 = arith.negf %323 : vector<8x128xf32>
    %325 = math.exp %324 : vector<8x128xf32>
    %cst_132 = arith.constant 1.000000e+00 : f32
    %326 = vector.broadcast %cst_132 : f32 to vector<8x128xf32>
    %327 = arith.addf %326, %325 : vector<8x128xf32>
    %328 = arith.divf %326, %327 : vector<8x128xf32>
    %c0_133 = arith.constant 0 : index
    %c0_134 = arith.constant 0 : index
    %329 = vector.load %arg11[%c0_133, %c0_134] : memref<8x128xf32, #tpu.memory_space<vmem>>, vector<8x128xf32>
    %330 = arith.mulf %320, %329 : vector<8x128xf32>
    %331 = arith.mulf %314, %322 : vector<8x128xf32>
    %332 = arith.addf %330, %331 : vector<8x128xf32>
    %333 = math.tanh %332 : vector<8x128xf32>
    %334 = arith.mulf %328, %333 : vector<8x128xf32>
    %c0_135 = arith.constant 0 : index
    %c0_136 = arith.constant 0 : index
    %335 = vector.load %arg11[%c0_135, %c0_136] : memref<8x128xf32, #tpu.memory_space<vmem>>, vector<8x128xf32>
    tpu.vector_store %arg11[%c0_135, %c0_136], %332 {strides = array<i32>} : memref<8x128xf32, #tpu.memory_space<vmem>>, vector<8x128xf32>,
    %c0_137 = arith.constant 0 : index
    %c0_138 = arith.constant 0 : index
    %336 = vector.load %arg10[%c0_137, %c0_138] : memref<8x128xf32, #tpu.memory_space<vmem>>, vector<8x128xf32>
    tpu.vector_store %arg10[%c0_137, %c0_138], %334 {strides = array<i32>} : memref<8x128xf32, #tpu.memory_space<vmem>>, vector<8x128xf32>,
    %337 = arith.truncf %334 : vector<8x128xf32> to vector<8x128xbf16>
    %338 = arith.index_cast %c7_i32 : i32 to index
    %c0_139 = arith.constant 0 : index
    %c0_140 = arith.constant 0 : index
    %339 = vector.load %arg12[%338, %c0_139, %c0_140] : memref<8x8x128xbf16, #tpu.memory_space<vmem>>, vector<1x8x128xbf16>
    %340 = vector.shape_cast %339 : vector<1x8x128xbf16> to vector<8x128xbf16>
    %341 = vector.shape_cast %337 : vector<8x128xbf16> to vector<1x8x128xbf16>
    tpu.vector_store %arg12[%338, %c0_139, %c0_140], %341 {strides = array<i32>} : memref<8x8x128xbf16, #tpu.memory_space<vmem>>, vector<1x8x128xbf16>,
    %c8_i32 = arith.constant 8 : i32
    %c0_141 = arith.constant 0 : index
    %c0_142 = arith.constant 0 : index
    %c0_143 = arith.constant 0 : index
    %342 = vector.load %arg12[%c0_141, %c0_142, %c0_143] : memref<8x8x128xbf16, #tpu.memory_space<vmem>>, vector<8x8x128xbf16>
    %343 = vector.shape_cast %342 : vector<8x8x128xbf16> to vector<64x128xbf16>
    %c0_144 = arith.constant 0 : index
    %c0_145 = arith.constant 0 : index
    %344 = vector.load %arg6[%c0_144, %c0_145] : memref<128x128xbf16, #tpu.memory_space<vmem>>, vector<128x128xbf16>
    %cst_146 = arith.constant dense<0.000000e+00> : vector<64x128xf32>
    %345 = tpu.matmul %343, %344, %cst_146 {dimension_numbers = #tpu.dot_dimension_numbers<[1], [0], [0], [1], [0, 0, 1, 1], [], []>} : vector<64x128xbf16>, vector<128x128xbf16>, vector<64x128xf32> -> vector<64x128xf32>
    %c0_147 = arith.constant 0 : index
    %c0_148 = arith.constant 0 : index
    %346 = vector.load %arg7[%c0_147, %c0_148] : memref<1x128xf32, #tpu.memory_space<vmem>>, vector<1x128xf32>
    %347 = vector.broadcast %346 : vector<1x128xf32> to vector<64x128xf32>
    %348 = arith.addf %345, %347 : vector<64x128xf32>
    %349 = vector.shape_cast %348 : vector<64x128xf32> to vector<8x8x128xf32>
    %c0_149 = arith.constant 0 : index
    %c0_150 = arith.constant 0 : index
    %c0_151 = arith.constant 0 : index
    %350 = vector.load %arg8[%c0_149, %c0_150, %c0_151] : memref<8x8x128xf32, #tpu.memory_space<vmem>>, vector<8x8x128xf32>
    tpu.vector_store %arg8[%c0_149, %c0_150, %c0_151], %349 {strides = array<i32>} : memref<8x8x128xf32, #tpu.memory_space<vmem>>, vector<8x8x128xf32>,
    return
  }
  func.func @transform_0(%arg0: i32, %arg1: i32) -> (i32, i32, i32) {
    %c0_i32 = arith.constant 0 : i32
    %c0_i32_0 = arith.constant 0 : i32
    return %arg1, %arg0, %c0_i32 : i32, i32, i32
  }
  func.func @transform_1(%arg0: i32, %arg1: i32) -> (i32, i32) {
    %c0_i32 = arith.constant 0 : i32
    %c0_i32_0 = arith.constant 0 : i32
    %c0_i32_1 = arith.constant 0 : i32
    return %c0_i32, %c0_i32_0 : i32, i32
  }
  func.func @transform_2(%arg0: i32, %arg1: i32) -> (i32, i32) {
    %c0_i32 = arith.constant 0 : i32
    %c0_i32_0 = arith.constant 0 : i32
    %c0_i32_1 = arith.constant 0 : i32
    return %c0_i32, %c0_i32_0 : i32, i32
  }
  func.func @transform_3(%arg0: i32, %arg1: i32) -> (i32, i32) {
    %c0_i32 = arith.constant 0 : i32
    %c0_i32_0 = arith.constant 0 : i32
    %c0_i32_1 = arith.constant 0 : i32
    return %c0_i32, %c0_i32_0 : i32, i32
  }
  func.func @transform_4(%arg0: i32, %arg1: i32) -> (i32, i32) {
    %c0_i32 = arith.constant 0 : i32
    %c0_i32_0 = arith.constant 0 : i32
    %c0_i32_1 = arith.constant 0 : i32
    return %c0_i32, %c0_i32_0 : i32, i32
  }
  func.func @transform_5(%arg0: i32, %arg1: i32) -> (i32, i32) {
    %c0_i32 = arith.constant 0 : i32
    %c0_i32_0 = arith.constant 0 : i32
    %c0_i32_1 = arith.constant 0 : i32
    return %c0_i32, %c0_i32_0 : i32, i32
  }
  func.func @transform_6(%arg0: i32, %arg1: i32) -> (i32, i32, i32) {
    %c0_i32 = arith.constant 0 : i32
    %c0_i32_0 = arith.constant 0 : i32
    return %arg1, %arg0, %c0_i32 : i32, i32, i32
  }
}

</mosaic_0001>

<llo_original>
// kernel: lstm_rnn_forward.3
$region0: #{lstm_rnn_forward.3}
  #allocation0 [shape = 'u32[]', space=smem, size = 0x4, offset = 0x4, fixed_abs, tag = 'smem constant byte address 0x4 - core index']
  #allocation1 [shape = 'u32[144,128]{1,0:T(1,128)}', space=vmem, size = 0x12000, scoped, tag = 'internal scratch']
  #allocation2 [shape = 'bf16[8,8,512]{2,1,0:T(8,128)(2,1)}', space=vmem, size = 0x10000, scoped, tag = 'scratch operand']
  #allocation3 [shape = 'f32[8,128]{1,0:T(8,128)}', space=vmem, size = 0x1000, scoped, tag = 'scratch operand']
  #allocation4 [shape = 'f32[8,128]{1,0:T(8,128)}', space=vmem, size = 0x1000, scoped, tag = 'scratch operand']
  #allocation5 [shape = 'bf16[8,8,128]{2,1,0:T(8,128)(2,1)}', space=vmem, size = 0x4000, scoped, tag = 'scratch operand']
  %s0 = inlined_call_operand.vmem [shape: bf16[8,8,128], index: 0, kind: input, shape index: {}]
  %s1 = inlined_call_operand.vmem [shape: bf16[128,512], index: 1, kind: input, shape index: {}]
  %s2 = inlined_call_operand.hbm [shape: bf16[128,512], index: 2, kind: input, shape index: {}]
  %s3 = inlined_call_operand.vmem [shape: f32[1,512], index: 3, kind: input, shape index: {}]
  %s4 = inlined_call_operand.vmem [shape: bf16[128,128], index: 4, kind: input, shape index: {}]
  %s5 = inlined_call_operand.vmem [shape: f32[1,128], index: 5, kind: input, shape index: {}]
  %s6 = inlined_call_operand.vmem [shape: f32[8,8,128], index: 6, kind: output, shape index: {}]
  %s7 = sld [smem:[#allocation0]]
  $region42: #{lstm_rnn_forward.3} parent=0
    _
  %s9 = ssub.s32 1, %s7
  %s10 = scalar_select 0, %s9, %s7
  $region1: #{lstm_rnn_forward.3} parent=0
    #allocation6 [shape = 'u8[131072]{0}', space=vmem, size = 0x20000, scoped, tag = 'input window, operand 2, single buffered']
    #allocation7 [shape = 's32[1]{0}', space=sflag, size = 0x4, scoped, tag = 'scoped memory for lstm_rnn_forward.3']
    %11 = vsyncpa [#allocation7], 0
    // Predicated region
    $region2: #{lstm_rnn_forward.3} parent=1 // pred_check
      _
    $region3: #{lstm_rnn_forward.3} parent=1 // pred_check_branch
      %13 = sbr.rel (0) target = $region5
    $region4: #{lstm_rnn_forward.3} parent=1 // pred_region
      _
    $region5: #{lstm_rnn_forward.3} parent=1 // pred_fallthru
      _
    // Predicated region
    $region6: #{lstm_rnn_forward.3} parent=1 // pred_check
      _
    $region7: #{lstm_rnn_forward.3} parent=1 // pred_check_branch
      %15 = sbr.rel (0) target = $region9
    $region8: #{lstm_rnn_forward.3} parent=1 // pred_region
      _
    $region9: #{lstm_rnn_forward.3} parent=1 // pred_fallthru
      _
    // Predicated region
    $region10: #{lstm_rnn_forward.3} parent=1 // pred_check
      _
    $region11: #{lstm_rnn_forward.3} parent=1 // pred_check_branch
      %17 = sbr.rel (0) target = $region13
    $region12: #{lstm_rnn_forward.3} parent=1 // pred_region
      %s19 = ssub.s32 4096, 4096
      %20 = vsyncadd [#allocation7], %s19
      %s21 = sshll.u32 [#allocation6], 4
      %s22 = int_to_ptr.vmem [resolvable:$true] %s21
      %27 = dma.hbm_to_vmem [thread:$0]  %s2, 4096, %s22, [#allocation7], 256, 256, 16
    $region13: #{lstm_rnn_forward.3} parent=1 // pred_fallthru
      _
    // Predicated region
    $region14: #{lstm_rnn_forward.3} parent=1 // pred_check
      _
    $region15: #{lstm_rnn_forward.3} parent=1 // pred_check_branch
      %29 = sbr.rel (0) target = $region17
    $region16: #{lstm_rnn_forward.3} parent=1 // pred_region
      _
    $region17: #{lstm_rnn_forward.3} parent=1 // pred_fallthru
      _
    // Predicated region
    $region18: #{lstm_rnn_forward.3} parent=1 // pred_check
      _
    $region19: #{lstm_rnn_forward.3} parent=1 // pred_check_branch
      %31 = sbr.rel (0) target = $region21
    $region20: #{lstm_rnn_forward.3} parent=1 // pred_region
      _
    $region21: #{lstm_rnn_forward.3} parent=1 // pred_fallthru
      _
    // Predicated region
    $region22: #{lstm_rnn_forward.3} parent=1 // pred_check
      _
    $region23: #{lstm_rnn_forward.3} parent=1 // pred_check_branch
      %33 = sbr.rel (0) target = $region25
    $region24: #{lstm_rnn_forward.3} parent=1 // pred_region
      _
    $region25: #{lstm_rnn_forward.3} parent=1 // pred_fallthru
      _
    // Predicated region
    $region26: #{lstm_rnn_forward.3} parent=1 // pred_check
      _
    $region27: #{lstm_rnn_forward.3} parent=1 // pred_check_branch
      %35 = sbr.rel (0) target = $region29
    $region28: #{lstm_rnn_forward.3} parent=1 // pred_region
      %36 = dma.done [#allocation7], 4096
    $region29: #{lstm_rnn_forward.3} parent=1 // pred_fallthru
      _
    %p38 = scmp.eq.s32.totalorder 0, 0
    // Predicated region
    $region30: #{lstm_rnn_forward.3} parent=1 // pred_check
      %p39 = pneg %p38
    $region31: #{lstm_rnn_forward.3} parent=1 // pred_check_branch
      %41 = sbr.rel (%p39) target = $region33
    $region32: #{lstm_rnn_forward.3} parent=1 // pred_region
      %42 = vst [vmem:[#allocation3] sm:$0xff] 0.0
      %43 = vst [vmem:[#allocation4] sm:$0xff] 0.0
    $region33: #{lstm_rnn_forward.3} parent=1 // pred_fallthru
      _
    %v44 = vld [vmem:[%s0] sm:$0xf]
    %v45 = vld [vmem:[%s0 + $0x4] sm:$0xf]
    %v46 = vld [vmem:[%s0 + $0x8] sm:$0xf]
    %v47 = vld [vmem:[%s0 + $0xc] sm:$0xf]
    %v48 = vld [vmem:[%s0 + $0x10] sm:$0xf]
    %v49 = vld [vmem:[%s0 + $0x14] sm:$0xf]
    %v50 = vld [vmem:[%s0 + $0x18] sm:$0xf]
    %v51 = vld [vmem:[%s0 + $0x1c] sm:$0xf]
    %v52 = vld [vmem:[%s1] sm:$0xff]
    %v53 = vld [vmem:[%s1 + $0x8] sm:$0xff]
    %v54 = vld [vmem:[%s1 + $0x10] sm:$0xff]
    %v55 = vld [vmem:[%s1 + $0x18] sm:$0xff]
    %v56 = vld [vmem:[%s1 + $0x20] sm:$0xff]
    %v57 = vld [vmem:[%s1 + $0x28] sm:$0xff]
    %v58 = vld [vmem:[%s1 + $0x30] sm:$0xff]
    %v59 = vld [vmem:[%s1 + $0x38] sm:$0xff]
    %v60 = vld [vmem:[%s1 + $0x40] sm:$0xff]
    %v61 = vld [vmem:[%s1 + $0x48] sm:$0xff]
    %v62 = vld [vmem:[%s1 + $0x50] sm:$0xff]
    %v63 = vld [vmem:[%s1 + $0x58] sm:$0xff]
    %v64 = vld [vmem:[%s1 + $0x60] sm:$0xff]
    %v65 = vld [vmem:[%s1 + $0x68] sm:$0xff]
    %v66 = vld [vmem:[%s1 + $0x70] sm:$0xff]
    %v67 = vld [vmem:[%s1 + $0x78] sm:$0xff]
    %v68 = vld [vmem:[%s1 + $0x80] sm:$0xff]
    %v69 = vld [vmem:[%s1 + $0x88] sm:$0xff]
    %v70 = vld [vmem:[%s1 + $0x90] sm:$0xff]
    %v71 = vld [vmem:[%s1 + $0x98] sm:$0xff]
    %v72 = vld [vmem:[%s1 + $0xa0] sm:$0xff]
    %v73 = vld [vmem:[%s1 + $0xa8] sm:$0xff]
    %v74 = vld [vmem:[%s1 + $0xb0] sm:$0xff]
    %v75 = vld [vmem:[%s1 + $0xb8] sm:$0xff]
    %v76 = vld [vmem:[%s1 + $0xc0] sm:$0xff]
    %v77 = vld [vmem:[%s1 + $0xc8] sm:$0xff]
    %v78 = vld [vmem:[%s1 + $0xd0] sm:$0xff]
    %v79 = vld [vmem:[%s1 + $0xd8] sm:$0xff]
    %v80 = vld [vmem:[%s1 + $0xe0] sm:$0xff]
    %v81 = vld [vmem:[%s1 + $0xe8] sm:$0xff]
    %v82 = vld [vmem:[%s1 + $0xf0] sm:$0xff]
    %v83 = vld [vmem:[%s1 + $0xf8] sm:$0xff]
    %v84 = vld [vmem:[%s3] sm:$0xf]
    %v86 = vlaneseq
    %v87 = vshrl.u32 %v86, 7
    %v88 = vsub.s32 0, %v87
    %v89 = vrot.slane %v84, %v88
    %v90 = vlaneseq
    %v91 = vshrl.u32 %v90, 7
    %v92 = vsub.s32 1, %v91
    %v93 = vrot.slane %v84, %v92
    %v94 = vlaneseq
    %v95 = vshrl.u32 %v94, 7
    %v96 = vsub.s32 2, %v95
    %v97 = vrot.slane %v84, %v96
    %v98 = vlaneseq
    %v99 = vshrl.u32 %v98, 7
    %v100 = vsub.s32 3, %v99
    %v101 = vrot.slane %v84, %v100
    %v114 = vunpack.c.l.b16 %v44
    %v115 = vunpack.c.l.b16 %v45
    %v116 = vunpack.c.l.b16 %v46
    %v117 = vunpack.c.l.b16 %v47
    %v118 = vunpack.c.l.b16 %v48
    %v119 = vunpack.c.l.b16 %v49
    %v120 = vunpack.c.l.b16 %v50
    %v121 = vunpack.c.l.b16 %v51
    %v122 = vpack.c.b16 %v115, %v114
    %v123 = vpack.c.b16 %v117, %v116
    %v124 = vpack.c.b16 %v119, %v118
    %v125 = vpack.c.b16 %v121, %v120
    %v162 = vunpack.c.l.b16 %v52
    %v163 = vunpack.c.h.b16 %v52
    %v164 = vunpack.c.l.b16 %v53
    %v165 = vunpack.c.h.b16 %v53
    %v166 = vunpack.c.l.b16 %v54
    %v167 = vunpack.c.h.b16 %v54
    %v168 = vunpack.c.l.b16 %v55
    %v169 = vunpack.c.h.b16 %v55
    %v170 = vunpack.c.l.b16 %v56
    %v171 = vunpack.c.h.b16 %v56
    %v172 = vunpack.c.l.b16 %v57
    %v173 = vunpack.c.h.b16 %v57
    %v174 = vunpack.c.l.b16 %v58
    %v175 = vunpack.c.h.b16 %v58
    %v176 = vunpack.c.l.b16 %v59
    %v177 = vunpack.c.h.b16 %v59
    %v178 = vunpack.c.l.b16 %v60
    %v179 = vunpack.c.h.b16 %v60
    %v180 = vunpack.c.l.b16 %v61
    %v181 = vunpack.c.h.b16 %v61
    %v182 = vunpack.c.l.b16 %v62
    %v183 = vunpack.c.h.b16 %v62
    %v184 = vunpack.c.l.b16 %v63
    %v185 = vunpack.c.h.b16 %v63
    %v186 = vunpack.c.l.b16 %v64
    %v187 = vunpack.c.h.b16 %v64
    %v188 = vunpack.c.l.b16 %v65
    %v189 = vunpack.c.h.b16 %v65
    %v190 = vunpack.c.l.b16 %v66
    %v191 = vunpack.c.h.b16 %v66
    %v192 = vunpack.c.l.b16 %v67
    %v193 = vunpack.c.h.b16 %v67
    %v194 = vunpack.c.l.b16 %v68
    %v195 = vunpack.c.h.b16 %v68
    %v196 = vunpack.c.l.b16 %v69
    %v197 = vunpack.c.h.b16 %v69
    %v198 = vunpack.c.l.b16 %v70
    %v199 = vunpack.c.h.b16 %v70
    %v200 = vunpack.c.l.b16 %v71
    %v201 = vunpack.c.h.b16 %v71
    %v202 = vunpack.c.l.b16 %v72
    %v203 = vunpack.c.h.b16 %v72
    %v204 = vunpack.c.l.b16 %v73
    %v205 = vunpack.c.h.b16 %v73
    %v206 = vunpack.c.l.b16 %v74
    %v207 = vunpack.c.h.b16 %v74
    %v208 = vunpack.c.l.b16 %v75
    %v209 = vunpack.c.h.b16 %v75
    %v210 = vunpack.c.l.b16 %v76
    %v211 = vunpack.c.h.b16 %v76
    %v212 = vunpack.c.l.b16 %v77
    %v213 = vunpack.c.h.b16 %v77
    %v214 = vunpack.c.l.b16 %v78
    %v215 = vunpack.c.h.b16 %v78
    %v216 = vunpack.c.l.b16 %v79
    %v217 = vunpack.c.h.b16 %v79
    %v218 = vunpack.c.l.b16 %v80
    %v219 = vunpack.c.h.b16 %v80
    %v220 = vunpack.c.l.b16 %v81
    %v221 = vunpack.c.h.b16 %v81
    %v222 = vunpack.c.l.b16 %v82
    %v223 = vunpack.c.h.b16 %v82
    %v224 = vunpack.c.l.b16 %v83
    %v225 = vunpack.c.h.b16 %v83
    %v226 = vpack.c.b16 %v166, %v162
    %v227 = vpack.c.b16 %v167, %v163
    %v228 = vpack.c.b16 %v168, %v164
    %v229 = vpack.c.b16 %v169, %v165
    %v230 = vpack.c.b16 %v174, %v170
    %v231 = vpack.c.b16 %v175, %v171
    %v232 = vpack.c.b16 %v176, %v172
    %v233 = vpack.c.b16 %v177, %v173
    %v234 = vpack.c.b16 %v182, %v178
    %v235 = vpack.c.b16 %v183, %v179
    %v236 = vpack.c.b16 %v184, %v180
    %v237 = vpack.c.b16 %v185, %v181
    %v238 = vpack.c.b16 %v190, %v186
    %v239 = vpack.c.b16 %v191, %v187
    %v240 = vpack.c.b16 %v192, %v188
    %v241 = vpack.c.b16 %v193, %v189
    %v242 = vpack.c.b16 %v198, %v194
    %v243 = vpack.c.b16 %v199, %v195
    %v244 = vpack.c.b16 %v200, %v196
    %v245 = vpack.c.b16 %v201, %v197
    %v246 = vpack.c.b16 %v206, %v202
    %v247 = vpack.c.b16 %v207, %v203
    %v248 = vpack.c.b16 %v208, %v204
    %v249 = vpack.c.b16 %v209, %v205
    %v250 = vpack.c.b16 %v214, %v210
    %v251 = vpack.c.b16 %v215, %v211
    %v252 = vpack.c.b16 %v216, %v212
    %v253 = vpack.c.b16 %v217, %v213
    %v254 = vpack.c.b16 %v222, %v218
    %v255 = vpack.c.b16 %v223, %v219
    %v256 = vpack.c.b16 %v224, %v220
    %v257 = vpack.c.b16 %v225, %v221
    %290 = vmatprep.subr.bf16.mxu0 %v255
    %291 = vmatpush1.bf16.msra.mxu0 %v254
    %292 = vmatprep.subr.bf16.mxu0 %v251
    %293 = vmatpush1.bf16.msra.mxu0 %v250
    %294 = vmatprep.subr.bf16.mxu0 %v247
    %295 = vmatpush1.bf16.msra.mxu0 %v246
    %296 = vmatprep.subr.bf16.mxu0 %v243
    %297 = vmatpush1.bf16.msra.mxu0 %v242
    %298 = vmatprep.subr.bf16.mxu0 %v239
    %299 = vmatpush1.bf16.msra.mxu0 %v238
    %300 = vmatprep.subr.bf16.mxu0 %v235
    %301 = vmatpush1.bf16.msra.mxu0 %v234
    %302 = vmatprep.subr.bf16.mxu0 %v231
    %303 = vmatpush1.bf16.msra.mxu0 %v230
    %304 = vmatprep.subr.bf16.mxu0 %v227
    %305 = vmatpush1.bf16.msra.mxu0 %v226
    %306 = vmatprep.subr.bf16.mxu0 0
    %307 = vmatpush2.bf16.msra.mxu0 0
    %308 = vmatprep.subr.bf16.mxu0 0
    %309 = vmatpush2.bf16.msra.mxu0 0
    %310 = vmatprep.subr.bf16.mxu0 0
    %311 = vmatpush2.bf16.msra.mxu0 0
    %312 = vmatprep.subr.bf16.mxu0 0
    %313 = vmatpush2.bf16.msra.mxu0 0
    %314 = vmatprep.subr.bf16.mxu0 0
    %315 = vmatpush2.bf16.msra.mxu0 0
    %316 = vmatprep.subr.bf16.mxu0 0
    %317 = vmatpush2.bf16.msra.mxu0 0
    %318 = vmatprep.subr.bf16.mxu0 0
    %319 = vmatpush2.bf16.msra.mxu0 0
    %320 = vmatprep.subr.bf16.mxu0 0
    %321 = vmatpush2.bf16.msra.mxu0 0
    %322 = vmatprep.mubr.bf16.mxu0 0
    %323 = vmatmul.mubr.bf16.gmra.mxu0 %v122
    %v324 = vpop.f32.mrf.mxu0
    %v325 = vadd.f32 %v89, %v324
    %v326 = vpop.f32.mrf.mxu0
    %v327 = vadd.f32 %v93, %v326
    %v328 = vpop.f32.mrf.mxu0
    %v329 = vadd.f32 %v89, %v328
    %v330 = vpop.f32.mrf.mxu0
    %v331 = vadd.f32 %v93, %v330
    %332 = vmatprep.mubr.bf16.mxu0 0
    %333 = vmatmul.mubr.bf16.gmra.mxu0 %v123
    %v334 = vpop.f32.mrf.mxu0
    %v335 = vadd.f32 %v89, %v334
    %v336 = vpop.f32.mrf.mxu0
    %v337 = vadd.f32 %v93, %v336
    %v338 = vpop.f32.mrf.mxu0
    %v339 = vadd.f32 %v89, %v338
    %v340 = vpop.f32.mrf.mxu0
    %v341 = vadd.f32 %v93, %v340
    %342 = vmatprep.mubr.bf16.mxu0 0
    %343 = vmatmul.mubr.bf16.gmra.mxu0 %v124
    %v344 = vpop.f32.mrf.mxu0
    %v345 = vadd.f32 %v89, %v344
    %v346 = vpop.f32.mrf.mxu0
    %v347 = vadd.f32 %v93, %v346
    %v348 = vpop.f32.mrf.mxu0
    %v349 = vadd.f32 %v89, %v348
    %v350 = vpop.f32.mrf.mxu0
    %v351 = vadd.f32 %v93, %v350
    %352 = vmatprep.mubr.bf16.mxu0 0
    %353 = vmatmul.mubr.bf16.gmra.mxu0 %v125
    %v354 = vpop.f32.mrf.mxu0
    %v355 = vadd.f32 %v89, %v354
    %v356 = vpop.f32.mrf.mxu0
    %v357 = vadd.f32 %v93, %v356
    %v358 = vpop.f32.mrf.mxu0
    %v359 = vadd.f32 %v89, %v358
    %v360 = vpop.f32.mrf.mxu0
    %v361 = vadd.f32 %v93, %v360
    %362 = vdwg.mxu0
    %363 = vmatprep.subr.bf16.mxu0 %v257
    %364 = vmatpush1.bf16.msra.mxu0 %v256
    %365 = vmatprep.subr.bf16.mxu0 %v253
    %366 = vmatpush1.bf16.msra.mxu0 %v252
    %367 = vmatprep.subr.bf16.mxu0 %v249
    %368 = vmatpush1.bf16.msra.mxu0 %v248
    %369 = vmatprep.subr.bf16.mxu0 %v245
    %370 = vmatpush1.bf16.msra.mxu0 %v244
    %371 = vmatprep.subr.bf16.mxu0 %v241
    %372 = vmatpush1.bf16.msra.mxu0 %v240
    %373 = vmatprep.subr.bf16.mxu0 %v237
    %374 = vmatpush1.bf16.msra.mxu0 %v236
    %375 = vmatprep.subr.bf16.mxu0 %v233
    %376 = vmatpush1.bf16.msra.mxu0 %v232
    %377 = vmatprep.subr.bf16.mxu0 %v229
    %378 = vmatpush1.bf16.msra.mxu0 %v228
    %379 = vmatprep.subr.bf16.mxu0 0
    %380 = vmatpush2.bf16.msra.mxu0 0
    %381 = vmatprep.subr.bf16.mxu0 0
    %382 = vmatpush2.bf16.msra.mxu0 0
    %383 = vmatprep.subr.bf16.mxu0 0
    %384 = vmatpush2.bf16.msra.mxu0 0
    %385 = vmatprep.subr.bf16.mxu0 0
    %386 = vmatpush2.bf16.msra.mxu0 0
    %387 = vmatprep.subr.bf16.mxu0 0
    %388 = vmatpush2.bf16.msra.mxu0 0
    %389 = vmatprep.subr.bf16.mxu0 0
    %390 = vmatpush2.bf16.msra.mxu0 0
    %391 = vmatprep.subr.bf16.mxu0 0
    %392 = vmatpush2.bf16.msra.mxu0 0
    %393 = vmatprep.subr.bf16.mxu0 0
    %394 = vmatpush2.bf16.msra.mxu0 0
    %395 = vmatprep.mubr.bf16.mxu0 0
    %396 = vmatmul.mubr.bf16.gmra.mxu0 %v122
    %v397 = vpop.f32.mrf.mxu0
    %v398 = vadd.f32 %v97, %v397
    %v399 = vpop.f32.mrf.mxu0
    %v400 = vadd.f32 %v101, %v399
    %v401 = vpop.f32.mrf.mxu0
    %v402 = vadd.f32 %v97, %v401
    %v403 = vpop.f32.mrf.mxu0
    %v404 = vadd.f32 %v101, %v403
    %405 = vmatprep.mubr.bf16.mxu0 0
    %406 = vmatmul.mubr.bf16.gmra.mxu0 %v123
    %v407 = vpop.f32.mrf.mxu0
    %v408 = vadd.f32 %v97, %v407
    %v409 = vpop.f32.mrf.mxu0
    %v410 = vadd.f32 %v101, %v409
    %v411 = vpop.f32.mrf.mxu0
    %v412 = vadd.f32 %v97, %v411
    %v413 = vpop.f32.mrf.mxu0
    %v414 = vadd.f32 %v101, %v413
    %415 = vmatprep.mubr.bf16.mxu0 0
    %416 = vmatmul.mubr.bf16.gmra.mxu0 %v124
    %v417 = vpop.f32.mrf.mxu0
    %v418 = vadd.f32 %v97, %v417
    %v419 = vpop.f32.mrf.mxu0
    %v420 = vadd.f32 %v101, %v419
    %v421 = vpop.f32.mrf.mxu0
    %v422 = vadd.f32 %v97, %v421
    %v423 = vpop.f32.mrf.mxu0
    %v424 = vadd.f32 %v101, %v423
    %425 = vmatprep.mubr.bf16.mxu0 0
    %426 = vmatmul.mubr.bf16.gmra.mxu0 %v125
    %v427 = vpop.f32.mrf.mxu0
    %v428 = vadd.f32 %v97, %v427
    %v429 = vpop.f32.mrf.mxu0
    %v430 = vadd.f32 %v101, %v429
    %v431 = vpop.f32.mrf.mxu0
    %v432 = vadd.f32 %v97, %v431
    %v433 = vpop.f32.mrf.mxu0
    %v434 = vadd.f32 %v101, %v433
    %435 = vdwg.mxu0
    %v436 = vpack.c.bf16 %v325, %v325
    %v437 = vpack.c.bf16 %v327, %v327
    %v438 = vpack.c.bf16 %v398, %v398
    %v439 = vpack.c.bf16 %v400, %v400
    %v440 = vpack.c.bf16 %v329, %v329
    %v441 = vpack.c.bf16 %v331, %v331
    %v442 = vpack.c.bf16 %v402, %v402
    %v443 = vpack.c.bf16 %v404, %v404
    %v444 = vpack.c.bf16 %v335, %v335
    %v445 = vpack.c.bf16 %v337, %v337
    %v446 = vpack.c.bf16 %v408, %v408
    %v447 = vpack.c.bf16 %v410, %v410
    %v448 = vpack.c.bf16 %v339, %v339
    %v449 = vpack.c.bf16 %v341, %v341
    %v450 = vpack.c.bf16 %v412, %v412
    %v451 = vpack.c.bf16 %v414, %v414
    %v452 = vpack.c.bf16 %v345, %v345
    %v453 = vpack.c.bf16 %v347, %v347
    %v454 = vpack.c.bf16 %v418, %v418
    %v455 = vpack.c.bf16 %v420, %v420
    %v456 = vpack.c.bf16 %v349, %v349
    %v457 = vpack.c.bf16 %v351, %v351
    %v458 = vpack.c.bf16 %v422, %v422
    %v459 = vpack.c.bf16 %v424, %v424
    %v460 = vpack.c.bf16 %v355, %v355
    %v461 = vpack.c.bf16 %v357, %v357
    %v462 = vpack.c.bf16 %v428, %v428
    %v463 = vpack.c.bf16 %v430, %v430
    %v464 = vpack.c.bf16 %v359, %v359
    %v465 = vpack.c.bf16 %v361, %v361
    %v466 = vpack.c.bf16 %v432, %v432
    %v467 = vpack.c.bf16 %v434, %v434
    %v500 = vunpack.c.l.b16 %v436
    %v501 = vunpack.c.l.b16 %v437
    %v502 = vunpack.c.l.b16 %v438
    %v503 = vunpack.c.l.b16 %v439
    %v504 = vunpack.c.l.b16 %v440
    %v505 = vunpack.c.l.b16 %v441
    %v506 = vunpack.c.l.b16 %v442
    %v507 = vunpack.c.l.b16 %v443
    %v508 = vunpack.c.l.b16 %v444
    %v509 = vunpack.c.l.b16 %v445
    %v510 = vunpack.c.l.b16 %v446
    %v511 = vunpack.c.l.b16 %v447
    %v512 = vunpack.c.l.b16 %v448
    %v513 = vunpack.c.l.b16 %v449
    %v514 = vunpack.c.l.b16 %v450
    %v515 = vunpack.c.l.b16 %v451
    %v516 = vunpack.c.l.b16 %v452
    %v517 = vunpack.c.l.b16 %v453
    %v518 = vunpack.c.l.b16 %v454
    %v519 = vunpack.c.l.b16 %v455
    %v520 = vunpack.c.l.b16 %v456
    %v521 = vunpack.c.l.b16 %v457
    %v522 = vunpack.c.l.b16 %v458
    %v523 = vunpack.c.l.b16 %v459
    %v524 = vunpack.c.l.b16 %v460
    %v525 = vunpack.c.l.b16 %v461
    %v526 = vunpack.c.l.b16 %v462
    %v527 = vunpack.c.l.b16 %v463
    %v528 = vunpack.c.l.b16 %v464
    %v529 = vunpack.c.l.b16 %v465
    %v530 = vunpack.c.l.b16 %v466
    %v531 = vunpack.c.l.b16 %v467
    %v532 = vpack.c.b16 %v501, %v500
    %v533 = vpack.c.b16 %v503, %v502
    %v534 = vpack.c.b16 %v505, %v504
    %v535 = vpack.c.b16 %v507, %v506
    %v536 = vpack.c.b16 %v509, %v508
    %v537 = vpack.c.b16 %v511, %v510
    %v538 = vpack.c.b16 %v513, %v512
    %v539 = vpack.c.b16 %v515, %v514
    %v540 = vpack.c.b16 %v517, %v516
    %v541 = vpack.c.b16 %v519, %v518
    %v542 = vpack.c.b16 %v521, %v520
    %v543 = vpack.c.b16 %v523, %v522
    %v544 = vpack.c.b16 %v525, %v524
    %v545 = vpack.c.b16 %v527, %v526
    %v546 = vpack.c.b16 %v529, %v528
    %v547 = vpack.c.b16 %v531, %v530
    %564 = vst [vmem:[#allocation2] sm:$0xff] %v532
    %565 = vst [vmem:[#allocation2 + $0x8] sm:$0xff] %v533
    %566 = vst [vmem:[#allocation2 + $0x10] sm:$0xff] %v534
    %567 = vst [vmem:[#allocation2 + $0x18] sm:$0xff] %v535
    %568 = vst [vmem:[#allocation2 + $0x20] sm:$0xff] %v536
    %569 = vst [vmem:[#allocation2 + $0x28] sm:$0xff] %v537
    %570 = vst [vmem:[#allocation2 + $0x30] sm:$0xff] %v538
    %571 = vst [vmem:[#allocation2 + $0x38] sm:$0xff] %v539
    %572 = vst [vmem:[#allocation2 + $0x40] sm:$0xff] %v540
    %573 = vst [vmem:[#allocation2 + $0x48] sm:$0xff] %v541
    %574 = vst [vmem:[#allocation2 + $0x50] sm:$0xff] %v542
    %575 = vst [vmem:[#allocation2 + $0x58] sm:$0xff] %v543
    %576 = vst [vmem:[#allocation2 + $0x60] sm:$0xff] %v544
    %577 = vst [vmem:[#allocation2 + $0x68] sm:$0xff] %v545
    %578 = vst [vmem:[#allocation2 + $0x70] sm:$0xff] %v546
    %579 = vst [vmem:[#allocation2 + $0x78] sm:$0xff] %v547
    %v580 = vld [vmem:[#allocation6] sm:$0xff]
    %v581 = vld [vmem:[#allocation6 + $0x8] sm:$0xff]
    %v582 = vld [vmem:[#allocation6 + $0x10] sm:$0xff]
    %v583 = vld [vmem:[#allocation6 + $0x18] sm:$0xff]
    %v584 = vld [vmem:[#allocation6 + $0x20] sm:$0xff]
    %v585 = vld [vmem:[#allocation6 + $0x28] sm:$0xff]
    %v586 = vld [vmem:[#allocation6 + $0x30] sm:$0xff]
    %v587 = vld [vmem:[#allocation6 + $0x38] sm:$0xff]
    %v588 = vld [vmem:[#allocation6 + $0x40] sm:$0xff]
    %v589 = vld [vmem:[#allocation6 + $0x48] sm:$0xff]
    %v590 = vld [vmem:[#allocation6 + $0x50] sm:$0xff]
    %v591 = vld [vmem:[#allocation6 + $0x58] sm:$0xff]
    %v592 = vld [vmem:[#allocation6 + $0x60] sm:$0xff]
    %v593 = vld [vmem:[#allocation6 + $0x68] sm:$0xff]
    %v594 = vld [vmem:[#allocation6 + $0x70] sm:$0xff]
    %v595 = vld [vmem:[#allocation6 + $0x78] sm:$0xff]
    %v596 = vld [vmem:[#allocation6 + $0x80] sm:$0xff]
    %v597 = vld [vmem:[#allocation6 + $0x88] sm:$0xff]
    %v598 = vld [vmem:[#allocation6 + $0x90] sm:$0xff]
    %v599 = vld [vmem:[#allocation6 + $0x98] sm:$0xff]
    %v600 = vld [vmem:[#allocation6 + $0xa0] sm:$0xff]
    %v601 = vld [vmem:[#allocation6 + $0xa8] sm:$0xff]
    %v602 = vld [vmem:[#allocation6 + $0xb0] sm:$0xff]
    %v603 = vld [vmem:[#allocation6 + $0xb8] sm:$0xff]
    %v604 = vld [vmem:[#allocation6 + $0xc0] sm:$0xff]
    %v605 = vld [vmem:[#allocation6 + $0xc8] sm:$0xff]
    %v606 = vld [vmem:[#allocation6 + $0xd0] sm:$0xff]
    %v607 = vld [vmem:[#allocation6 + $0xd8] sm:$0xff]
    %v608 = vld [vmem:[#allocation6 + $0xe0] sm:$0xff]
    %v609 = vld [vmem:[#allocation6 + $0xe8] sm:$0xff]
    %v610 = vld [vmem:[#allocation6 + $0xf0] sm:$0xff]
    %v611 = vld [vmem:[#allocation6 + $0xf8] sm:$0xff]
    %v612 = vld [vmem:[#allocation3] sm:$0xff]
    %v613 = vpack.c.bf16 %v612, %v612
    %v646 = vunpack.c.l.b16 %v580
    %v647 = vunpack.c.h.b16 %v580
    %v648 = vunpack.c.l.b16 %v581
    %v649 = vunpack.c.h.b16 %v581
    %v650 = vunpack.c.l.b16 %v582
    %v651 = vunpack.c.h.b16 %v582
    %v652 = vunpack.c.l.b16 %v583
    %v653 = vunpack.c.h.b16 %v583
    %v654 = vunpack.c.l.b16 %v584
    %v655 = vunpack.c.h.b16 %v584
    %v656 = vunpack.c.l.b16 %v585
    %v657 = vunpack.c.h.b16 %v585
    %v658 = vunpack.c.l.b16 %v586
    %v659 = vunpack.c.h.b16 %v586
    %v660 = vunpack.c.l.b16 %v587
    %v661 = vunpack.c.h.b16 %v587
    %v662 = vunpack.c.l.b16 %v588
    %v663 = vunpack.c.h.b16 %v588
    %v664 = vunpack.c.l.b16 %v589
    %v665 = vunpack.c.h.b16 %v589
    %v666 = vunpack.c.l.b16 %v590
    %v667 = vunpack.c.h.b16 %v590
    %v668 = vunpack.c.l.b16 %v591
    %v669 = vunpack.c.h.b16 %v591
    %v670 = vunpack.c.l.b16 %v592
    %v671 = vunpack.c.h.b16 %v592
    %v672 = vunpack.c.l.b16 %v593
    %v673 = vunpack.c.h.b16 %v593
    %v674 = vunpack.c.l.b16 %v594
    %v675 = vunpack.c.h.b16 %v594
    %v676 = vunpack.c.l.b16 %v595
    %v677 = vunpack.c.h.b16 %v595
    %v678 = vunpack.c.l.b16 %v596
    %v679 = vunpack.c.h.b16 %v596
    %v680 = vunpack.c.l.b16 %v597
    %v681 = vunpack.c.h.b16 %v597
    %v682 = vunpack.c.l.b16 %v598
    %v683 = vunpack.c.h.b16 %v598
    %v684 = vunpack.c.l.b16 %v599
    %v685 = vunpack.c.h.b16 %v599
    %v686 = vunpack.c.l.b16 %v600
    %v687 = vunpack.c.h.b16 %v600
    %v688 = vunpack.c.l.b16 %v601
    %v689 = vunpack.c.h.b16 %v601
    %v690 = vunpack.c.l.b16 %v602
    %v691 = vunpack.c.h.b16 %v602
    %v692 = vunpack.c.l.b16 %v603
    %v693 = vunpack.c.h.b16 %v603
    %v694 = vunpack.c.l.b16 %v604
    %v695 = vunpack.c.h.b16 %v604
    %v696 = vunpack.c.l.b16 %v605
    %v697 = vunpack.c.h.b16 %v605
    %v698 = vunpack.c.l.b16 %v606
    %v699 = vunpack.c.h.b16 %v606
    %v700 = vunpack.c.l.b16 %v607
    %v701 = vunpack.c.h.b16 %v607
    %v702 = vunpack.c.l.b16 %v608
    %v703 = vunpack.c.h.b16 %v608
    %v704 = vunpack.c.l.b16 %v609
    %v705 = vunpack.c.h.b16 %v609
    %v706 = vunpack.c.l.b16 %v610
    %v707 = vunpack.c.h.b16 %v610
    %v708 = vunpack.c.l.b16 %v611
    %v709 = vunpack.c.h.b16 %v611
    %v710 = vpack.c.b16 %v650, %v646
    %v711 = vpack.c.b16 %v651, %v647
    %v712 = vpack.c.b16 %v652, %v648
    %v713 = vpack.c.b16 %v653, %v649
    %v714 = vpack.c.b16 %v658, %v654
    %v715 = vpack.c.b16 %v659, %v655
    %v716 = vpack.c.b16 %v660, %v656
    %v717 = vpack.c.b16 %v661, %v657
    %v718 = vpack.c.b16 %v666, %v662
    %v719 = vpack.c.b16 %v667, %v663
    %v720 = vpack.c.b16 %v668, %v664
    %v721 = vpack.c.b16 %v669, %v665
    %v722 = vpack.c.b16 %v674, %v670
    %v723 = vpack.c.b16 %v675, %v671
    %v724 = vpack.c.b16 %v676, %v672
    %v725 = vpack.c.b16 %v677, %v673
    %v726 = vpack.c.b16 %v682, %v678
    %v727 = vpack.c.b16 %v683, %v679
    %v728 = vpack.c.b16 %v684, %v680
    %v729 = vpack.c.b16 %v685, %v681
    %v730 = vpack.c.b16 %v690, %v686
    %v731 = vpack.c.b16 %v691, %v687
    %v732 = vpack.c.b16 %v692, %v688
    %v733 = vpack.c.b16 %v693, %v689
    %v734 = vpack.c.b16 %v698, %v694
    %v735 = vpack.c.b16 %v699, %v695
    %v736 = vpack.c.b16 %v700, %v696
    %v737 = vpack.c.b16 %v701, %v697
    %v738 = vpack.c.b16 %v706, %v702
    %v739 = vpack.c.b16 %v707, %v703
    %v740 = vpack.c.b16 %v708, %v704
    %v741 = vpack.c.b16 %v709, %v705
    %774 = vmatprep.subr.bf16.mxu0 %v739
    %775 = vmatpush1.bf16.msra.mxu0 %v738
    %776 = vmatprep.subr.bf16.mxu0 %v735
    %777 = vmatpush1.bf16.msra.mxu0 %v734
    %778 = vmatprep.subr.bf16.mxu0 %v731
    %779 = vmatpush1.bf16.msra.mxu0 %v730
    %780 = vmatprep.subr.bf16.mxu0 %v727
    %781 = vmatpush1.bf16.msra.mxu0 %v726
    %782 = vmatprep.subr.bf16.mxu0 %v723
    %783 = vmatpush1.bf16.msra.mxu0 %v722
    %784 = vmatprep.subr.bf16.mxu0 %v719
    %785 = vmatpush1.bf16.msra.mxu0 %v718
    %786 = vmatprep.subr.bf16.mxu0 %v715
    %787 = vmatpush1.bf16.msra.mxu0 %v714
    %788 = vmatprep.subr.bf16.mxu0 %v711
    %789 = vmatpush1.bf16.msra.mxu0 %v710
    %790 = vmatprep.subr.bf16.mxu0 0
    %791 = vmatpush2.bf16.msra.mxu0 0
    %792 = vmatprep.subr.bf16.mxu0 0
    %793 = vmatpush2.bf16.msra.mxu0 0
    %794 = vmatprep.subr.bf16.mxu0 0
    %795 = vmatpush2.bf16.msra.mxu0 0
    %796 = vmatprep.subr.bf16.mxu0 0
    %797 = vmatpush2.bf16.msra.mxu0 0
    %798 = vmatprep.subr.bf16.mxu0 0
    %799 = vmatpush2.bf16.msra.mxu0 0
    %800 = vmatprep.subr.bf16.mxu0 0
    %801 = vmatpush2.bf16.msra.mxu0 0
    %802 = vmatprep.subr.bf16.mxu0 0
    %803 = vmatpush2.bf16.msra.mxu0 0
    %804 = vmatprep.subr.bf16.mxu0 0
    %805 = vmatpush2.bf16.msra.mxu0 0
    %806 = vmatprep.mubr.bf16.mxu0 0
    %807 = vmatmul.mubr.bf16.gmra.mxu0 %v613
    %v808 = vpop.f32.mrf.mxu0
    %v809 = vadd.f32 0.0, %v808
    %v810 = vpop.f32.mrf.mxu0
    %v811 = vadd.f32 0.0, %v810
    %v812 = vpop.f32.mrf.mxu0
    %v813 = vpop.f32.mrf.mxu0
    %814 = vdwg.mxu0
    %815 = vmatprep.subr.bf16.mxu0 %v741
    %816 = vmatpush1.bf16.msra.mxu0 %v740
    %817 = vmatprep.subr.bf16.mxu0 %v737
    %818 = vmatpush1.bf16.msra.mxu0 %v736
    %819 = vmatprep.subr.bf16.mxu0 %v733
    %820 = vmatpush1.bf16.msra.mxu0 %v732
    %821 = vmatprep.subr.bf16.mxu0 %v729
    %822 = vmatpush1.bf16.msra.mxu0 %v728
    %823 = vmatprep.subr.bf16.mxu0 %v725
    %824 = vmatpush1.bf16.msra.mxu0 %v724
    %825 = vmatprep.subr.bf16.mxu0 %v721
    %826 = vmatpush1.bf16.msra.mxu0 %v720
    %827 = vmatprep.subr.bf16.mxu0 %v717
    %828 = vmatpush1.bf16.msra.mxu0 %v716
    %829 = vmatprep.subr.bf16.mxu0 %v713
    %830 = vmatpush1.bf16.msra.mxu0 %v712
    %831 = vmatprep.subr.bf16.mxu0 0
    %832 = vmatpush2.bf16.msra.mxu0 0
    %833 = vmatprep.subr.bf16.mxu0 0
    %834 = vmatpush2.bf16.msra.mxu0 0
    %835 = vmatprep.subr.bf16.mxu0 0
    %836 = vmatpush2.bf16.msra.mxu0 0
    %837 = vmatprep.subr.bf16.mxu0 0
    %838 = vmatpush2.bf16.msra.mxu0 0
    %839 = vmatprep.subr.bf16.mxu0 0
    %840 = vmatpush2.bf16.msra.mxu0 0
    %841 = vmatprep.subr.bf16.mxu0 0
    %842 = vmatpush2.bf16.msra.mxu0 0
    %843 = vmatprep.subr.bf16.mxu0 0
    %844 = vmatpush2.bf16.msra.mxu0 0
    %845 = vmatprep.subr.bf16.mxu0 0
    %846 = vmatpush2.bf16.msra.mxu0 0
    %847 = vmatprep.mubr.bf16.mxu0 0
    %848 = vmatmul.mubr.bf16.gmra.mxu0 %v613
    %v849 = vpop.f32.mrf.mxu0
    %v850 = vadd.f32 0.0, %v849
    %v851 = vpop.f32.mrf.mxu0
    %v852 = vadd.f32 0.0, %v851
    %v853 = vpop.f32.mrf.mxu0
    %v854 = vpop.f32.mrf.mxu0
    %855 = vdwg.mxu0
    %v856 = vld [vmem:[#allocation2] sm:$0xff]
    %v857 = vld [vmem:[#allocation2 + $0x8] sm:$0xff]
    %v858 = vunpack.c.l.bf16 %v856
    %v859 = vunpack.c.h.bf16 %v856
    %v860 = vunpack.c.l.bf16 %v857
    %v861 = vunpack.c.h.bf16 %v857
    %v862 = vadd.f32 %v858, %v809
    %v863 = vadd.f32 %v859, %v811
    %v864 = vadd.f32 %v860, %v850
    %v865 = vadd.f32 %v861, %v852
    %v866 = vxor.u32 %v862, 2147483648
    %v867 = vmul.f32 %v866, 1.442695
    %v868 = vpow.pop %v867
    %v869 = vadd.f32 %v868, 1.0
    %v870 = vrcp.pop %v869
    %v871 = vmul.f32 1.0, %v870
    %v872 = vxor.u32 %v863, 2147483648
    %v873 = vmul.f32 %v872, 1.442695
    %v874 = vpow.pop %v873
    %v875 = vadd.f32 %v874, 1.0
    %v876 = vrcp.pop %v875
    %v877 = vmul.f32 1.0, %v876
    %v878 = vtanh.pop %v864
    %v879 = vxor.u32 %v865, 2147483648
    %v880 = vmul.f32 %v879, 1.442695
    %v881 = vpow.pop %v880
    %v882 = vadd.f32 %v881, 1.0
    %v883 = vrcp.pop %v882
    %v884 = vmul.f32 1.0, %v883
    %v885 = vld [vmem:[#allocation4] sm:$0xff]
    %v886 = vmul.f32 %v877, %v885
    %v887 = vmul.f32 %v871, %v878
    %v888 = vadd.f32 %v886, %v887
    %v889 = vtanh.pop %v888
    %v890 = vmul.f32 %v884, %v889
    %891 = vst [vmem:[#allocation4] sm:$0xff] %v888
    %892 = vst [vmem:[#allocation3] sm:$0xff] %v890
    %v893 = vpack.c.bf16 %v890, %v890
    %894 = vst [vmem:[#allocation5] sm:$0xf] %v893
    %v895 = vld [vmem:[#allocation3] sm:$0xff]
    %v896 = vpack.c.bf16 %v895, %v895
    %897 = vmatprep.subr.bf16.mxu0 %v739
    %898 = vmatpush1.bf16.msra.mxu0 %v738
    %899 = vmatprep.subr.bf16.mxu0 %v735
    %900 = vmatpush1.bf16.msra.mxu0 %v734
    %901 = vmatprep.subr.bf16.mxu0 %v731
    %902 = vmatpush1.bf16.msra.mxu0 %v730
    %903 = vmatprep.subr.bf16.mxu0 %v727
    %904 = vmatpush1.bf16.msra.mxu0 %v726
    %905 = vmatprep.subr.bf16.mxu0 %v723
    %906 = vmatpush1.bf16.msra.mxu0 %v722
    %907 = vmatprep.subr.bf16.mxu0 %v719
    %908 = vmatpush1.bf16.msra.mxu0 %v718
    %909 = vmatprep.subr.bf16.mxu0 %v715
    %910 = vmatpush1.bf16.msra.mxu0 %v714
    %911 = vmatprep.subr.bf16.mxu0 %v711
    %912 = vmatpush1.bf16.msra.mxu0 %v710
    %913 = vmatprep.subr.bf16.mxu0 0
    %914 = vmatpush2.bf16.msra.mxu0 0
    %915 = vmatprep.subr.bf16.mxu0 0
    %916 = vmatpush2.bf16.msra.mxu0 0
    %917 = vmatprep.subr.bf16.mxu0 0
    %918 = vmatpush2.bf16.msra.mxu0 0
    %919 = vmatprep.subr.bf16.mxu0 0
    %920 = vmatpush2.bf16.msra.mxu0 0
    %921 = vmatprep.subr.bf16.mxu0 0
    %922 = vmatpush2.bf16.msra.mxu0 0
    %923 = vmatprep.subr.bf16.mxu0 0
    %924 = vmatpush2.bf16.msra.mxu0 0
    %925 = vmatprep.subr.bf16.mxu0 0
    %926 = vmatpush2.bf16.msra.mxu0 0
    %927 = vmatprep.subr.bf16.mxu0 0
    %928 = vmatpush2.bf16.msra.mxu0 0
    %929 = vmatprep.mubr.bf16.mxu0 0
    %930 = vmatmul.mubr.bf16.gmra.mxu0 %v896
    %v931 = vpop.f32.mrf.mxu0
    %v932 = vadd.f32 0.0, %v931
    %v933 = vpop.f32.mrf.mxu0
    %v934 = vadd.f32 0.0, %v933
    %v935 = vpop.f32.mrf.mxu0
    %v936 = vpop.f32.mrf.mxu0
    %937 = vdwg.mxu0
    %938 = vmatprep.subr.bf16.mxu0 %v741
    %939 = vmatpush1.bf16.msra.mxu0 %v740
    %940 = vmatprep.subr.bf16.mxu0 %v737
    %941 = vmatpush1.bf16.msra.mxu0 %v736
    %942 = vmatprep.subr.bf16.mxu0 %v733
    %943 = vmatpush1.bf16.msra.mxu0 %v732
    %944 = vmatprep.subr.bf16.mxu0 %v729
    %945 = vmatpush1.bf16.msra.mxu0 %v728
    %946 = vmatprep.subr.bf16.mxu0 %v725
    %947 = vmatpush1.bf16.msra.mxu0 %v724
    %948 = vmatprep.subr.bf16.mxu0 %v721
    %949 = vmatpush1.bf16.msra.mxu0 %v720
    %950 = vmatprep.subr.bf16.mxu0 %v717
    %951 = vmatpush1.bf16.msra.mxu0 %v716
    %952 = vmatprep.subr.bf16.mxu0 %v713
    %953 = vmatpush1.bf16.msra.mxu0 %v712
    %954 = vmatprep.subr.bf16.mxu0 0
    %955 = vmatpush2.bf16.msra.mxu0 0
    %956 = vmatprep.subr.bf16.mxu0 0
    %957 = vmatpush2.bf16.msra.mxu0 0
    %958 = vmatprep.subr.bf16.mxu0 0
    %959 = vmatpush2.bf16.msra.mxu0 0
    %960 = vmatprep.subr.bf16.mxu0 0
    %961 = vmatpush2.bf16.msra.mxu0 0
    %962 = vmatprep.subr.bf16.mxu0 0
    %963 = vmatpush2.bf16.msra.mxu0 0
    %964 = vmatprep.subr.bf16.mxu0 0
    %965 = vmatpush2.bf16.msra.mxu0 0
    %966 = vmatprep.subr.bf16.mxu0 0
    %967 = vmatpush2.bf16.msra.mxu0 0
    %968 = vmatprep.subr.bf16.mxu0 0
    %969 = vmatpush2.bf16.msra.mxu0 0
    %970 = vmatprep.mubr.bf16.mxu0 0
    %971 = vmatmul.mubr.bf16.gmra.mxu0 %v896
    %v972 = vpop.f32.mrf.mxu0
    %v973 = vadd.f32 0.0, %v972
    %v974 = vpop.f32.mrf.mxu0
    %v975 = vadd.f32 0.0, %v974
    %v976 = vpop.f32.mrf.mxu0
    %v977 = vpop.f32.mrf.mxu0
    %978 = vdwg.mxu0
    %s979 = scalar_lea.vmem [#allocation2], 16
    %v980 = vld [vmem:[%s979] sm:$0xff]
    %v981 = vld [vmem:[%s979 + $0x8] sm:$0xff]
    %v982 = vunpack.c.l.bf16 %v980
    %v983 = vunpack.c.h.bf16 %v980
    %v984 = vunpack.c.l.bf16 %v981
    %v985 = vunpack.c.h.bf16 %v981
    %v986 = vadd.f32 %v982, %v932
    %v987 = vadd.f32 %v983, %v934
    %v988 = vadd.f32 %v984, %v973
    %v989 = vadd.f32 %v985, %v975
    %v990 = vxor.u32 %v986, 2147483648
    %v991 = vmul.f32 %v990, 1.442695
    %v992 = vpow.pop %v991
    %v993 = vadd.f32 %v992, 1.0
    %v994 = vrcp.pop %v993
    %v995 = vmul.f32 1.0, %v994
    %v996 = vxor.u32 %v987, 2147483648
    %v997 = vmul.f32 %v996, 1.442695
    %v998 = vpow.pop %v997
    %v999 = vadd.f32 %v998, 1.0
    %v1000 = vrcp.pop %v999
    %v1001 = vmul.f32 1.0, %v1000
    %v1002 = vtanh.pop %v988
    %v1003 = vxor.u32 %v989, 2147483648
    %v1004 = vmul.f32 %v1003, 1.442695
    %v1005 = vpow.pop %v1004
    %v1006 = vadd.f32 %v1005, 1.0
    %v1007 = vrcp.pop %v1006
    %v1008 = vmul.f32 1.0, %v1007
    %v1009 = vld [vmem:[#allocation4] sm:$0xff]
    %v1010 = vmul.f32 %v1001, %v1009
    %v1011 = vmul.f32 %v995, %v1002
    %v1012 = vadd.f32 %v1010, %v1011
    %v1013 = vtanh.pop %v1012
    %v1014 = vmul.f32 %v1008, %v1013
    %1015 = vst [vmem:[#allocation4] sm:$0xff] %v1012
    %1016 = vst [vmem:[#allocation3] sm:$0xff] %v1014
    %v1017 = vpack.c.bf16 %v1014, %v1014
    %s1018 = scalar_lea.vmem [#allocation5], 4
    %1019 = vst [vmem:[%s1018] sm:$0xf] %v1017
    %v1020 = vld [vmem:[#allocation3] sm:$0xff]
    %v1021 = vpack.c.bf16 %v1020, %v1020
    %1022 = vmatprep.subr.bf16.mxu0 %v739
    %1023 = vmatpush1.bf16.msra.mxu0 %v738
    %1024 = vmatprep.subr.bf16.mxu0 %v735
    %1025 = vmatpush1.bf16.msra.mxu0 %v734
    %1026 = vmatprep.subr.bf16.mxu0 %v731
    %1027 = vmatpush1.bf16.msra.mxu0 %v730
    %1028 = vmatprep.subr.bf16.mxu0 %v727
    %1029 = vmatpush1.bf16.msra.mxu0 %v726
    %1030 = vmatprep.subr.bf16.mxu0 %v723
    %1031 = vmatpush1.bf16.msra.mxu0 %v722
    %1032 = vmatprep.subr.bf16.mxu0 %v719
    %1033 = vmatpush1.bf16.msra.mxu0 %v718
    %1034 = vmatprep.subr.bf16.mxu0 %v715
    %1035 = vmatpush1.bf16.msra.mxu0 %v714
    %1036 = vmatprep.subr.bf16.mxu0 %v711
    %1037 = vmatpush1.bf16.msra.mxu0 %v710
    %1038 = vmatprep.subr.bf16.mxu0 0
    %1039 = vmatpush2.bf16.msra.mxu0 0
    %1040 = vmatprep.subr.bf16.mxu0 0
    %1041 = vmatpush2.bf16.msra.mxu0 0
    %1042 = vmatprep.subr.bf16.mxu0 0
    %1043 = vmatpush2.bf16.msra.mxu0 0
    %1044 = vmatprep.subr.bf16.mxu0 0
    %1045 = vmatpush2.bf16.msra.mxu0 0
    %1046 = vmatprep.subr.bf16.mxu0 0
    %1047 = vmatpush2.bf16.msra.mxu0 0
    %1048 = vmatprep.subr.bf16.mxu0 0
    %1049 = vmatpush2.bf16.msra.mxu0 0
    %1050 = vmatprep.subr.bf16.mxu0 0
    %1051 = vmatpush2.bf16.msra.mxu0 0
    %1052 = vmatprep.subr.bf16.mxu0 0
    %1053 = vmatpush2.bf16.msra.mxu0 0
    %1054 = vmatprep.mubr.bf16.mxu0 0
    %1055 = vmatmul.mubr.bf16.gmra.mxu0 %v1021
    %v1056 = vpop.f32.mrf.mxu0
    %v1057 = vadd.f32 0.0, %v1056
    %v1058 = vpop.f32.mrf.mxu0
    %v1059 = vadd.f32 0.0, %v1058
    %v1060 = vpop.f32.mrf.mxu0
    %v1061 = vpop.f32.mrf.mxu0
    %1062 = vdwg.mxu0
    %1063 = vmatprep.subr.bf16.mxu0 %v741
    %1064 = vmatpush1.bf16.msra.mxu0 %v740
    %1065 = vmatprep.subr.bf16.mxu0 %v737
    %1066 = vmatpush1.bf16.msra.mxu0 %v736
    %1067 = vmatprep.subr.bf16.mxu0 %v733
    %1068 = vmatpush1.bf16.msra.mxu0 %v732
    %1069 = vmatprep.subr.bf16.mxu0 %v729
    %1070 = vmatpush1.bf16.msra.mxu0 %v728
    %1071 = vmatprep.subr.bf16.mxu0 %v725
    %1072 = vmatpush1.bf16.msra.mxu0 %v724
    %1073 = vmatprep.subr.bf16.mxu0 %v721
    %1074 = vmatpush1.bf16.msra.mxu0 %v720
    %1075 = vmatprep.subr.bf16.mxu0 %v717
    %1076 = vmatpush1.bf16.msra.mxu0 %v716
    %1077 = vmatprep.subr.bf16.mxu0 %v713
    %1078 = vmatpush1.bf16.msra.mxu0 %v712
    %1079 = vmatprep.subr.bf16.mxu0 0
    %1080 = vmatpush2.bf16.msra.mxu0 0
    %1081 = vmatprep.subr.bf16.mxu0 0
    %1082 = vmatpush2.bf16.msra.mxu0 0
    %1083 = vmatprep.subr.bf16.mxu0 0
    %1084 = vmatpush2.bf16.msra.mxu0 0
    %1085 = vmatprep.subr.bf16.mxu0 0
    %1086 = vmatpush2.bf16.msra.mxu0 0
    %1087 = vmatprep.subr.bf16.mxu0 0
    %1088 = vmatpush2.bf16.msra.mxu0 0
    %1089 = vmatprep.subr.bf16.mxu0 0
    %1090 = vmatpush2.bf16.msra.mxu0 0
    %1091 = vmatprep.subr.bf16.mxu0 0
    %1092 = vmatpush2.bf16.msra.mxu0 0
    %1093 = vmatprep.subr.bf16.mxu0 0
    %1094 = vmatpush2.bf16.msra.mxu0 0
    %1095 = vmatprep.mubr.bf16.mxu0 0
    %1096 = vmatmul.mubr.bf16.gmra.mxu0 %v1021
    %v1097 = vpop.f32.mrf.mxu0
    %v1098 = vadd.f32 0.0, %v1097
    %v1099 = vpop.f32.mrf.mxu0
    %v1100 = vadd.f32 0.0, %v1099
    %v1101 = vpop.f32.mrf.mxu0
    %v1102 = vpop.f32.mrf.mxu0
    %1103 = vdwg.mxu0
    %s1104 = scalar_lea.vmem [#allocation2], 32
    %v1105 = vld [vmem:[%s1104] sm:$0xff]
    %v1106 = vld [vmem:[%s1104 + $0x8] sm:$0xff]
    %v1107 = vunpack.c.l.bf16 %v1105
    %v1108 = vunpack.c.h.bf16 %v1105
    %v1109 = vunpack.c.l.bf16 %v1106
    %v1110 = vunpack.c.h.bf16 %v1106
    %v1111 = vadd.f32 %v1107, %v1057
    %v1112 = vadd.f32 %v1108, %v1059
    %v1113 = vadd.f32 %v1109, %v1098
    %v1114 = vadd.f32 %v1110, %v1100
    %v1115 = vxor.u32 %v1111, 2147483648
    %v1116 = vmul.f32 %v1115, 1.442695
    %v1117 = vpow.pop %v1116
    %v1118 = vadd.f32 %v1117, 1.0
    %v1119 = vrcp.pop %v1118
    %v1120 = vmul.f32 1.0, %v1119
    %v1121 = vxor.u32 %v1112, 2147483648
    %v1122 = vmul.f32 %v1121, 1.442695
    %v1123 = vpow.pop %v1122
    %v1124 = vadd.f32 %v1123, 1.0
    %v1125 = vrcp.pop %v1124
    %v1126 = vmul.f32 1.0, %v1125
    %v1127 = vtanh.pop %v1113
    %v1128 = vxor.u32 %v1114, 2147483648
    %v1129 = vmul.f32 %v1128, 1.442695
    %v1130 = vpow.pop %v1129
    %v1131 = vadd.f32 %v1130, 1.0
    %v1132 = vrcp.pop %v1131
    %v1133 = vmul.f32 1.0, %v1132
    %v1134 = vld [vmem:[#allocation4] sm:$0xff]
    %v1135 = vmul.f32 %v1126, %v1134
    %v1136 = vmul.f32 %v1120, %v1127
    %v1137 = vadd.f32 %v1135, %v1136
    %v1138 = vtanh.pop %v1137
    %v1139 = vmul.f32 %v1133, %v1138
    %1140 = vst [vmem:[#allocation4] sm:$0xff] %v1137
    %1141 = vst [vmem:[#allocation3] sm:$0xff] %v1139
    %v1142 = vpack.c.bf16 %v1139, %v1139
    %s1143 = scalar_lea.vmem [#allocation5], 8
    %1144 = vst [vmem:[%s1143] sm:$0xf] %v1142
    %v1145 = vld [vmem:[#allocation3] sm:$0xff]
    %v1146 = vpack.c.bf16 %v1145, %v1145
    %1147 = vmatprep.subr.bf16.mxu0 %v739
    %1148 = vmatpush1.bf16.msra.mxu0 %v738
    %1149 = vmatprep.subr.bf16.mxu0 %v735
    %1150 = vmatpush1.bf16.msra.mxu0 %v734
    %1151 = vmatprep.subr.bf16.mxu0 %v731
    %1152 = vmatpush1.bf16.msra.mxu0 %v730
    %1153 = vmatprep.subr.bf16.mxu0 %v727
    %1154 = vmatpush1.bf16.msra.mxu0 %v726
    %1155 = vmatprep.subr.bf16.mxu0 %v723
    %1156 = vmatpush1.bf16.msra.mxu0 %v722
    %1157 = vmatprep.subr.bf16.mxu0 %v719
    %1158 = vmatpush1.bf16.msra.mxu0 %v718
    %1159 = vmatprep.subr.bf16.mxu0 %v715
    %1160 = vmatpush1.bf16.msra.mxu0 %v714
    %1161 = vmatprep.subr.bf16.mxu0 %v711
    %1162 = vmatpush1.bf16.msra.mxu0 %v710
    %1163 = vmatprep.subr.bf16.mxu0 0
    %1164 = vmatpush2.bf16.msra.mxu0 0
    %1165 = vmatprep.subr.bf16.mxu0 0
    %1166 = vmatpush2.bf16.msra.mxu0 0
    %1167 = vmatprep.subr.bf16.mxu0 0
    %1168 = vmatpush2.bf16.msra.mxu0 0
    %1169 = vmatprep.subr.bf16.mxu0 0
    %1170 = vmatpush2.bf16.msra.mxu0 0
    %1171 = vmatprep.subr.bf16.mxu0 0
    %1172 = vmatpush2.bf16.msra.mxu0 0
    %1173 = vmatprep.subr.bf16.mxu0 0
    %1174 = vmatpush2.bf16.msra.mxu0 0
    %1175 = vmatprep.subr.bf16.mxu0 0
    %1176 = vmatpush2.bf16.msra.mxu0 0
    %1177 = vmatprep.subr.bf16.mxu0 0
    %1178 = vmatpush2.bf16.msra.mxu0 0
    %1179 = vmatprep.mubr.bf16.mxu0 0
    %1180 = vmatmul.mubr.bf16.gmra.mxu0 %v1146
    %v1181 = vpop.f32.mrf.mxu0
    %v1182 = vadd.f32 0.0, %v1181
    %v1183 = vpop.f32.mrf.mxu0
    %v1184 = vadd.f32 0.0, %v1183
    %v1185 = vpop.f32.mrf.mxu0
    %v1186 = vpop.f32.mrf.mxu0
    %1187 = vdwg.mxu0
    %1188 = vmatprep.subr.bf16.mxu0 %v741
    %1189 = vmatpush1.bf16.msra.mxu0 %v740
    %1190 = vmatprep.subr.bf16.mxu0 %v737
    %1191 = vmatpush1.bf16.msra.mxu0 %v736
    %1192 = vmatprep.subr.bf16.mxu0 %v733
    %1193 = vmatpush1.bf16.msra.mxu0 %v732
    %1194 = vmatprep.subr.bf16.mxu0 %v729
    %1195 = vmatpush1.bf16.msra.mxu0 %v728
    %1196 = vmatprep.subr.bf16.mxu0 %v725
    %1197 = vmatpush1.bf16.msra.mxu0 %v724
    %1198 = vmatprep.subr.bf16.mxu0 %v721
    %1199 = vmatpush1.bf16.msra.mxu0 %v720
    %1200 = vmatprep.subr.bf16.mxu0 %v717
    %1201 = vmatpush1.bf16.msra.mxu0 %v716
    %1202 = vmatprep.subr.bf16.mxu0 %v713
    %1203 = vmatpush1.bf16.msra.mxu0 %v712
    %1204 = vmatprep.subr.bf16.mxu0 0
    %1205 = vmatpush2.bf16.msra.mxu0 0
    %1206 = vmatprep.subr.bf16.mxu0 0
    %1207 = vmatpush2.bf16.msra.mxu0 0
    %1208 = vmatprep.subr.bf16.mxu0 0
    %1209 = vmatpush2.bf16.msra.mxu0 0
    %1210 = vmatprep.subr.bf16.mxu0 0
    %1211 = vmatpush2.bf16.msra.mxu0 0
    %1212 = vmatprep.subr.bf16.mxu0 0
    %1213 = vmatpush2.bf16.msra.mxu0 0
    %1214 = vmatprep.subr.bf16.mxu0 0
    %1215 = vmatpush2.bf16.msra.mxu0 0
    %1216 = vmatprep.subr.bf16.mxu0 0
    %1217 = vmatpush2.bf16.msra.mxu0 0
    %1218 = vmatprep.subr.bf16.mxu0 0
    %1219 = vmatpush2.bf16.msra.mxu0 0
    %1220 = vmatprep.mubr.bf16.mxu0 0
    %1221 = vmatmul.mubr.bf16.gmra.mxu0 %v1146
    %v1222 = vpop.f32.mrf.mxu0
    %v1223 = vadd.f32 0.0, %v1222
    %v1224 = vpop.f32.mrf.mxu0
    %v1225 = vadd.f32 0.0, %v1224
    %v1226 = vpop.f32.mrf.mxu0
    %v1227 = vpop.f32.mrf.mxu0
    %1228 = vdwg.mxu0
    %s1229 = scalar_lea.vmem [#allocation2], 48
    %v1230 = vld [vmem:[%s1229] sm:$0xff]
    %v1231 = vld [vmem:[%s1229 + $0x8] sm:$0xff]
    %v1232 = vunpack.c.l.bf16 %v1230
    %v1233 = vunpack.c.h.bf16 %v1230
    %v1234 = vunpack.c.l.bf16 %v1231
    %v1235 = vunpack.c.h.bf16 %v1231
    %v1236 = vadd.f32 %v1232, %v1182
    %v1237 = vadd.f32 %v1233, %v1184
    %v1238 = vadd.f32 %v1234, %v1223
    %v1239 = vadd.f32 %v1235, %v1225
    %v1240 = vxor.u32 %v1236, 2147483648
    %v1241 = vmul.f32 %v1240, 1.442695
    %v1242 = vpow.pop %v1241
    %v1243 = vadd.f32 %v1242, 1.0
    %v1244 = vrcp.pop %v1243
    %v1245 = vmul.f32 1.0, %v1244
    %v1246 = vxor.u32 %v1237, 2147483648
    %v1247 = vmul.f32 %v1246, 1.442695
    %v1248 = vpow.pop %v1247
    %v1249 = vadd.f32 %v1248, 1.0
    %v1250 = vrcp.pop %v1249
    %v1251 = vmul.f32 1.0, %v1250
    %v1252 = vtanh.pop %v1238
    %v1253 = vxor.u32 %v1239, 2147483648
    %v1254 = vmul.f32 %v1253, 1.442695
    %v1255 = vpow.pop %v1254
    %v1256 = vadd.f32 %v1255, 1.0
    %v1257 = vrcp.pop %v1256
    %v1258 = vmul.f32 1.0, %v1257
    %v1259 = vld [vmem:[#allocation4] sm:$0xff]
    %v1260 = vmul.f32 %v1251, %v1259
    %v1261 = vmul.f32 %v1245, %v1252
    %v1262 = vadd.f32 %v1260, %v1261
    %v1263 = vtanh.pop %v1262
    %v1264 = vmul.f32 %v1258, %v1263
    %1265 = vst [vmem:[#allocation4] sm:$0xff] %v1262
    %1266 = vst [vmem:[#allocation3] sm:$0xff] %v1264
    %v1267 = vpack.c.bf16 %v1264, %v1264
    %s1268 = scalar_lea.vmem [#allocation5], 12
    %1269 = vst [vmem:[%s1268] sm:$0xf] %v1267
    %v1270 = vld [vmem:[#allocation3] sm:$0xff]
    %v1271 = vpack.c.bf16 %v1270, %v1270
    %1272 = vmatprep.subr.bf16.mxu0 %v739
    %1273 = vmatpush1.bf16.msra.mxu0 %v738
    %1274 = vmatprep.subr.bf16.mxu0 %v735
    %1275 = vmatpush1.bf16.msra.mxu0 %v734
    %1276 = vmatprep.subr.bf16.mxu0 %v731
    %1277 = vmatpush1.bf16.msra.mxu0 %v730
    %1278 = vmatprep.subr.bf16.mxu0 %v727
    %1279 = vmatpush1.bf16.msra.mxu0 %v726
    %1280 = vmatprep.subr.bf16.mxu0 %v723
    %1281 = vmatpush1.bf16.msra.mxu0 %v722
    %1282 = vmatprep.subr.bf16.mxu0 %v719
    %1283 = vmatpush1.bf16.msra.mxu0 %v718
    %1284 = vmatprep.subr.bf16.mxu0 %v715
    %1285 = vmatpush1.bf16.msra.mxu0 %v714
    %1286 = vmatprep.subr.bf16.mxu0 %v711
    %1287 = vmatpush1.bf16.msra.mxu0 %v710
    %1288 = vmatprep.subr.bf16.mxu0 0
    %1289 = vmatpush2.bf16.msra.mxu0 0
    %1290 = vmatprep.subr.bf16.mxu0 0
    %1291 = vmatpush2.bf16.msra.mxu0 0
    %1292 = vmatprep.subr.bf16.mxu0 0
    %1293 = vmatpush2.bf16.msra.mxu0 0
    %1294 = vmatprep.subr.bf16.mxu0 0
    %1295 = vmatpush2.bf16.msra.mxu0 0
    %1296 = vmatprep.subr.bf16.mxu0 0
    %1297 = vmatpush2.bf16.msra.mxu0 0
    %1298 = vmatprep.subr.bf16.mxu0 0
    %1299 = vmatpush2.bf16.msra.mxu0 0
    %1300 = vmatprep.subr.bf16.mxu0 0
    %1301 = vmatpush2.bf16.msra.mxu0 0
    %1302 = vmatprep.subr.bf16.mxu0 0
    %1303 = vmatpush2.bf16.msra.mxu0 0
    %1304 = vmatprep.mubr.bf16.mxu0 0
    %1305 = vmatmul.mubr.bf16.gmra.mxu0 %v1271
    %v1306 = vpop.f32.mrf.mxu0
    %v1307 = vadd.f32 0.0, %v1306
    %v1308 = vpop.f32.mrf.mxu0
    %v1309 = vadd.f32 0.0, %v1308
    %v1310 = vpop.f32.mrf.mxu0
    %v1311 = vpop.f32.mrf.mxu0
    %1312 = vdwg.mxu0
    %1313 = vmatprep.subr.bf16.mxu0 %v741
    %1314 = vmatpush1.bf16.msra.mxu0 %v740
    %1315 = vmatprep.subr.bf16.mxu0 %v737
    %1316 = vmatpush1.bf16.msra.mxu0 %v736
    %1317 = vmatprep.subr.bf16.mxu0 %v733
    %1318 = vmatpush1.bf16.msra.mxu0 %v732
    %1319 = vmatprep.subr.bf16.mxu0 %v729
    %1320 = vmatpush1.bf16.msra.mxu0 %v728
    %1321 = vmatprep.subr.bf16.mxu0 %v725
    %1322 = vmatpush1.bf16.msra.mxu0 %v724
    %1323 = vmatprep.subr.bf16.mxu0 %v721
    %1324 = vmatpush1.bf16.msra.mxu0 %v720
    %1325 = vmatprep.subr.bf16.mxu0 %v717
    %1326 = vmatpush1.bf16.msra.mxu0 %v716
    %1327 = vmatprep.subr.bf16.mxu0 %v713
    %1328 = vmatpush1.bf16.msra.mxu0 %v712
    %1329 = vmatprep.subr.bf16.mxu0 0
    %1330 = vmatpush2.bf16.msra.mxu0 0
    %1331 = vmatprep.subr.bf16.mxu0 0
    %1332 = vmatpush2.bf16.msra.mxu0 0
    %1333 = vmatprep.subr.bf16.mxu0 0
    %1334 = vmatpush2.bf16.msra.mxu0 0
    %1335 = vmatprep.subr.bf16.mxu0 0
    %1336 = vmatpush2.bf16.msra.mxu0 0
    %1337 = vmatprep.subr.bf16.mxu0 0
    %1338 = vmatpush2.bf16.msra.mxu0 0
    %1339 = vmatprep.subr.bf16.mxu0 0
    %1340 = vmatpush2.bf16.msra.mxu0 0
    %1341 = vmatprep.subr.bf16.mxu0 0
    %1342 = vmatpush2.bf16.msra.mxu0 0
    %1343 = vmatprep.subr.bf16.mxu0 0
    %1344 = vmatpush2.bf16.msra.mxu0 0
    %1345 = vmatprep.mubr.bf16.mxu0 0
    %1346 = vmatmul.mubr.bf16.gmra.mxu0 %v1271
    %v1347 = vpop.f32.mrf.mxu0
    %v1348 = vadd.f32 0.0, %v1347
    %v1349 = vpop.f32.mrf.mxu0
    %v1350 = vadd.f32 0.0, %v1349
    %v1351 = vpop.f32.mrf.mxu0
    %v1352 = vpop.f32.mrf.mxu0
    %1353 = vdwg.mxu0
    %s1354 = scalar_lea.vmem [#allocation2], 64
    %v1355 = vld [vmem:[%s1354] sm:$0xff]
    %v1356 = vld [vmem:[%s1354 + $0x8] sm:$0xff]
    %v1357 = vunpack.c.l.bf16 %v1355
    %v1358 = vunpack.c.h.bf16 %v1355
    %v1359 = vunpack.c.l.bf16 %v1356
    %v1360 = vunpack.c.h.bf16 %v1356
    %v1361 = vadd.f32 %v1357, %v1307
    %v1362 = vadd.f32 %v1358, %v1309
    %v1363 = vadd.f32 %v1359, %v1348
    %v1364 = vadd.f32 %v1360, %v1350
    %v1365 = vxor.u32 %v1361, 2147483648
    %v1366 = vmul.f32 %v1365, 1.442695
    %v1367 = vpow.pop %v1366
    %v1368 = vadd.f32 %v1367, 1.0
    %v1369 = vrcp.pop %v1368
    %v1370 = vmul.f32 1.0, %v1369
    %v1371 = vxor.u32 %v1362, 2147483648
    %v1372 = vmul.f32 %v1371, 1.442695
    %v1373 = vpow.pop %v1372
    %v1374 = vadd.f32 %v1373, 1.0
    %v1375 = vrcp.pop %v1374
    %v1376 = vmul.f32 1.0, %v1375
    %v1377 = vtanh.pop %v1363
    %v1378 = vxor.u32 %v1364, 2147483648
    %v1379 = vmul.f32 %v1378, 1.442695
    %v1380 = vpow.pop %v1379
    %v1381 = vadd.f32 %v1380, 1.0
    %v1382 = vrcp.pop %v1381
    %v1383 = vmul.f32 1.0, %v1382
    %v1384 = vld [vmem:[#allocation4] sm:$0xff]
    %v1385 = vmul.f32 %v1376, %v1384
    %v1386 = vmul.f32 %v1370, %v1377
    %v1387 = vadd.f32 %v1385, %v1386
    %v1388 = vtanh.pop %v1387
    %v1389 = vmul.f32 %v1383, %v1388
    %1390 = vst [vmem:[#allocation4] sm:$0xff] %v1387
    %1391 = vst [vmem:[#allocation3] sm:$0xff] %v1389
    %v1392 = vpack.c.bf16 %v1389, %v1389
    %s1393 = scalar_lea.vmem [#allocation5], 16
    %1394 = vst [vmem:[%s1393] sm:$0xf] %v1392
    %v1395 = vld [vmem:[#allocation3] sm:$0xff]
    %v1396 = vpack.c.bf16 %v1395, %v1395
    %1397 = vmatprep.subr.bf16.mxu0 %v739
    %1398 = vmatpush1.bf16.msra.mxu0 %v738
    %1399 = vmatprep.subr.bf16.mxu0 %v735
    %1400 = vmatpush1.bf16.msra.mxu0 %v734
    %1401 = vmatprep.subr.bf16.mxu0 %v731
    %1402 = vmatpush1.bf16.msra.mxu0 %v730
    %1403 = vmatprep.subr.bf16.mxu0 %v727
    %1404 = vmatpush1.bf16.msra.mxu0 %v726
    %1405 = vmatprep.subr.bf16.mxu0 %v723
    %1406 = vmatpush1.bf16.msra.mxu0 %v722
    %1407 = vmatprep.subr.bf16.mxu0 %v719
    %1408 = vmatpush1.bf16.msra.mxu0 %v718
    %1409 = vmatprep.subr.bf16.mxu0 %v715
    %1410 = vmatpush1.bf16.msra.mxu0 %v714
    %1411 = vmatprep.subr.bf16.mxu0 %v711
    %1412 = vmatpush1.bf16.msra.mxu0 %v710
    %1413 = vmatprep.subr.bf16.mxu0 0
    %1414 = vmatpush2.bf16.msra.mxu0 0
    %1415 = vmatprep.subr.bf16.mxu0 0
    %1416 = vmatpush2.bf16.msra.mxu0 0
    %1417 = vmatprep.subr.bf16.mxu0 0
    %1418 = vmatpush2.bf16.msra.mxu0 0
    %1419 = vmatprep.subr.bf16.mxu0 0
    %1420 = vmatpush2.bf16.msra.mxu0 0
    %1421 = vmatprep.subr.bf16.mxu0 0
    %1422 = vmatpush2.bf16.msra.mxu0 0
    %1423 = vmatprep.subr.bf16.mxu0 0
    %1424 = vmatpush2.bf16.msra.mxu0 0
    %1425 = vmatprep.subr.bf16.mxu0 0
    %1426 = vmatpush2.bf16.msra.mxu0 0
    %1427 = vmatprep.subr.bf16.mxu0 0
    %1428 = vmatpush2.bf16.msra.mxu0 0
    %1429 = vmatprep.mubr.bf16.mxu0 0
    %1430 = vmatmul.mubr.bf16.gmra.mxu0 %v1396
    %v1431 = vpop.f32.mrf.mxu0
    %v1432 = vadd.f32 0.0, %v1431
    %v1433 = vpop.f32.mrf.mxu0
    %v1434 = vadd.f32 0.0, %v1433
    %v1435 = vpop.f32.mrf.mxu0
    %v1436 = vpop.f32.mrf.mxu0
    %1437 = vdwg.mxu0
    %1438 = vmatprep.subr.bf16.mxu0 %v741
    %1439 = vmatpush1.bf16.msra.mxu0 %v740
    %1440 = vmatprep.subr.bf16.mxu0 %v737
    %1441 = vmatpush1.bf16.msra.mxu0 %v736
    %1442 = vmatprep.subr.bf16.mxu0 %v733
    %1443 = vmatpush1.bf16.msra.mxu0 %v732
    %1444 = vmatprep.subr.bf16.mxu0 %v729
    %1445 = vmatpush1.bf16.msra.mxu0 %v728
    %1446 = vmatprep.subr.bf16.mxu0 %v725
    %1447 = vmatpush1.bf16.msra.mxu0 %v724
    %1448 = vmatprep.subr.bf16.mxu0 %v721
    %1449 = vmatpush1.bf16.msra.mxu0 %v720
    %1450 = vmatprep.subr.bf16.mxu0 %v717
    %1451 = vmatpush1.bf16.msra.mxu0 %v716
    %1452 = vmatprep.subr.bf16.mxu0 %v713
    %1453 = vmatpush1.bf16.msra.mxu0 %v712
    %1454 = vmatprep.subr.bf16.mxu0 0
    %1455 = vmatpush2.bf16.msra.mxu0 0
    %1456 = vmatprep.subr.bf16.mxu0 0
    %1457 = vmatpush2.bf16.msra.mxu0 0
    %1458 = vmatprep.subr.bf16.mxu0 0
    %1459 = vmatpush2.bf16.msra.mxu0 0
    %1460 = vmatprep.subr.bf16.mxu0 0
    %1461 = vmatpush2.bf16.msra.mxu0 0
    %1462 = vmatprep.subr.bf16.mxu0 0
    %1463 = vmatpush2.bf16.msra.mxu0 0
    %1464 = vmatprep.subr.bf16.mxu0 0
    %1465 = vmatpush2.bf16.msra.mxu0 0
    %1466 = vmatprep.subr.bf16.mxu0 0
    %1467 = vmatpush2.bf16.msra.mxu0 0
    %1468 = vmatprep.subr.bf16.mxu0 0
    %1469 = vmatpush2.bf16.msra.mxu0 0
    %1470 = vmatprep.mubr.bf16.mxu0 0
    %1471 = vmatmul.mubr.bf16.gmra.mxu0 %v1396
    %v1472 = vpop.f32.mrf.mxu0
    %v1473 = vadd.f32 0.0, %v1472
    %v1474 = vpop.f32.mrf.mxu0
    %v1475 = vadd.f32 0.0, %v1474
    %v1476 = vpop.f32.mrf.mxu0
    %v1477 = vpop.f32.mrf.mxu0
    %1478 = vdwg.mxu0
    %s1479 = scalar_lea.vmem [#allocation2], 80
    %v1480 = vld [vmem:[%s1479] sm:$0xff]
    %v1481 = vld [vmem:[%s1479 + $0x8] sm:$0xff]
    %v1482 = vunpack.c.l.bf16 %v1480
    %v1483 = vunpack.c.h.bf16 %v1480
    %v1484 = vunpack.c.l.bf16 %v1481
    %v1485 = vunpack.c.h.bf16 %v1481
    %v1486 = vadd.f32 %v1482, %v1432
    %v1487 = vadd.f32 %v1483, %v1434
    %v1488 = vadd.f32 %v1484, %v1473
    %v1489 = vadd.f32 %v1485, %v1475
    %v1490 = vxor.u32 %v1486, 2147483648
    %v1491 = vmul.f32 %v1490, 1.442695
    %v1492 = vpow.pop %v1491
    %v1493 = vadd.f32 %v1492, 1.0
    %v1494 = vrcp.pop %v1493
    %v1495 = vmul.f32 1.0, %v1494
    %v1496 = vxor.u32 %v1487, 2147483648
    %v1497 = vmul.f32 %v1496, 1.442695
    %v1498 = vpow.pop %v1497
    %v1499 = vadd.f32 %v1498, 1.0
    %v1500 = vrcp.pop %v1499
    %v1501 = vmul.f32 1.0, %v1500
    %v1502 = vtanh.pop %v1488
    %v1503 = vxor.u32 %v1489, 2147483648
    %v1504 = vmul.f32 %v1503, 1.442695
    %v1505 = vpow.pop %v1504
    %v1506 = vadd.f32 %v1505, 1.0
    %v1507 = vrcp.pop %v1506
    %v1508 = vmul.f32 1.0, %v1507
    %v1509 = vld [vmem:[#allocation4] sm:$0xff]
    %v1510 = vmul.f32 %v1501, %v1509
    %v1511 = vmul.f32 %v1495, %v1502
    %v1512 = vadd.f32 %v1510, %v1511
    %v1513 = vtanh.pop %v1512
    %v1514 = vmul.f32 %v1508, %v1513
    %1515 = vst [vmem:[#allocation4] sm:$0xff] %v1512
    %1516 = vst [vmem:[#allocation3] sm:$0xff] %v1514
    %v1517 = vpack.c.bf16 %v1514, %v1514
    %s1518 = scalar_lea.vmem [#allocation5], 20
    %1519 = vst [vmem:[%s1518] sm:$0xf] %v1517
    %v1520 = vld [vmem:[#allocation3] sm:$0xff]
    %v1521 = vpack.c.bf16 %v1520, %v1520
    %1522 = vmatprep.subr.bf16.mxu0 %v739
    %1523 = vmatpush1.bf16.msra.mxu0 %v738
    %1524 = vmatprep.subr.bf16.mxu0 %v735
    %1525 = vmatpush1.bf16.msra.mxu0 %v734
    %1526 = vmatprep.subr.bf16.mxu0 %v731
    %1527 = vmatpush1.bf16.msra.mxu0 %v730
    %1528 = vmatprep.subr.bf16.mxu0 %v727
    %1529 = vmatpush1.bf16.msra.mxu0 %v726
    %1530 = vmatprep.subr.bf16.mxu0 %v723
    %1531 = vmatpush1.bf16.msra.mxu0 %v722
    %1532 = vmatprep.subr.bf16.mxu0 %v719
    %1533 = vmatpush1.bf16.msra.mxu0 %v718
    %1534 = vmatprep.subr.bf16.mxu0 %v715
    %1535 = vmatpush1.bf16.msra.mxu0 %v714
    %1536 = vmatprep.subr.bf16.mxu0 %v711
    %1537 = vmatpush1.bf16.msra.mxu0 %v710
    %1538 = vmatprep.subr.bf16.mxu0 0
    %1539 = vmatpush2.bf16.msra.mxu0 0
    %1540 = vmatprep.subr.bf16.mxu0 0
    %1541 = vmatpush2.bf16.msra.mxu0 0
    %1542 = vmatprep.subr.bf16.mxu0 0
    %1543 = vmatpush2.bf16.msra.mxu0 0
    %1544 = vmatprep.subr.bf16.mxu0 0
    %1545 = vmatpush2.bf16.msra.mxu0 0
    %1546 = vmatprep.subr.bf16.mxu0 0
    %1547 = vmatpush2.bf16.msra.mxu0 0
    %1548 = vmatprep.subr.bf16.mxu0 0
    %1549 = vmatpush2.bf16.msra.mxu0 0
    %1550 = vmatprep.subr.bf16.mxu0 0
    %1551 = vmatpush2.bf16.msra.mxu0 0
    %1552 = vmatprep.subr.bf16.mxu0 0
    %1553 = vmatpush2.bf16.msra.mxu0 0
    %1554 = vmatprep.mubr.bf16.mxu0 0
    %1555 = vmatmul.mubr.bf16.gmra.mxu0 %v1521
    %v1556 = vpop.f32.mrf.mxu0
    %v1557 = vadd.f32 0.0, %v1556
    %v1558 = vpop.f32.mrf.mxu0
    %v1559 = vadd.f32 0.0, %v1558
    %v1560 = vpop.f32.mrf.mxu0
    %v1561 = vpop.f32.mrf.mxu0
    %1562 = vdwg.mxu0
    %1563 = vmatprep.subr.bf16.mxu0 %v741
    %1564 = vmatpush1.bf16.msra.mxu0 %v740
    %1565 = vmatprep.subr.bf16.mxu0 %v737
    %1566 = vmatpush1.bf16.msra.mxu0 %v736
    %1567 = vmatprep.subr.bf16.mxu0 %v733
    %1568 = vmatpush1.bf16.msra.mxu0 %v732
    %1569 = vmatprep.subr.bf16.mxu0 %v729
    %1570 = vmatpush1.bf16.msra.mxu0 %v728
    %1571 = vmatprep.subr.bf16.mxu0 %v725
    %1572 = vmatpush1.bf16.msra.mxu0 %v724
    %1573 = vmatprep.subr.bf16.mxu0 %v721
    %1574 = vmatpush1.bf16.msra.mxu0 %v720
    %1575 = vmatprep.subr.bf16.mxu0 %v717
    %1576 = vmatpush1.bf16.msra.mxu0 %v716
    %1577 = vmatprep.subr.bf16.mxu0 %v713
    %1578 = vmatpush1.bf16.msra.mxu0 %v712
    %1579 = vmatprep.subr.bf16.mxu0 0
    %1580 = vmatpush2.bf16.msra.mxu0 0
    %1581 = vmatprep.subr.bf16.mxu0 0
    %1582 = vmatpush2.bf16.msra.mxu0 0
    %1583 = vmatprep.subr.bf16.mxu0 0
    %1584 = vmatpush2.bf16.msra.mxu0 0
    %1585 = vmatprep.subr.bf16.mxu0 0
    %1586 = vmatpush2.bf16.msra.mxu0 0
    %1587 = vmatprep.subr.bf16.mxu0 0
    %1588 = vmatpush2.bf16.msra.mxu0 0
    %1589 = vmatprep.subr.bf16.mxu0 0
    %1590 = vmatpush2.bf16.msra.mxu0 0
    %1591 = vmatprep.subr.bf16.mxu0 0
    %1592 = vmatpush2.bf16.msra.mxu0 0
    %1593 = vmatprep.subr.bf16.mxu0 0
    %1594 = vmatpush2.bf16.msra.mxu0 0
    %1595 = vmatprep.mubr.bf16.mxu0 0
    %1596 = vmatmul.mubr.bf16.gmra.mxu0 %v1521
    %v1597 = vpop.f32.mrf.mxu0
    %v1598 = vadd.f32 0.0, %v1597
    %v1599 = vpop.f32.mrf.mxu0
    %v1600 = vadd.f32 0.0, %v1599
    %v1601 = vpop.f32.mrf.mxu0
    %v1602 = vpop.f32.mrf.mxu0
    %1603 = vdwg.mxu0
    %s1604 = scalar_lea.vmem [#allocation2], 96
    %v1605 = vld [vmem:[%s1604] sm:$0xff]
    %v1606 = vld [vmem:[%s1604 + $0x8] sm:$0xff]
    %v1607 = vunpack.c.l.bf16 %v1605
    %v1608 = vunpack.c.h.bf16 %v1605
    %v1609 = vunpack.c.l.bf16 %v1606
    %v1610 = vunpack.c.h.bf16 %v1606
    %v1611 = vadd.f32 %v1607, %v1557
    %v1612 = vadd.f32 %v1608, %v1559
    %v1613 = vadd.f32 %v1609, %v1598
    %v1614 = vadd.f32 %v1610, %v1600
    %v1615 = vxor.u32 %v1611, 2147483648
    %v1616 = vmul.f32 %v1615, 1.442695
    %v1617 = vpow.pop %v1616
    %v1618 = vadd.f32 %v1617, 1.0
    %v1619 = vrcp.pop %v1618
    %v1620 = vmul.f32 1.0, %v1619
    %v1621 = vxor.u32 %v1612, 2147483648
    %v1622 = vmul.f32 %v1621, 1.442695
    %v1623 = vpow.pop %v1622
    %v1624 = vadd.f32 %v1623, 1.0
    %v1625 = vrcp.pop %v1624
    %v1626 = vmul.f32 1.0, %v1625
    %v1627 = vtanh.pop %v1613
    %v1628 = vxor.u32 %v1614, 2147483648
    %v1629 = vmul.f32 %v1628, 1.442695
    %v1630 = vpow.pop %v1629
    %v1631 = vadd.f32 %v1630, 1.0
    %v1632 = vrcp.pop %v1631
    %v1633 = vmul.f32 1.0, %v1632
    %v1634 = vld [vmem:[#allocation4] sm:$0xff]
    %v1635 = vmul.f32 %v1626, %v1634
    %v1636 = vmul.f32 %v1620, %v1627
    %v1637 = vadd.f32 %v1635, %v1636
    %v1638 = vtanh.pop %v1637
    %v1639 = vmul.f32 %v1633, %v1638
    %1640 = vst [vmem:[#allocation4] sm:$0xff] %v1637
    %1641 = vst [vmem:[#allocation3] sm:$0xff] %v1639
    %v1642 = vpack.c.bf16 %v1639, %v1639
    %s1643 = scalar_lea.vmem [#allocation5], 24
    %1644 = vst [vmem:[%s1643] sm:$0xf] %v1642
    %v1645 = vld [vmem:[#allocation3] sm:$0xff]
    %v1646 = vpack.c.bf16 %v1645, %v1645
    %1647 = vmatprep.subr.bf16.mxu0 %v739
    %1648 = vmatpush1.bf16.msra.mxu0 %v738
    %1649 = vmatprep.subr.bf16.mxu0 %v735
    %1650 = vmatpush1.bf16.msra.mxu0 %v734
    %1651 = vmatprep.subr.bf16.mxu0 %v731
    %1652 = vmatpush1.bf16.msra.mxu0 %v730
    %1653 = vmatprep.subr.bf16.mxu0 %v727
    %1654 = vmatpush1.bf16.msra.mxu0 %v726
    %1655 = vmatprep.subr.bf16.mxu0 %v723
    %1656 = vmatpush1.bf16.msra.mxu0 %v722
    %1657 = vmatprep.subr.bf16.mxu0 %v719
    %1658 = vmatpush1.bf16.msra.mxu0 %v718
    %1659 = vmatprep.subr.bf16.mxu0 %v715
    %1660 = vmatpush1.bf16.msra.mxu0 %v714
    %1661 = vmatprep.subr.bf16.mxu0 %v711
    %1662 = vmatpush1.bf16.msra.mxu0 %v710
    %1663 = vmatprep.subr.bf16.mxu0 0
    %1664 = vmatpush2.bf16.msra.mxu0 0
    %1665 = vmatprep.subr.bf16.mxu0 0
    %1666 = vmatpush2.bf16.msra.mxu0 0
    %1667 = vmatprep.subr.bf16.mxu0 0
    %1668 = vmatpush2.bf16.msra.mxu0 0
    %1669 = vmatprep.subr.bf16.mxu0 0
    %1670 = vmatpush2.bf16.msra.mxu0 0
    %1671 = vmatprep.subr.bf16.mxu0 0
    %1672 = vmatpush2.bf16.msra.mxu0 0
    %1673 = vmatprep.subr.bf16.mxu0 0
    %1674 = vmatpush2.bf16.msra.mxu0 0
    %1675 = vmatprep.subr.bf16.mxu0 0
    %1676 = vmatpush2.bf16.msra.mxu0 0
    %1677 = vmatprep.subr.bf16.mxu0 0
    %1678 = vmatpush2.bf16.msra.mxu0 0
    %1679 = vmatprep.mubr.bf16.mxu0 0
    %1680 = vmatmul.mubr.bf16.gmra.mxu0 %v1646
    %v1681 = vpop.f32.mrf.mxu0
    %v1682 = vadd.f32 0.0, %v1681
    %v1683 = vpop.f32.mrf.mxu0
    %v1684 = vadd.f32 0.0, %v1683
    %v1685 = vpop.f32.mrf.mxu0
    %v1686 = vpop.f32.mrf.mxu0
    %1687 = vdwg.mxu0
    %1688 = vmatprep.subr.bf16.mxu0 %v741
    %1689 = vmatpush1.bf16.msra.mxu0 %v740
    %1690 = vmatprep.subr.bf16.mxu0 %v737
    %1691 = vmatpush1.bf16.msra.mxu0 %v736
    %1692 = vmatprep.subr.bf16.mxu0 %v733
    %1693 = vmatpush1.bf16.msra.mxu0 %v732
    %1694 = vmatprep.subr.bf16.mxu0 %v729
    %1695 = vmatpush1.bf16.msra.mxu0 %v728
    %1696 = vmatprep.subr.bf16.mxu0 %v725
    %1697 = vmatpush1.bf16.msra.mxu0 %v724
    %1698 = vmatprep.subr.bf16.mxu0 %v721
    %1699 = vmatpush1.bf16.msra.mxu0 %v720
    %1700 = vmatprep.subr.bf16.mxu0 %v717
    %1701 = vmatpush1.bf16.msra.mxu0 %v716
    %1702 = vmatprep.subr.bf16.mxu0 %v713
    %1703 = vmatpush1.bf16.msra.mxu0 %v712
    %1704 = vmatprep.subr.bf16.mxu0 0
    %1705 = vmatpush2.bf16.msra.mxu0 0
    %1706 = vmatprep.subr.bf16.mxu0 0
    %1707 = vmatpush2.bf16.msra.mxu0 0
    %1708 = vmatprep.subr.bf16.mxu0 0
    %1709 = vmatpush2.bf16.msra.mxu0 0
    %1710 = vmatprep.subr.bf16.mxu0 0
    %1711 = vmatpush2.bf16.msra.mxu0 0
    %1712 = vmatprep.subr.bf16.mxu0 0
    %1713 = vmatpush2.bf16.msra.mxu0 0
    %1714 = vmatprep.subr.bf16.mxu0 0
    %1715 = vmatpush2.bf16.msra.mxu0 0
    %1716 = vmatprep.subr.bf16.mxu0 0
    %1717 = vmatpush2.bf16.msra.mxu0 0
    %1718 = vmatprep.subr.bf16.mxu0 0
    %1719 = vmatpush2.bf16.msra.mxu0 0
    %1720 = vmatprep.mubr.bf16.mxu0 0
    %1721 = vmatmul.mubr.bf16.gmra.mxu0 %v1646
    %v1722 = vpop.f32.mrf.mxu0
    %v1723 = vadd.f32 0.0, %v1722
    %v1724 = vpop.f32.mrf.mxu0
    %v1725 = vadd.f32 0.0, %v1724
    %v1726 = vpop.f32.mrf.mxu0
    %v1727 = vpop.f32.mrf.mxu0
    %1728 = vdwg.mxu0
    %s1729 = scalar_lea.vmem [#allocation2], 112
    %v1730 = vld [vmem:[%s1729] sm:$0xff]
    %v1731 = vld [vmem:[%s1729 + $0x8] sm:$0xff]
    %v1732 = vunpack.c.l.bf16 %v1730
    %v1733 = vunpack.c.h.bf16 %v1730
    %v1734 = vunpack.c.l.bf16 %v1731
    %v1735 = vunpack.c.h.bf16 %v1731
    %v1736 = vadd.f32 %v1732, %v1682
    %v1737 = vadd.f32 %v1733, %v1684
    %v1738 = vadd.f32 %v1734, %v1723
    %v1739 = vadd.f32 %v1735, %v1725
    %v1740 = vxor.u32 %v1736, 2147483648
    %v1741 = vmul.f32 %v1740, 1.442695
    %v1742 = vpow.pop %v1741
    %v1743 = vadd.f32 %v1742, 1.0
    %v1744 = vrcp.pop %v1743
    %v1745 = vmul.f32 1.0, %v1744
    %v1746 = vxor.u32 %v1737, 2147483648
    %v1747 = vmul.f32 %v1746, 1.442695
    %v1748 = vpow.pop %v1747
    %v1749 = vadd.f32 %v1748, 1.0
    %v1750 = vrcp.pop %v1749
    %v1751 = vmul.f32 1.0, %v1750
    %v1752 = vtanh.pop %v1738
    %v1753 = vxor.u32 %v1739, 2147483648
    %v1754 = vmul.f32 %v1753, 1.442695
    %v1755 = vpow.pop %v1754
    %v1756 = vadd.f32 %v1755, 1.0
    %v1757 = vrcp.pop %v1756
    %v1758 = vmul.f32 1.0, %v1757
    %v1759 = vld [vmem:[#allocation4] sm:$0xff]
    %v1760 = vmul.f32 %v1751, %v1759
    %v1761 = vmul.f32 %v1745, %v1752
    %v1762 = vadd.f32 %v1760, %v1761
    %v1763 = vtanh.pop %v1762
    %v1764 = vmul.f32 %v1758, %v1763
    %1765 = vst [vmem:[#allocation4] sm:$0xff] %v1762
    %1766 = vst [vmem:[#allocation3] sm:$0xff] %v1764
    %v1767 = vpack.c.bf16 %v1764, %v1764
    %s1768 = scalar_lea.vmem [#allocation5], 28
    %1769 = vst [vmem:[%s1768] sm:$0xf] %v1767
    %v1770 = vld [vmem:[#allocation5] sm:$0xf]
    %v1771 = vld [vmem:[#allocation5 + $0x4] sm:$0xf]
    %v1772 = vld [vmem:[#allocation5 + $0x8] sm:$0xf]
    %v1773 = vld [vmem:[#allocation5 + $0xc] sm:$0xf]
    %v1774 = vld [vmem:[#allocation5 + $0x10] sm:$0xf]
    %v1775 = vld [vmem:[#allocation5 + $0x14] sm:$0xf]
    %v1776 = vld [vmem:[#allocation5 + $0x18] sm:$0xf]
    %v1777 = vld [vmem:[#allocation5 + $0x1c] sm:$0xf]
    %v1778 = vld [vmem:[%s4] sm:$0xf]
    %v1779 = vld [vmem:[%s4 + $0x4] sm:$0xf]
    %v1780 = vld [vmem:[%s4 + $0x8] sm:$0xf]
    %v1781 = vld [vmem:[%s4 + $0xc] sm:$0xf]
    %v1782 = vld [vmem:[%s4 + $0x10] sm:$0xf]
    %v1783 = vld [vmem:[%s4 + $0x14] sm:$0xf]
    %v1784 = vld [vmem:[%s4 + $0x18] sm:$0xf]
    %v1785 = vld [vmem:[%s4 + $0x1c] sm:$0xf]
    %v1786 = vld [vmem:[%s4 + $0x20] sm:$0xf]
    %v1787 = vld [vmem:[%s4 + $0x24] sm:$0xf]
    %v1788 = vld [vmem:[%s4 + $0x28] sm:$0xf]
    %v1789 = vld [vmem:[%s4 + $0x2c] sm:$0xf]
    %v1790 = vld [vmem:[%s4 + $0x30] sm:$0xf]
    %v1791 = vld [vmem:[%s4 + $0x34] sm:$0xf]
    %v1792 = vld [vmem:[%s4 + $0x38] sm:$0xf]
    %v1793 = vld [vmem:[%s4 + $0x3c] sm:$0xf]
    %v1794 = vld [vmem:[%s5] sm:$0x1]
    %v1796 = vlaneseq
    %v1797 = vshrl.u32 %v1796, 7
    %v1798 = vsub.s32 0, %v1797
    %v1799 = vrot.slane %v1794, %v1798
    %v1809 = vunpack.c.l.b16 %v1770
    %v1810 = vunpack.c.l.b16 %v1771
    %v1811 = vunpack.c.l.b16 %v1772
    %v1812 = vunpack.c.l.b16 %v1773
    %v1813 = vunpack.c.l.b16 %v1774
    %v1814 = vunpack.c.l.b16 %v1775
    %v1815 = vunpack.c.l.b16 %v1776
    %v1816 = vunpack.c.l.b16 %v1777
    %v1817 = vpack.c.b16 %v1810, %v1809
    %v1818 = vpack.c.b16 %v1812, %v1811
    %v1819 = vpack.c.b16 %v1814, %v1813
    %v1820 = vpack.c.b16 %v1816, %v1815
    %v1841 = vunpack.c.l.b16 %v1778
    %v1842 = vunpack.c.l.b16 %v1779
    %v1843 = vunpack.c.l.b16 %v1780
    %v1844 = vunpack.c.l.b16 %v1781
    %v1845 = vunpack.c.l.b16 %v1782
    %v1846 = vunpack.c.l.b16 %v1783
    %v1847 = vunpack.c.l.b16 %v1784
    %v1848 = vunpack.c.l.b16 %v1785
    %v1849 = vunpack.c.l.b16 %v1786
    %v1850 = vunpack.c.l.b16 %v1787
    %v1851 = vunpack.c.l.b16 %v1788
    %v1852 = vunpack.c.l.b16 %v1789
    %v1853 = vunpack.c.l.b16 %v1790
    %v1854 = vunpack.c.l.b16 %v1791
    %v1855 = vunpack.c.l.b16 %v1792
    %v1856 = vunpack.c.l.b16 %v1793
    %v1857 = vpack.c.b16 %v1842, %v1841
    %v1858 = vpack.c.b16 %v1844, %v1843
    %v1859 = vpack.c.b16 %v1846, %v1845
    %v1860 = vpack.c.b16 %v1848, %v1847
    %v1861 = vpack.c.b16 %v1850, %v1849
    %v1862 = vpack.c.b16 %v1852, %v1851
    %v1863 = vpack.c.b16 %v1854, %v1853
    %v1864 = vpack.c.b16 %v1856, %v1855
    %1873 = vmatprep.subr.bf16.mxu0 0
    %1874 = vmatpush1.bf16.msra.mxu0 %v1864
    %1875 = vmatprep.subr.bf16.mxu0 0
    %1876 = vmatpush1.bf16.msra.mxu0 %v1863
    %1877 = vmatprep.subr.bf16.mxu0 0
    %1878 = vmatpush1.bf16.msra.mxu0 %v1862
    %1879 = vmatprep.subr.bf16.mxu0 0
    %1880 = vmatpush1.bf16.msra.mxu0 %v1861
    %1881 = vmatprep.subr.bf16.mxu0 0
    %1882 = vmatpush1.bf16.msra.mxu0 %v1860
    %1883 = vmatprep.subr.bf16.mxu0 0
    %1884 = vmatpush1.bf16.msra.mxu0 %v1859
    %1885 = vmatprep.subr.bf16.mxu0 0
    %1886 = vmatpush1.bf16.msra.mxu0 %v1858
    %1887 = vmatprep.subr.bf16.mxu0 0
    %1888 = vmatpush1.bf16.msra.mxu0 %v1857
    %1889 = vmatprep.subr.bf16.mxu0 0
    %1890 = vmatpush2.bf16.msra.mxu0 0
    %1891 = vmatprep.subr.bf16.mxu0 0
    %1892 = vmatpush2.bf16.msra.mxu0 0
    %1893 = vmatprep.subr.bf16.mxu0 0
    %1894 = vmatpush2.bf16.msra.mxu0 0
    %1895 = vmatprep.subr.bf16.mxu0 0
    %1896 = vmatpush2.bf16.msra.mxu0 0
    %1897 = vmatprep.subr.bf16.mxu0 0
    %1898 = vmatpush2.bf16.msra.mxu0 0
    %1899 = vmatprep.subr.bf16.mxu0 0
    %1900 = vmatpush2.bf16.msra.mxu0 0
    %1901 = vmatprep.subr.bf16.mxu0 0
    %1902 = vmatpush2.bf16.msra.mxu0 0
    %1903 = vmatprep.subr.bf16.mxu0 0
    %1904 = vmatpush2.bf16.msra.mxu0 0
    %1905 = vmatprep.mubr.bf16.mxu0 0
    %1906 = vmatmul.mubr.bf16.gmra.mxu0 %v1817
    %v1907 = vpop.f32.mrf.mxu0
    %v1908 = vadd.f32 %v1799, %v1907
    %v1909 = vpop.f32.mrf.mxu0
    %v1910 = vpop.f32.mrf.mxu0
    %v1911 = vadd.f32 %v1799, %v1910
    %v1912 = vpop.f32.mrf.mxu0
    %1913 = vmatprep.mubr.bf16.mxu0 0
    %1914 = vmatmul.mubr.bf16.gmra.mxu0 %v1818
    %v1915 = vpop.f32.mrf.mxu0
    %v1916 = vadd.f32 %v1799, %v1915
    %v1917 = vpop.f32.mrf.mxu0
    %v1918 = vpop.f32.mrf.mxu0
    %v1919 = vadd.f32 %v1799, %v1918
    %v1920 = vpop.f32.mrf.mxu0
    %1921 = vmatprep.mubr.bf16.mxu0 0
    %1922 = vmatmul.mubr.bf16.gmra.mxu0 %v1819
    %v1923 = vpop.f32.mrf.mxu0
    %v1924 = vadd.f32 %v1799, %v1923
    %v1925 = vpop.f32.mrf.mxu0
    %v1926 = vpop.f32.mrf.mxu0
    %v1927 = vadd.f32 %v1799, %v1926
    %v1928 = vpop.f32.mrf.mxu0
    %1929 = vmatprep.mubr.bf16.mxu0 0
    %1930 = vmatmul.mubr.bf16.gmra.mxu0 %v1820
    %v1931 = vpop.f32.mrf.mxu0
    %v1932 = vadd.f32 %v1799, %v1931
    %v1933 = vpop.f32.mrf.mxu0
    %v1934 = vpop.f32.mrf.mxu0
    %v1935 = vadd.f32 %v1799, %v1934
    %v1936 = vpop.f32.mrf.mxu0
    %1937 = vdwg.mxu0
    %1938 = vst [vmem:[%s6] sm:$0xff] %v1908
    %1939 = vst [vmem:[%s6 + $0x8] sm:$0xff] %v1911
    %1940 = vst [vmem:[%s6 + $0x10] sm:$0xff] %v1916
    %1941 = vst [vmem:[%s6 + $0x18] sm:$0xff] %v1919
    %1942 = vst [vmem:[%s6 + $0x20] sm:$0xff] %v1924
    %1943 = vst [vmem:[%s6 + $0x28] sm:$0xff] %v1927
    %1944 = vst [vmem:[%s6 + $0x30] sm:$0xff] %v1932
    %1945 = vst [vmem:[%s6 + $0x38] sm:$0xff] %v1935
    // Predicated region
    $region34: #{lstm_rnn_forward.3} parent=1 // pred_check
      _
    $region35: #{lstm_rnn_forward.3} parent=1 // pred_check_branch
      %1947 = sbr.rel (0) target = $region37
    $region36: #{lstm_rnn_forward.3} parent=1 // pred_region
      _
    $region37: #{lstm_rnn_forward.3} parent=1 // pred_fallthru
      _
    // Predicated region
    $region38: #{lstm_rnn_forward.3} parent=1 // pred_check
      _
    $region39: #{lstm_rnn_forward.3} parent=1 // pred_check_branch
      %1949 = sbr.rel (0) target = $region41
    $region40: #{lstm_rnn_forward.3} parent=1 // pred_region
      _
    $region41: #{lstm_rnn_forward.3} parent=1 // pred_fallthru
      _
    %1950 = vsyncpa [#allocation7], 1

// kernel: lstm_rnn_forward.2
$region0: #{lstm_rnn_forward.2}
  #allocation0 [shape = 'u32[]', space=smem, size = 0x4, offset = 0x4, fixed_abs, tag = 'smem constant byte address 0x4 - core index']
  #allocation1 [shape = 'u32[144,128]{1,0:T(1,128)}', space=vmem, size = 0x12000, scoped, tag = 'internal scratch']
  #allocation2 [shape = 'bf16[8,8,512]{2,1,0:T(8,128)(2,1)}', space=vmem, size = 0x10000, scoped, tag = 'scratch operand']
  #allocation3 [shape = 'f32[8,128]{1,0:T(8,128)}', space=vmem, size = 0x1000, scoped, tag = 'scratch operand']
  #allocation4 [shape = 'f32[8,128]{1,0:T(8,128)}', space=vmem, size = 0x1000, scoped, tag = 'scratch operand']
  %s0 = inlined_call_operand.vmem [shape: bf16[8,8,32], index: 0, kind: input, shape index: {}]
  %s1 = inlined_call_operand.hbm [shape: bf16[32,512], index: 1, kind: input, shape index: {}]
  %s2 = inlined_call_operand.hbm [shape: bf16[128,512], index: 2, kind: input, shape index: {}]
  %s3 = inlined_call_operand.hbm [shape: f32[1,512], index: 3, kind: input, shape index: {}]
  %s4 = inlined_call_operand.vmem [shape: bf16[8,8,128], index: 4, kind: output, shape index: {}]
  %s5 = sld [smem:[#allocation0]]
  $region42: #{lstm_rnn_forward.2} parent=0
    _
  %s7 = ssub.s32 1, %s5
  %s8 = scalar_select 0, %s7, %s5
  $region1: #{lstm_rnn_forward.2} parent=0
    #allocation5 [shape = 'u8[32768]{0}', space=vmem, size = 0x8000, scoped, tag = 'input window, operand 1, single buffered']
    #allocation6 [shape = 's32[1]{0}', space=sflag, size = 0x4, scoped, tag = 'scoped memory for lstm_rnn_forward.2']
    #allocation7 [shape = 'u8[131072]{0}', space=vmem, size = 0x20000, scoped, tag = 'input window, operand 2, single buffered']
    #allocation8 [shape = 's32[1]{0}', space=sflag, size = 0x4, scoped, tag = 'scoped memory for lstm_rnn_forward.2']
    #allocation9 [shape = 'u8[2048]{0}', space=vmem, size = 0x800, scoped, tag = 'input window, operand 3, single buffered']
    %9 = vsyncpa [#allocation6], 0
    %10 = vsyncpa [#allocation8], 0
    // Predicated region
    $region2: #{lstm_rnn_forward.2} parent=1 // pred_check
      _
    $region3: #{lstm_rnn_forward.2} parent=1 // pred_check_branch
      %12 = sbr.rel (0) target = $region5
    $region4: #{lstm_rnn_forward.2} parent=1 // pred_region
      _
    $region5: #{lstm_rnn_forward.2} parent=1 // pred_fallthru
      _
    // Predicated region
    $region6: #{lstm_rnn_forward.2} parent=1 // pred_check
      _
    $region7: #{lstm_rnn_forward.2} parent=1 // pred_check_branch
      %14 = sbr.rel (0) target = $region9
    $region8: #{lstm_rnn_forward.2} parent=1 // pred_region
      %s16 = ssub.s32 1024, 1024
      %17 = vsyncadd [#allocation6], %s16
      %s18 = sshll.u32 [#allocation5], 4
      %s19 = int_to_ptr.vmem [resolvable:$true] %s18
      %24 = dma.hbm_to_vmem [thread:$0]  %s1, 1024, %s19, [#allocation6], 256, 256, 16
    $region9: #{lstm_rnn_forward.2} parent=1 // pred_fallthru
      _
    // Predicated region
    $region10: #{lstm_rnn_forward.2} parent=1 // pred_check
      _
    $region11: #{lstm_rnn_forward.2} parent=1 // pred_check_branch
      %26 = sbr.rel (0) target = $region13
    $region12: #{lstm_rnn_forward.2} parent=1 // pred_region
      %s28 = ssub.s32 4096, 4096
      %29 = vsyncadd [#allocation8], %s28
      %s30 = sshll.u32 [#allocation7], 4
      %s31 = int_to_ptr.vmem [resolvable:$true] %s30
      %36 = dma.hbm_to_vmem [thread:$0]  %s2, 4096, %s31, [#allocation8], 256, 256, 16
    $region13: #{lstm_rnn_forward.2} parent=1 // pred_fallthru
      _
    // Predicated region
    $region14: #{lstm_rnn_forward.2} parent=1 // pred_check
      _
    $region15: #{lstm_rnn_forward.2} parent=1 // pred_check_branch
      %38 = sbr.rel (0) target = $region17
    $region16: #{lstm_rnn_forward.2} parent=1 // pred_region
      %s40 = ssub.s32 64, 64
      %41 = vsyncadd [#allocation8], %s40
      %s43 = sshll.u32 [#allocation9], 4
      %s44 = int_to_ptr.vmem [resolvable:$true] %s43
      %46 = dma.hbm_to_vmem [thread:$0]  %s3, 64, %s44, [#allocation8]
    $region17: #{lstm_rnn_forward.2} parent=1 // pred_fallthru
      _
    // Predicated region
    $region18: #{lstm_rnn_forward.2} parent=1 // pred_check
      _
    $region19: #{lstm_rnn_forward.2} parent=1 // pred_check_branch
      %48 = sbr.rel (0) target = $region21
    $region20: #{lstm_rnn_forward.2} parent=1 // pred_region
      %49 = dma.done [#allocation6], 1024
    $region21: #{lstm_rnn_forward.2} parent=1 // pred_fallthru
      _
    // Predicated region
    $region22: #{lstm_rnn_forward.2} parent=1 // pred_check
      _
    $region23: #{lstm_rnn_forward.2} parent=1 // pred_check_branch
      %51 = sbr.rel (0) target = $region25
    $region24: #{lstm_rnn_forward.2} parent=1 // pred_region
      %52 = dma.done [#allocation8], 4096
    $region25: #{lstm_rnn_forward.2} parent=1 // pred_fallthru
      _
    // Predicated region
    $region26: #{lstm_rnn_forward.2} parent=1 // pred_check
      _
    $region27: #{lstm_rnn_forward.2} parent=1 // pred_check_branch
      %54 = sbr.rel (0) target = $region29
    $region28: #{lstm_rnn_forward.2} parent=1 // pred_region
      %55 = dma.done [#allocation8], 64
    $region29: #{lstm_rnn_forward.2} parent=1 // pred_fallthru
      _
    %p57 = scmp.eq.s32.totalorder 0, 0
    // Predicated region
    $region30: #{lstm_rnn_forward.2} parent=1 // pred_check
      %p58 = pneg %p57
    $region31: #{lstm_rnn_forward.2} parent=1 // pred_check_branch
      %60 = sbr.rel (%p58) target = $region33
    $region32: #{lstm_rnn_forward.2} parent=1 // pred_region
      %61 = vst [vmem:[#allocation3] sm:$0xff] 0.0
      %62 = vst [vmem:[#allocation4] sm:$0xff] 0.0
    $region33: #{lstm_rnn_forward.2} parent=1 // pred_fallthru
      _
    %v63 = vld [vmem:[%s0] sm:$0xf]
    %v64 = vld [vmem:[%s0 + $0x4] sm:$0xf]
    %v65 = vld [vmem:[%s0 + $0x8] sm:$0xf]
    %v66 = vld [vmem:[%s0 + $0xc] sm:$0xf]
    %v67 = vld [vmem:[%s0 + $0x10] sm:$0xf]
    %v68 = vld [vmem:[%s0 + $0x14] sm:$0xf]
    %v69 = vld [vmem:[%s0 + $0x18] sm:$0xf]
    %v70 = vld [vmem:[%s0 + $0x1c] sm:$0xf]
    %v71 = vld [vmem:[#allocation5] sm:$0xff]
    %v72 = vld [vmem:[#allocation5 + $0x8] sm:$0xff]
    %v73 = vld [vmem:[#allocation5 + $0x10] sm:$0xff]
    %v74 = vld [vmem:[#allocation5 + $0x18] sm:$0xff]
    %v75 = vld [vmem:[#allocation5 + $0x20] sm:$0xff]
    %v76 = vld [vmem:[#allocation5 + $0x28] sm:$0xff]
    %v77 = vld [vmem:[#allocation5 + $0x30] sm:$0xff]
    %v78 = vld [vmem:[#allocation5 + $0x38] sm:$0xff]
    %v79 = vld [vmem:[#allocation9] sm:$0xf]
    %v81 = vlaneseq
    %v82 = vshrl.u32 %v81, 7
    %v83 = vsub.s32 0, %v82
    %v84 = vrot.slane %v79, %v83
    %v85 = vlaneseq
    %v86 = vshrl.u32 %v85, 7
    %v87 = vsub.s32 1, %v86
    %v88 = vrot.slane %v79, %v87
    %v89 = vlaneseq
    %v90 = vshrl.u32 %v89, 7
    %v91 = vsub.s32 2, %v90
    %v92 = vrot.slane %v79, %v91
    %v93 = vlaneseq
    %v94 = vshrl.u32 %v93, 7
    %v95 = vsub.s32 3, %v94
    %v96 = vrot.slane %v79, %v95
    %v109 = vunpack.c.l.b16 %v63
    %v110 = vunpack.c.l.b16 %v64
    %v111 = vunpack.c.l.b16 %v65
    %v112 = vunpack.c.l.b16 %v66
    %v113 = vunpack.c.l.b16 %v67
    %v114 = vunpack.c.l.b16 %v68
    %v115 = vunpack.c.l.b16 %v69
    %v116 = vunpack.c.l.b16 %v70
    %v117 = vpack.c.b16 %v110, %v109
    %v118 = vpack.c.b16 %v112, %v111
    %v119 = vpack.c.b16 %v114, %v113
    %v120 = vpack.c.b16 %v116, %v115
    %v129 = vunpack.c.l.b16 %v71
    %v130 = vunpack.c.h.b16 %v71
    %v131 = vunpack.c.l.b16 %v72
    %v132 = vunpack.c.h.b16 %v72
    %v133 = vunpack.c.l.b16 %v73
    %v134 = vunpack.c.h.b16 %v73
    %v135 = vunpack.c.l.b16 %v74
    %v136 = vunpack.c.h.b16 %v74
    %v137 = vunpack.c.l.b16 %v75
    %v138 = vunpack.c.h.b16 %v75
    %v139 = vunpack.c.l.b16 %v76
    %v140 = vunpack.c.h.b16 %v76
    %v141 = vunpack.c.l.b16 %v77
    %v142 = vunpack.c.h.b16 %v77
    %v143 = vunpack.c.l.b16 %v78
    %v144 = vunpack.c.h.b16 %v78
    %v145 = vpack.c.b16 %v133, %v129
    %v146 = vpack.c.b16 %v134, %v130
    %v147 = vpack.c.b16 %v135, %v131
    %v148 = vpack.c.b16 %v136, %v132
    %v149 = vpack.c.b16 %v141, %v137
    %v150 = vpack.c.b16 %v142, %v138
    %v151 = vpack.c.b16 %v143, %v139
    %v152 = vpack.c.b16 %v144, %v140
    %vm161 = vcmask 261120
    %v163 = vsel %vm161, %v117, 0
    %v166 = vsel %vm161, %v118, 0
    %v169 = vsel %vm161, %v119, 0
    %v172 = vsel %vm161, %v120, 0
    %174 = vmatprep.subr.bf16.mxu0 0
    %175 = vmatpush1.bf16.msra.mxu0 0
    %176 = vmatprep.subr.bf16.mxu0 0
    %177 = vmatpush1.bf16.msra.mxu0 0
    %178 = vmatprep.subr.bf16.mxu0 0
    %179 = vmatpush1.bf16.msra.mxu0 0
    %180 = vmatprep.subr.bf16.mxu0 0
    %181 = vmatpush1.bf16.msra.mxu0 0
    %182 = vmatprep.subr.bf16.mxu0 0
    %183 = vmatpush1.bf16.msra.mxu0 0
    %184 = vmatprep.subr.bf16.mxu0 0
    %185 = vmatpush1.bf16.msra.mxu0 0
    %186 = vmatprep.subr.bf16.mxu0 %v150
    %187 = vmatpush1.bf16.msra.mxu0 %v149
    %188 = vmatprep.subr.bf16.mxu0 %v146
    %189 = vmatpush1.bf16.msra.mxu0 %v145
    %190 = vmatprep.subr.bf16.mxu0 0
    %191 = vmatpush2.bf16.msra.mxu0 0
    %192 = vmatprep.subr.bf16.mxu0 0
    %193 = vmatpush2.bf16.msra.mxu0 0
    %194 = vmatprep.subr.bf16.mxu0 0
    %195 = vmatpush2.bf16.msra.mxu0 0
    %196 = vmatprep.subr.bf16.mxu0 0
    %197 = vmatpush2.bf16.msra.mxu0 0
    %198 = vmatprep.subr.bf16.mxu0 0
    %199 = vmatpush2.bf16.msra.mxu0 0
    %200 = vmatprep.subr.bf16.mxu0 0
    %201 = vmatpush2.bf16.msra.mxu0 0
    %202 = vmatprep.subr.bf16.mxu0 0
    %203 = vmatpush2.bf16.msra.mxu0 0
    %204 = vmatprep.subr.bf16.mxu0 0
    %205 = vmatpush2.bf16.msra.mxu0 0
    %206 = vmatprep.mubr.bf16.mxu0 0
    %207 = vmatmul.mubr.bf16.gmra.mxu0 %v163
    %v208 = vpop.f32.mrf.mxu0
    %v209 = vadd.f32 %v84, %v208
    %v210 = vpop.f32.mrf.mxu0
    %v211 = vadd.f32 %v88, %v210
    %v212 = vpop.f32.mrf.mxu0
    %v213 = vadd.f32 %v84, %v212
    %v214 = vpop.f32.mrf.mxu0
    %v215 = vadd.f32 %v88, %v214
    %216 = vmatprep.mubr.bf16.mxu0 0
    %217 = vmatmul.mubr.bf16.gmra.mxu0 %v166
    %v218 = vpop.f32.mrf.mxu0
    %v219 = vadd.f32 %v84, %v218
    %v220 = vpop.f32.mrf.mxu0
    %v221 = vadd.f32 %v88, %v220
    %v222 = vpop.f32.mrf.mxu0
    %v223 = vadd.f32 %v84, %v222
    %v224 = vpop.f32.mrf.mxu0
    %v225 = vadd.f32 %v88, %v224
    %226 = vmatprep.mubr.bf16.mxu0 0
    %227 = vmatmul.mubr.bf16.gmra.mxu0 %v169
    %v228 = vpop.f32.mrf.mxu0
    %v229 = vadd.f32 %v84, %v228
    %v230 = vpop.f32.mrf.mxu0
    %v231 = vadd.f32 %v88, %v230
    %v232 = vpop.f32.mrf.mxu0
    %v233 = vadd.f32 %v84, %v232
    %v234 = vpop.f32.mrf.mxu0
    %v235 = vadd.f32 %v88, %v234
    %236 = vmatprep.mubr.bf16.mxu0 0
    %237 = vmatmul.mubr.bf16.gmra.mxu0 %v172
    %v238 = vpop.f32.mrf.mxu0
    %v239 = vadd.f32 %v84, %v238
    %v240 = vpop.f32.mrf.mxu0
    %v241 = vadd.f32 %v88, %v240
    %v242 = vpop.f32.mrf.mxu0
    %v243 = vadd.f32 %v84, %v242
    %v244 = vpop.f32.mrf.mxu0
    %v245 = vadd.f32 %v88, %v244
    %246 = vdwg.mxu0
    %247 = vmatprep.subr.bf16.mxu0 0
    %248 = vmatpush1.bf16.msra.mxu0 0
    %249 = vmatprep.subr.bf16.mxu0 0
    %250 = vmatpush1.bf16.msra.mxu0 0
    %251 = vmatprep.subr.bf16.mxu0 0
    %252 = vmatpush1.bf16.msra.mxu0 0
    %253 = vmatprep.subr.bf16.mxu0 0
    %254 = vmatpush1.bf16.msra.mxu0 0
    %255 = vmatprep.subr.bf16.mxu0 0
    %256 = vmatpush1.bf16.msra.mxu0 0
    %257 = vmatprep.subr.bf16.mxu0 0
    %258 = vmatpush1.bf16.msra.mxu0 0
    %259 = vmatprep.subr.bf16.mxu0 %v152
    %260 = vmatpush1.bf16.msra.mxu0 %v151
    %261 = vmatprep.subr.bf16.mxu0 %v148
    %262 = vmatpush1.bf16.msra.mxu0 %v147
    %263 = vmatprep.subr.bf16.mxu0 0
    %264 = vmatpush2.bf16.msra.mxu0 0
    %265 = vmatprep.subr.bf16.mxu0 0
    %266 = vmatpush2.bf16.msra.mxu0 0
    %267 = vmatprep.subr.bf16.mxu0 0
    %268 = vmatpush2.bf16.msra.mxu0 0
    %269 = vmatprep.subr.bf16.mxu0 0
    %270 = vmatpush2.bf16.msra.mxu0 0
    %271 = vmatprep.subr.bf16.mxu0 0
    %272 = vmatpush2.bf16.msra.mxu0 0
    %273 = vmatprep.subr.bf16.mxu0 0
    %274 = vmatpush2.bf16.msra.mxu0 0
    %275 = vmatprep.subr.bf16.mxu0 0
    %276 = vmatpush2.bf16.msra.mxu0 0
    %277 = vmatprep.subr.bf16.mxu0 0
    %278 = vmatpush2.bf16.msra.mxu0 0
    %279 = vmatprep.mubr.bf16.mxu0 0
    %280 = vmatmul.mubr.bf16.gmra.mxu0 %v163
    %v281 = vpop.f32.mrf.mxu0
    %v282 = vadd.f32 %v92, %v281
    %v283 = vpop.f32.mrf.mxu0
    %v284 = vadd.f32 %v96, %v283
    %v285 = vpop.f32.mrf.mxu0
    %v286 = vadd.f32 %v92, %v285
    %v287 = vpop.f32.mrf.mxu0
    %v288 = vadd.f32 %v96, %v287
    %289 = vmatprep.mubr.bf16.mxu0 0
    %290 = vmatmul.mubr.bf16.gmra.mxu0 %v166
    %v291 = vpop.f32.mrf.mxu0
    %v292 = vadd.f32 %v92, %v291
    %v293 = vpop.f32.mrf.mxu0
    %v294 = vadd.f32 %v96, %v293
    %v295 = vpop.f32.mrf.mxu0
    %v296 = vadd.f32 %v92, %v295
    %v297 = vpop.f32.mrf.mxu0
    %v298 = vadd.f32 %v96, %v297
    %299 = vmatprep.mubr.bf16.mxu0 0
    %300 = vmatmul.mubr.bf16.gmra.mxu0 %v169
    %v301 = vpop.f32.mrf.mxu0
    %v302 = vadd.f32 %v92, %v301
    %v303 = vpop.f32.mrf.mxu0
    %v304 = vadd.f32 %v96, %v303
    %v305 = vpop.f32.mrf.mxu0
    %v306 = vadd.f32 %v92, %v305
    %v307 = vpop.f32.mrf.mxu0
    %v308 = vadd.f32 %v96, %v307
    %309 = vmatprep.mubr.bf16.mxu0 0
    %310 = vmatmul.mubr.bf16.gmra.mxu0 %v172
    %v311 = vpop.f32.mrf.mxu0
    %v312 = vadd.f32 %v92, %v311
    %v313 = vpop.f32.mrf.mxu0
    %v314 = vadd.f32 %v96, %v313
    %v315 = vpop.f32.mrf.mxu0
    %v316 = vadd.f32 %v92, %v315
    %v317 = vpop.f32.mrf.mxu0
    %v318 = vadd.f32 %v96, %v317
    %319 = vdwg.mxu0
    %v320 = vpack.c.bf16 %v209, %v209
    %v321 = vpack.c.bf16 %v211, %v211
    %v322 = vpack.c.bf16 %v282, %v282
    %v323 = vpack.c.bf16 %v284, %v284
    %v324 = vpack.c.bf16 %v213, %v213
    %v325 = vpack.c.bf16 %v215, %v215
    %v326 = vpack.c.bf16 %v286, %v286
    %v327 = vpack.c.bf16 %v288, %v288
    %v328 = vpack.c.bf16 %v219, %v219
    %v329 = vpack.c.bf16 %v221, %v221
    %v330 = vpack.c.bf16 %v292, %v292
    %v331 = vpack.c.bf16 %v294, %v294
    %v332 = vpack.c.bf16 %v223, %v223
    %v333 = vpack.c.bf16 %v225, %v225
    %v334 = vpack.c.bf16 %v296, %v296
    %v335 = vpack.c.bf16 %v298, %v298
    %v336 = vpack.c.bf16 %v229, %v229
    %v337 = vpack.c.bf16 %v231, %v231
    %v338 = vpack.c.bf16 %v302, %v302
    %v339 = vpack.c.bf16 %v304, %v304
    %v340 = vpack.c.bf16 %v233, %v233
    %v341 = vpack.c.bf16 %v235, %v235
    %v342 = vpack.c.bf16 %v306, %v306
    %v343 = vpack.c.bf16 %v308, %v308
    %v344 = vpack.c.bf16 %v239, %v239
    %v345 = vpack.c.bf16 %v241, %v241
    %v346 = vpack.c.bf16 %v312, %v312
    %v347 = vpack.c.bf16 %v314, %v314
    %v348 = vpack.c.bf16 %v243, %v243
    %v349 = vpack.c.bf16 %v245, %v245
    %v350 = vpack.c.bf16 %v316, %v316
    %v351 = vpack.c.bf16 %v318, %v318
    %v384 = vunpack.c.l.b16 %v320
    %v385 = vunpack.c.l.b16 %v321
    %v386 = vunpack.c.l.b16 %v322
    %v387 = vunpack.c.l.b16 %v323
    %v388 = vunpack.c.l.b16 %v324
    %v389 = vunpack.c.l.b16 %v325
    %v390 = vunpack.c.l.b16 %v326
    %v391 = vunpack.c.l.b16 %v327
    %v392 = vunpack.c.l.b16 %v328
    %v393 = vunpack.c.l.b16 %v329
    %v394 = vunpack.c.l.b16 %v330
    %v395 = vunpack.c.l.b16 %v331
    %v396 = vunpack.c.l.b16 %v332
    %v397 = vunpack.c.l.b16 %v333
    %v398 = vunpack.c.l.b16 %v334
    %v399 = vunpack.c.l.b16 %v335
    %v400 = vunpack.c.l.b16 %v336
    %v401 = vunpack.c.l.b16 %v337
    %v402 = vunpack.c.l.b16 %v338
    %v403 = vunpack.c.l.b16 %v339
    %v404 = vunpack.c.l.b16 %v340
    %v405 = vunpack.c.l.b16 %v341
    %v406 = vunpack.c.l.b16 %v342
    %v407 = vunpack.c.l.b16 %v343
    %v408 = vunpack.c.l.b16 %v344
    %v409 = vunpack.c.l.b16 %v345
    %v410 = vunpack.c.l.b16 %v346
    %v411 = vunpack.c.l.b16 %v347
    %v412 = vunpack.c.l.b16 %v348
    %v413 = vunpack.c.l.b16 %v349
    %v414 = vunpack.c.l.b16 %v350
    %v415 = vunpack.c.l.b16 %v351
    %v416 = vpack.c.b16 %v385, %v384
    %v417 = vpack.c.b16 %v387, %v386
    %v418 = vpack.c.b16 %v389, %v388
    %v419 = vpack.c.b16 %v391, %v390
    %v420 = vpack.c.b16 %v393, %v392
    %v421 = vpack.c.b16 %v395, %v394
    %v422 = vpack.c.b16 %v397, %v396
    %v423 = vpack.c.b16 %v399, %v398
    %v424 = vpack.c.b16 %v401, %v400
    %v425 = vpack.c.b16 %v403, %v402
    %v426 = vpack.c.b16 %v405, %v404
    %v427 = vpack.c.b16 %v407, %v406
    %v428 = vpack.c.b16 %v409, %v408
    %v429 = vpack.c.b16 %v411, %v410
    %v430 = vpack.c.b16 %v413, %v412
    %v431 = vpack.c.b16 %v415, %v414
    %448 = vst [vmem:[#allocation2] sm:$0xff] %v416
    %449 = vst [vmem:[#allocation2 + $0x8] sm:$0xff] %v417
    %450 = vst [vmem:[#allocation2 + $0x10] sm:$0xff] %v418
    %451 = vst [vmem:[#allocation2 + $0x18] sm:$0xff] %v419
    %452 = vst [vmem:[#allocation2 + $0x20] sm:$0xff] %v420
    %453 = vst [vmem:[#allocation2 + $0x28] sm:$0xff] %v421
    %454 = vst [vmem:[#allocation2 + $0x30] sm:$0xff] %v422
    %455 = vst [vmem:[#allocation2 + $0x38] sm:$0xff] %v423
    %456 = vst [vmem:[#allocation2 + $0x40] sm:$0xff] %v424
    %457 = vst [vmem:[#allocation2 + $0x48] sm:$0xff] %v425
    %458 = vst [vmem:[#allocation2 + $0x50] sm:$0xff] %v426
    %459 = vst [vmem:[#allocation2 + $0x58] sm:$0xff] %v427
    %460 = vst [vmem:[#allocation2 + $0x60] sm:$0xff] %v428
    %461 = vst [vmem:[#allocation2 + $0x68] sm:$0xff] %v429
    %462 = vst [vmem:[#allocation2 + $0x70] sm:$0xff] %v430
    %463 = vst [vmem:[#allocation2 + $0x78] sm:$0xff] %v431
    %v464 = vld [vmem:[#allocation7] sm:$0xff]
    %v465 = vld [vmem:[#allocation7 + $0x8] sm:$0xff]
    %v466 = vld [vmem:[#allocation7 + $0x10] sm:$0xff]
    %v467 = vld [vmem:[#allocation7 + $0x18] sm:$0xff]
    %v468 = vld [vmem:[#allocation7 + $0x20] sm:$0xff]
    %v469 = vld [vmem:[#allocation7 + $0x28] sm:$0xff]
    %v470 = vld [vmem:[#allocation7 + $0x30] sm:$0xff]
    %v471 = vld [vmem:[#allocation7 + $0x38] sm:$0xff]
    %v472 = vld [vmem:[#allocation7 + $0x40] sm:$0xff]
    %v473 = vld [vmem:[#allocation7 + $0x48] sm:$0xff]
    %v474 = vld [vmem:[#allocation7 + $0x50] sm:$0xff]
    %v475 = vld [vmem:[#allocation7 + $0x58] sm:$0xff]
    %v476 = vld [vmem:[#allocation7 + $0x60] sm:$0xff]
    %v477 = vld [vmem:[#allocation7 + $0x68] sm:$0xff]
    %v478 = vld [vmem:[#allocation7 + $0x70] sm:$0xff]
    %v479 = vld [vmem:[#allocation7 + $0x78] sm:$0xff]
    %v480 = vld [vmem:[#allocation7 + $0x80] sm:$0xff]
    %v481 = vld [vmem:[#allocation7 + $0x88] sm:$0xff]
    %v482 = vld [vmem:[#allocation7 + $0x90] sm:$0xff]
    %v483 = vld [vmem:[#allocation7 + $0x98] sm:$0xff]
    %v484 = vld [vmem:[#allocation7 + $0xa0] sm:$0xff]
    %v485 = vld [vmem:[#allocation7 + $0xa8] sm:$0xff]
    %v486 = vld [vmem:[#allocation7 + $0xb0] sm:$0xff]
    %v487 = vld [vmem:[#allocation7 + $0xb8] sm:$0xff]
    %v488 = vld [vmem:[#allocation7 + $0xc0] sm:$0xff]
    %v489 = vld [vmem:[#allocation7 + $0xc8] sm:$0xff]
    %v490 = vld [vmem:[#allocation7 + $0xd0] sm:$0xff]
    %v491 = vld [vmem:[#allocation7 + $0xd8] sm:$0xff]
    %v492 = vld [vmem:[#allocation7 + $0xe0] sm:$0xff]
    %v493 = vld [vmem:[#allocation7 + $0xe8] sm:$0xff]
    %v494 = vld [vmem:[#allocation7 + $0xf0] sm:$0xff]
    %v495 = vld [vmem:[#allocation7 + $0xf8] sm:$0xff]
    %v496 = vld [vmem:[#allocation3] sm:$0xff]
    %v497 = vpack.c.bf16 %v496, %v496
    %v530 = vunpack.c.l.b16 %v464
    %v531 = vunpack.c.h.b16 %v464
    %v532 = vunpack.c.l.b16 %v465
    %v533 = vunpack.c.h.b16 %v465
    %v534 = vunpack.c.l.b16 %v466
    %v535 = vunpack.c.h.b16 %v466
    %v536 = vunpack.c.l.b16 %v467
    %v537 = vunpack.c.h.b16 %v467
    %v538 = vunpack.c.l.b16 %v468
    %v539 = vunpack.c.h.b16 %v468
    %v540 = vunpack.c.l.b16 %v469
    %v541 = vunpack.c.h.b16 %v469
    %v542 = vunpack.c.l.b16 %v470
    %v543 = vunpack.c.h.b16 %v470
    %v544 = vunpack.c.l.b16 %v471
    %v545 = vunpack.c.h.b16 %v471
    %v546 = vunpack.c.l.b16 %v472
    %v547 = vunpack.c.h.b16 %v472
    %v548 = vunpack.c.l.b16 %v473
    %v549 = vunpack.c.h.b16 %v473
    %v550 = vunpack.c.l.b16 %v474
    %v551 = vunpack.c.h.b16 %v474
    %v552 = vunpack.c.l.b16 %v475
    %v553 = vunpack.c.h.b16 %v475
    %v554 = vunpack.c.l.b16 %v476
    %v555 = vunpack.c.h.b16 %v476
    %v556 = vunpack.c.l.b16 %v477
    %v557 = vunpack.c.h.b16 %v477
    %v558 = vunpack.c.l.b16 %v478
    %v559 = vunpack.c.h.b16 %v478
    %v560 = vunpack.c.l.b16 %v479
    %v561 = vunpack.c.h.b16 %v479
    %v562 = vunpack.c.l.b16 %v480
    %v563 = vunpack.c.h.b16 %v480
    %v564 = vunpack.c.l.b16 %v481
    %v565 = vunpack.c.h.b16 %v481
    %v566 = vunpack.c.l.b16 %v482
    %v567 = vunpack.c.h.b16 %v482
    %v568 = vunpack.c.l.b16 %v483
    %v569 = vunpack.c.h.b16 %v483
    %v570 = vunpack.c.l.b16 %v484
    %v571 = vunpack.c.h.b16 %v484
    %v572 = vunpack.c.l.b16 %v485
    %v573 = vunpack.c.h.b16 %v485
    %v574 = vunpack.c.l.b16 %v486
    %v575 = vunpack.c.h.b16 %v486
    %v576 = vunpack.c.l.b16 %v487
    %v577 = vunpack.c.h.b16 %v487
    %v578 = vunpack.c.l.b16 %v488
    %v579 = vunpack.c.h.b16 %v488
    %v580 = vunpack.c.l.b16 %v489
    %v581 = vunpack.c.h.b16 %v489
    %v582 = vunpack.c.l.b16 %v490
    %v583 = vunpack.c.h.b16 %v490
    %v584 = vunpack.c.l.b16 %v491
    %v585 = vunpack.c.h.b16 %v491
    %v586 = vunpack.c.l.b16 %v492
    %v587 = vunpack.c.h.b16 %v492
    %v588 = vunpack.c.l.b16 %v493
    %v589 = vunpack.c.h.b16 %v493
    %v590 = vunpack.c.l.b16 %v494
    %v591 = vunpack.c.h.b16 %v494
    %v592 = vunpack.c.l.b16 %v495
    %v593 = vunpack.c.h.b16 %v495
    %v594 = vpack.c.b16 %v534, %v530
    %v595 = vpack.c.b16 %v535, %v531
    %v596 = vpack.c.b16 %v536, %v532
    %v597 = vpack.c.b16 %v537, %v533
    %v598 = vpack.c.b16 %v542, %v538
    %v599 = vpack.c.b16 %v543, %v539
    %v600 = vpack.c.b16 %v544, %v540
    %v601 = vpack.c.b16 %v545, %v541
    %v602 = vpack.c.b16 %v550, %v546
    %v603 = vpack.c.b16 %v551, %v547
    %v604 = vpack.c.b16 %v552, %v548
    %v605 = vpack.c.b16 %v553, %v549
    %v606 = vpack.c.b16 %v558, %v554
    %v607 = vpack.c.b16 %v559, %v555
    %v608 = vpack.c.b16 %v560, %v556
    %v609 = vpack.c.b16 %v561, %v557
    %v610 = vpack.c.b16 %v566, %v562
    %v611 = vpack.c.b16 %v567, %v563
    %v612 = vpack.c.b16 %v568, %v564
    %v613 = vpack.c.b16 %v569, %v565
    %v614 = vpack.c.b16 %v574, %v570
    %v615 = vpack.c.b16 %v575, %v571
    %v616 = vpack.c.b16 %v576, %v572
    %v617 = vpack.c.b16 %v577, %v573
    %v618 = vpack.c.b16 %v582, %v578
    %v619 = vpack.c.b16 %v583, %v579
    %v620 = vpack.c.b16 %v584, %v580
    %v621 = vpack.c.b16 %v585, %v581
    %v622 = vpack.c.b16 %v590, %v586
    %v623 = vpack.c.b16 %v591, %v587
    %v624 = vpack.c.b16 %v592, %v588
    %v625 = vpack.c.b16 %v593, %v589
    %658 = vmatprep.subr.bf16.mxu0 %v623
    %659 = vmatpush1.bf16.msra.mxu0 %v622
    %660 = vmatprep.subr.bf16.mxu0 %v619
    %661 = vmatpush1.bf16.msra.mxu0 %v618
    %662 = vmatprep.subr.bf16.mxu0 %v615
    %663 = vmatpush1.bf16.msra.mxu0 %v614
    %664 = vmatprep.subr.bf16.mxu0 %v611
    %665 = vmatpush1.bf16.msra.mxu0 %v610
    %666 = vmatprep.subr.bf16.mxu0 %v607
    %667 = vmatpush1.bf16.msra.mxu0 %v606
    %668 = vmatprep.subr.bf16.mxu0 %v603
    %669 = vmatpush1.bf16.msra.mxu0 %v602
    %670 = vmatprep.subr.bf16.mxu0 %v599
    %671 = vmatpush1.bf16.msra.mxu0 %v598
    %672 = vmatprep.subr.bf16.mxu0 %v595
    %673 = vmatpush1.bf16.msra.mxu0 %v594
    %674 = vmatprep.subr.bf16.mxu0 0
    %675 = vmatpush2.bf16.msra.mxu0 0
    %676 = vmatprep.subr.bf16.mxu0 0
    %677 = vmatpush2.bf16.msra.mxu0 0
    %678 = vmatprep.subr.bf16.mxu0 0
    %679 = vmatpush2.bf16.msra.mxu0 0
    %680 = vmatprep.subr.bf16.mxu0 0
    %681 = vmatpush2.bf16.msra.mxu0 0
    %682 = vmatprep.subr.bf16.mxu0 0
    %683 = vmatpush2.bf16.msra.mxu0 0
    %684 = vmatprep.subr.bf16.mxu0 0
    %685 = vmatpush2.bf16.msra.mxu0 0
    %686 = vmatprep.subr.bf16.mxu0 0
    %687 = vmatpush2.bf16.msra.mxu0 0
    %688 = vmatprep.subr.bf16.mxu0 0
    %689 = vmatpush2.bf16.msra.mxu0 0
    %690 = vmatprep.mubr.bf16.mxu0 0
    %691 = vmatmul.mubr.bf16.gmra.mxu0 %v497
    %v692 = vpop.f32.mrf.mxu0
    %v693 = vadd.f32 0.0, %v692
    %v694 = vpop.f32.mrf.mxu0
    %v695 = vadd.f32 0.0, %v694
    %v696 = vpop.f32.mrf.mxu0
    %v697 = vpop.f32.mrf.mxu0
    %698 = vdwg.mxu0
    %699 = vmatprep.subr.bf16.mxu0 %v625
    %700 = vmatpush1.bf16.msra.mxu0 %v624
    %701 = vmatprep.subr.bf16.mxu0 %v621
    %702 = vmatpush1.bf16.msra.mxu0 %v620
    %703 = vmatprep.subr.bf16.mxu0 %v617
    %704 = vmatpush1.bf16.msra.mxu0 %v616
    %705 = vmatprep.subr.bf16.mxu0 %v613
    %706 = vmatpush1.bf16.msra.mxu0 %v612
    %707 = vmatprep.subr.bf16.mxu0 %v609
    %708 = vmatpush1.bf16.msra.mxu0 %v608
    %709 = vmatprep.subr.bf16.mxu0 %v605
    %710 = vmatpush1.bf16.msra.mxu0 %v604
    %711 = vmatprep.subr.bf16.mxu0 %v601
    %712 = vmatpush1.bf16.msra.mxu0 %v600
    %713 = vmatprep.subr.bf16.mxu0 %v597
    %714 = vmatpush1.bf16.msra.mxu0 %v596
    %715 = vmatprep.subr.bf16.mxu0 0
    %716 = vmatpush2.bf16.msra.mxu0 0
    %717 = vmatprep.subr.bf16.mxu0 0
    %718 = vmatpush2.bf16.msra.mxu0 0
    %719 = vmatprep.subr.bf16.mxu0 0
    %720 = vmatpush2.bf16.msra.mxu0 0
    %721 = vmatprep.subr.bf16.mxu0 0
    %722 = vmatpush2.bf16.msra.mxu0 0
    %723 = vmatprep.subr.bf16.mxu0 0
    %724 = vmatpush2.bf16.msra.mxu0 0
    %725 = vmatprep.subr.bf16.mxu0 0
    %726 = vmatpush2.bf16.msra.mxu0 0
    %727 = vmatprep.subr.bf16.mxu0 0
    %728 = vmatpush2.bf16.msra.mxu0 0
    %729 = vmatprep.subr.bf16.mxu0 0
    %730 = vmatpush2.bf16.msra.mxu0 0
    %731 = vmatprep.mubr.bf16.mxu0 0
    %732 = vmatmul.mubr.bf16.gmra.mxu0 %v497
    %v733 = vpop.f32.mrf.mxu0
    %v734 = vadd.f32 0.0, %v733
    %v735 = vpop.f32.mrf.mxu0
    %v736 = vadd.f32 0.0, %v735
    %v737 = vpop.f32.mrf.mxu0
    %v738 = vpop.f32.mrf.mxu0
    %739 = vdwg.mxu0
    %v740 = vld [vmem:[#allocation2] sm:$0xff]
    %v741 = vld [vmem:[#allocation2 + $0x8] sm:$0xff]
    %v742 = vunpack.c.l.bf16 %v740
    %v743 = vunpack.c.h.bf16 %v740
    %v744 = vunpack.c.l.bf16 %v741
    %v745 = vunpack.c.h.bf16 %v741
    %v746 = vadd.f32 %v742, %v693
    %v747 = vadd.f32 %v743, %v695
    %v748 = vadd.f32 %v744, %v734
    %v749 = vadd.f32 %v745, %v736
    %v750 = vxor.u32 %v746, 2147483648
    %v751 = vmul.f32 %v750, 1.442695
    %v752 = vpow.pop %v751
    %v753 = vadd.f32 %v752, 1.0
    %v754 = vrcp.pop %v753
    %v755 = vmul.f32 1.0, %v754
    %v756 = vxor.u32 %v747, 2147483648
    %v757 = vmul.f32 %v756, 1.442695
    %v758 = vpow.pop %v757
    %v759 = vadd.f32 %v758, 1.0
    %v760 = vrcp.pop %v759
    %v761 = vmul.f32 1.0, %v760
    %v762 = vtanh.pop %v748
    %v763 = vxor.u32 %v749, 2147483648
    %v764 = vmul.f32 %v763, 1.442695
    %v765 = vpow.pop %v764
    %v766 = vadd.f32 %v765, 1.0
    %v767 = vrcp.pop %v766
    %v768 = vmul.f32 1.0, %v767
    %v769 = vld [vmem:[#allocation4] sm:$0xff]
    %v770 = vmul.f32 %v761, %v769
    %v771 = vmul.f32 %v755, %v762
    %v772 = vadd.f32 %v770, %v771
    %v773 = vtanh.pop %v772
    %v774 = vmul.f32 %v768, %v773
    %775 = vst [vmem:[#allocation4] sm:$0xff] %v772
    %776 = vst [vmem:[#allocation3] sm:$0xff] %v774
    %v777 = vpack.c.bf16 %v774, %v774
    %778 = vst [vmem:[%s4] sm:$0xf] %v777
    %v779 = vld [vmem:[#allocation3] sm:$0xff]
    %v780 = vpack.c.bf16 %v779, %v779
    %781 = vmatprep.subr.bf16.mxu0 %v623
    %782 = vmatpush1.bf16.msra.mxu0 %v622
    %783 = vmatprep.subr.bf16.mxu0 %v619
    %784 = vmatpush1.bf16.msra.mxu0 %v618
    %785 = vmatprep.subr.bf16.mxu0 %v615
    %786 = vmatpush1.bf16.msra.mxu0 %v614
    %787 = vmatprep.subr.bf16.mxu0 %v611
    %788 = vmatpush1.bf16.msra.mxu0 %v610
    %789 = vmatprep.subr.bf16.mxu0 %v607
    %790 = vmatpush1.bf16.msra.mxu0 %v606
    %791 = vmatprep.subr.bf16.mxu0 %v603
    %792 = vmatpush1.bf16.msra.mxu0 %v602
    %793 = vmatprep.subr.bf16.mxu0 %v599
    %794 = vmatpush1.bf16.msra.mxu0 %v598
    %795 = vmatprep.subr.bf16.mxu0 %v595
    %796 = vmatpush1.bf16.msra.mxu0 %v594
    %797 = vmatprep.subr.bf16.mxu0 0
    %798 = vmatpush2.bf16.msra.mxu0 0
    %799 = vmatprep.subr.bf16.mxu0 0
    %800 = vmatpush2.bf16.msra.mxu0 0
    %801 = vmatprep.subr.bf16.mxu0 0
    %802 = vmatpush2.bf16.msra.mxu0 0
    %803 = vmatprep.subr.bf16.mxu0 0
    %804 = vmatpush2.bf16.msra.mxu0 0
    %805 = vmatprep.subr.bf16.mxu0 0
    %806 = vmatpush2.bf16.msra.mxu0 0
    %807 = vmatprep.subr.bf16.mxu0 0
    %808 = vmatpush2.bf16.msra.mxu0 0
    %809 = vmatprep.subr.bf16.mxu0 0
    %810 = vmatpush2.bf16.msra.mxu0 0
    %811 = vmatprep.subr.bf16.mxu0 0
    %812 = vmatpush2.bf16.msra.mxu0 0
    %813 = vmatprep.mubr.bf16.mxu0 0
    %814 = vmatmul.mubr.bf16.gmra.mxu0 %v780
    %v815 = vpop.f32.mrf.mxu0
    %v816 = vadd.f32 0.0, %v815
    %v817 = vpop.f32.mrf.mxu0
    %v818 = vadd.f32 0.0, %v817
    %v819 = vpop.f32.mrf.mxu0
    %v820 = vpop.f32.mrf.mxu0
    %821 = vdwg.mxu0
    %822 = vmatprep.subr.bf16.mxu0 %v625
    %823 = vmatpush1.bf16.msra.mxu0 %v624
    %824 = vmatprep.subr.bf16.mxu0 %v621
    %825 = vmatpush1.bf16.msra.mxu0 %v620
    %826 = vmatprep.subr.bf16.mxu0 %v617
    %827 = vmatpush1.bf16.msra.mxu0 %v616
    %828 = vmatprep.subr.bf16.mxu0 %v613
    %829 = vmatpush1.bf16.msra.mxu0 %v612
    %830 = vmatprep.subr.bf16.mxu0 %v609
    %831 = vmatpush1.bf16.msra.mxu0 %v608
    %832 = vmatprep.subr.bf16.mxu0 %v605
    %833 = vmatpush1.bf16.msra.mxu0 %v604
    %834 = vmatprep.subr.bf16.mxu0 %v601
    %835 = vmatpush1.bf16.msra.mxu0 %v600
    %836 = vmatprep.subr.bf16.mxu0 %v597
    %837 = vmatpush1.bf16.msra.mxu0 %v596
    %838 = vmatprep.subr.bf16.mxu0 0
    %839 = vmatpush2.bf16.msra.mxu0 0
    %840 = vmatprep.subr.bf16.mxu0 0
    %841 = vmatpush2.bf16.msra.mxu0 0
    %842 = vmatprep.subr.bf16.mxu0 0
    %843 = vmatpush2.bf16.msra.mxu0 0
    %844 = vmatprep.subr.bf16.mxu0 0
    %845 = vmatpush2.bf16.msra.mxu0 0
    %846 = vmatprep.subr.bf16.mxu0 0
    %847 = vmatpush2.bf16.msra.mxu0 0
    %848 = vmatprep.subr.bf16.mxu0 0
    %849 = vmatpush2.bf16.msra.mxu0 0
    %850 = vmatprep.subr.bf16.mxu0 0
    %851 = vmatpush2.bf16.msra.mxu0 0
    %852 = vmatprep.subr.bf16.mxu0 0
    %853 = vmatpush2.bf16.msra.mxu0 0
    %854 = vmatprep.mubr.bf16.mxu0 0
    %855 = vmatmul.mubr.bf16.gmra.mxu0 %v780
    %v856 = vpop.f32.mrf.mxu0
    %v857 = vadd.f32 0.0, %v856
    %v858 = vpop.f32.mrf.mxu0
    %v859 = vadd.f32 0.0, %v858
    %v860 = vpop.f32.mrf.mxu0
    %v861 = vpop.f32.mrf.mxu0
    %862 = vdwg.mxu0
    %s863 = scalar_lea.vmem [#allocation2], 16
    %v864 = vld [vmem:[%s863] sm:$0xff]
    %v865 = vld [vmem:[%s863 + $0x8] sm:$0xff]
    %v866 = vunpack.c.l.bf16 %v864
    %v867 = vunpack.c.h.bf16 %v864
    %v868 = vunpack.c.l.bf16 %v865
    %v869 = vunpack.c.h.bf16 %v865
    %v870 = vadd.f32 %v866, %v816
    %v871 = vadd.f32 %v867, %v818
    %v872 = vadd.f32 %v868, %v857
    %v873 = vadd.f32 %v869, %v859
    %v874 = vxor.u32 %v870, 2147483648
    %v875 = vmul.f32 %v874, 1.442695
    %v876 = vpow.pop %v875
    %v877 = vadd.f32 %v876, 1.0
    %v878 = vrcp.pop %v877
    %v879 = vmul.f32 1.0, %v878
    %v880 = vxor.u32 %v871, 2147483648
    %v881 = vmul.f32 %v880, 1.442695
    %v882 = vpow.pop %v881
    %v883 = vadd.f32 %v882, 1.0
    %v884 = vrcp.pop %v883
    %v885 = vmul.f32 1.0, %v884
    %v886 = vtanh.pop %v872
    %v887 = vxor.u32 %v873, 2147483648
    %v888 = vmul.f32 %v887, 1.442695
    %v889 = vpow.pop %v888
    %v890 = vadd.f32 %v889, 1.0
    %v891 = vrcp.pop %v890
    %v892 = vmul.f32 1.0, %v891
    %v893 = vld [vmem:[#allocation4] sm:$0xff]
    %v894 = vmul.f32 %v885, %v893
    %v895 = vmul.f32 %v879, %v886
    %v896 = vadd.f32 %v894, %v895
    %v897 = vtanh.pop %v896
    %v898 = vmul.f32 %v892, %v897
    %899 = vst [vmem:[#allocation4] sm:$0xff] %v896
    %900 = vst [vmem:[#allocation3] sm:$0xff] %v898
    %v901 = vpack.c.bf16 %v898, %v898
    %s902 = scalar_lea.vmem %s4, 4
    %903 = vst [vmem:[%s902] sm:$0xf] %v901
    %v904 = vld [vmem:[#allocation3] sm:$0xff]
    %v905 = vpack.c.bf16 %v904, %v904
    %906 = vmatprep.subr.bf16.mxu0 %v623
    %907 = vmatpush1.bf16.msra.mxu0 %v622
    %908 = vmatprep.subr.bf16.mxu0 %v619
    %909 = vmatpush1.bf16.msra.mxu0 %v618
    %910 = vmatprep.subr.bf16.mxu0 %v615
    %911 = vmatpush1.bf16.msra.mxu0 %v614
    %912 = vmatprep.subr.bf16.mxu0 %v611
    %913 = vmatpush1.bf16.msra.mxu0 %v610
    %914 = vmatprep.subr.bf16.mxu0 %v607
    %915 = vmatpush1.bf16.msra.mxu0 %v606
    %916 = vmatprep.subr.bf16.mxu0 %v603
    %917 = vmatpush1.bf16.msra.mxu0 %v602
    %918 = vmatprep.subr.bf16.mxu0 %v599
    %919 = vmatpush1.bf16.msra.mxu0 %v598
    %920 = vmatprep.subr.bf16.mxu0 %v595
    %921 = vmatpush1.bf16.msra.mxu0 %v594
    %922 = vmatprep.subr.bf16.mxu0 0
    %923 = vmatpush2.bf16.msra.mxu0 0
    %924 = vmatprep.subr.bf16.mxu0 0
    %925 = vmatpush2.bf16.msra.mxu0 0
    %926 = vmatprep.subr.bf16.mxu0 0
    %927 = vmatpush2.bf16.msra.mxu0 0
    %928 = vmatprep.subr.bf16.mxu0 0
    %929 = vmatpush2.bf16.msra.mxu0 0
    %930 = vmatprep.subr.bf16.mxu0 0
    %931 = vmatpush2.bf16.msra.mxu0 0
    %932 = vmatprep.subr.bf16.mxu0 0
    %933 = vmatpush2.bf16.msra.mxu0 0
    %934 = vmatprep.subr.bf16.mxu0 0
    %935 = vmatpush2.bf16.msra.mxu0 0
    %936 = vmatprep.subr.bf16.mxu0 0
    %937 = vmatpush2.bf16.msra.mxu0 0
    %938 = vmatprep.mubr.bf16.mxu0 0
    %939 = vmatmul.mubr.bf16.gmra.mxu0 %v905
    %v940 = vpop.f32.mrf.mxu0
    %v941 = vadd.f32 0.0, %v940
    %v942 = vpop.f32.mrf.mxu0
    %v943 = vadd.f32 0.0, %v942
    %v944 = vpop.f32.mrf.mxu0
    %v945 = vpop.f32.mrf.mxu0
    %946 = vdwg.mxu0
    %947 = vmatprep.subr.bf16.mxu0 %v625
    %948 = vmatpush1.bf16.msra.mxu0 %v624
    %949 = vmatprep.subr.bf16.mxu0 %v621
    %950 = vmatpush1.bf16.msra.mxu0 %v620
    %951 = vmatprep.subr.bf16.mxu0 %v617
    %952 = vmatpush1.bf16.msra.mxu0 %v616
    %953 = vmatprep.subr.bf16.mxu0 %v613
    %954 = vmatpush1.bf16.msra.mxu0 %v612
    %955 = vmatprep.subr.bf16.mxu0 %v609
    %956 = vmatpush1.bf16.msra.mxu0 %v608
    %957 = vmatprep.subr.bf16.mxu0 %v605
    %958 = vmatpush1.bf16.msra.mxu0 %v604
    %959 = vmatprep.subr.bf16.mxu0 %v601
    %960 = vmatpush1.bf16.msra.mxu0 %v600
    %961 = vmatprep.subr.bf16.mxu0 %v597
    %962 = vmatpush1.bf16.msra.mxu0 %v596
    %963 = vmatprep.subr.bf16.mxu0 0
    %964 = vmatpush2.bf16.msra.mxu0 0
    %965 = vmatprep.subr.bf16.mxu0 0
    %966 = vmatpush2.bf16.msra.mxu0 0
    %967 = vmatprep.subr.bf16.mxu0 0
    %968 = vmatpush2.bf16.msra.mxu0 0
    %969 = vmatprep.subr.bf16.mxu0 0
    %970 = vmatpush2.bf16.msra.mxu0 0
    %971 = vmatprep.subr.bf16.mxu0 0
    %972 = vmatpush2.bf16.msra.mxu0 0
    %973 = vmatprep.subr.bf16.mxu0 0
    %974 = vmatpush2.bf16.msra.mxu0 0
    %975 = vmatprep.subr.bf16.mxu0 0
    %976 = vmatpush2.bf16.msra.mxu0 0
    %977 = vmatprep.subr.bf16.mxu0 0
    %978 = vmatpush2.bf16.msra.mxu0 0
    %979 = vmatprep.mubr.bf16.mxu0 0
    %980 = vmatmul.mubr.bf16.gmra.mxu0 %v905
    %v981 = vpop.f32.mrf.mxu0
    %v982 = vadd.f32 0.0, %v981
    %v983 = vpop.f32.mrf.mxu0
    %v984 = vadd.f32 0.0, %v983
    %v985 = vpop.f32.mrf.mxu0
    %v986 = vpop.f32.mrf.mxu0
    %987 = vdwg.mxu0
    %s988 = scalar_lea.vmem [#allocation2], 32
    %v989 = vld [vmem:[%s988] sm:$0xff]
    %v990 = vld [vmem:[%s988 + $0x8] sm:$0xff]
    %v991 = vunpack.c.l.bf16 %v989
    %v992 = vunpack.c.h.bf16 %v989
    %v993 = vunpack.c.l.bf16 %v990
    %v994 = vunpack.c.h.bf16 %v990
    %v995 = vadd.f32 %v991, %v941
    %v996 = vadd.f32 %v992, %v943
    %v997 = vadd.f32 %v993, %v982
    %v998 = vadd.f32 %v994, %v984
    %v999 = vxor.u32 %v995, 2147483648
    %v1000 = vmul.f32 %v999, 1.442695
    %v1001 = vpow.pop %v1000
    %v1002 = vadd.f32 %v1001, 1.0
    %v1003 = vrcp.pop %v1002
    %v1004 = vmul.f32 1.0, %v1003
    %v1005 = vxor.u32 %v996, 2147483648
    %v1006 = vmul.f32 %v1005, 1.442695
    %v1007 = vpow.pop %v1006
    %v1008 = vadd.f32 %v1007, 1.0
    %v1009 = vrcp.pop %v1008
    %v1010 = vmul.f32 1.0, %v1009
    %v1011 = vtanh.pop %v997
    %v1012 = vxor.u32 %v998, 2147483648
    %v1013 = vmul.f32 %v1012, 1.442695
    %v1014 = vpow.pop %v1013
    %v1015 = vadd.f32 %v1014, 1.0
    %v1016 = vrcp.pop %v1015
    %v1017 = vmul.f32 1.0, %v1016
    %v1018 = vld [vmem:[#allocation4] sm:$0xff]
    %v1019 = vmul.f32 %v1010, %v1018
    %v1020 = vmul.f32 %v1004, %v1011
    %v1021 = vadd.f32 %v1019, %v1020
    %v1022 = vtanh.pop %v1021
    %v1023 = vmul.f32 %v1017, %v1022
    %1024 = vst [vmem:[#allocation4] sm:$0xff] %v1021
    %1025 = vst [vmem:[#allocation3] sm:$0xff] %v1023
    %v1026 = vpack.c.bf16 %v1023, %v1023
    %s1027 = scalar_lea.vmem %s4, 8
    %1028 = vst [vmem:[%s1027] sm:$0xf] %v1026
    %v1029 = vld [vmem:[#allocation3] sm:$0xff]
    %v1030 = vpack.c.bf16 %v1029, %v1029
    %1031 = vmatprep.subr.bf16.mxu0 %v623
    %1032 = vmatpush1.bf16.msra.mxu0 %v622
    %1033 = vmatprep.subr.bf16.mxu0 %v619
    %1034 = vmatpush1.bf16.msra.mxu0 %v618
    %1035 = vmatprep.subr.bf16.mxu0 %v615
    %1036 = vmatpush1.bf16.msra.mxu0 %v614
    %1037 = vmatprep.subr.bf16.mxu0 %v611
    %1038 = vmatpush1.bf16.msra.mxu0 %v610
    %1039 = vmatprep.subr.bf16.mxu0 %v607
    %1040 = vmatpush1.bf16.msra.mxu0 %v606
    %1041 = vmatprep.subr.bf16.mxu0 %v603
    %1042 = vmatpush1.bf16.msra.mxu0 %v602
    %1043 = vmatprep.subr.bf16.mxu0 %v599
    %1044 = vmatpush1.bf16.msra.mxu0 %v598
    %1045 = vmatprep.subr.bf16.mxu0 %v595
    %1046 = vmatpush1.bf16.msra.mxu0 %v594
    %1047 = vmatprep.subr.bf16.mxu0 0
    %1048 = vmatpush2.bf16.msra.mxu0 0
    %1049 = vmatprep.subr.bf16.mxu0 0
    %1050 = vmatpush2.bf16.msra.mxu0 0
    %1051 = vmatprep.subr.bf16.mxu0 0
    %1052 = vmatpush2.bf16.msra.mxu0 0
    %1053 = vmatprep.subr.bf16.mxu0 0
    %1054 = vmatpush2.bf16.msra.mxu0 0
    %1055 = vmatprep.subr.bf16.mxu0 0
    %1056 = vmatpush2.bf16.msra.mxu0 0
    %1057 = vmatprep.subr.bf16.mxu0 0
    %1058 = vmatpush2.bf16.msra.mxu0 0
    %1059 = vmatprep.subr.bf16.mxu0 0
    %1060 = vmatpush2.bf16.msra.mxu0 0
    %1061 = vmatprep.subr.bf16.mxu0 0
    %1062 = vmatpush2.bf16.msra.mxu0 0
    %1063 = vmatprep.mubr.bf16.mxu0 0
    %1064 = vmatmul.mubr.bf16.gmra.mxu0 %v1030
    %v1065 = vpop.f32.mrf.mxu0
    %v1066 = vadd.f32 0.0, %v1065
    %v1067 = vpop.f32.mrf.mxu0
    %v1068 = vadd.f32 0.0, %v1067
    %v1069 = vpop.f32.mrf.mxu0
    %v1070 = vpop.f32.mrf.mxu0
    %1071 = vdwg.mxu0
    %1072 = vmatprep.subr.bf16.mxu0 %v625
    %1073 = vmatpush1.bf16.msra.mxu0 %v624
    %1074 = vmatprep.subr.bf16.mxu0 %v621
    %1075 = vmatpush1.bf16.msra.mxu0 %v620
    %1076 = vmatprep.subr.bf16.mxu0 %v617
    %1077 = vmatpush1.bf16.msra.mxu0 %v616
    %1078 = vmatprep.subr.bf16.mxu0 %v613
    %1079 = vmatpush1.bf16.msra.mxu0 %v612
    %1080 = vmatprep.subr.bf16.mxu0 %v609
    %1081 = vmatpush1.bf16.msra.mxu0 %v608
    %1082 = vmatprep.subr.bf16.mxu0 %v605
    %1083 = vmatpush1.bf16.msra.mxu0 %v604
    %1084 = vmatprep.subr.bf16.mxu0 %v601
    %1085 = vmatpush1.bf16.msra.mxu0 %v600
    %1086 = vmatprep.subr.bf16.mxu0 %v597
    %1087 = vmatpush1.bf16.msra.mxu0 %v596
    %1088 = vmatprep.subr.bf16.mxu0 0
    %1089 = vmatpush2.bf16.msra.mxu0 0
    %1090 = vmatprep.subr.bf16.mxu0 0
    %1091 = vmatpush2.bf16.msra.mxu0 0
    %1092 = vmatprep.subr.bf16.mxu0 0
    %1093 = vmatpush2.bf16.msra.mxu0 0
    %1094 = vmatprep.subr.bf16.mxu0 0
    %1095 = vmatpush2.bf16.msra.mxu0 0
    %1096 = vmatprep.subr.bf16.mxu0 0
    %1097 = vmatpush2.bf16.msra.mxu0 0
    %1098 = vmatprep.subr.bf16.mxu0 0
    %1099 = vmatpush2.bf16.msra.mxu0 0
    %1100 = vmatprep.subr.bf16.mxu0 0
    %1101 = vmatpush2.bf16.msra.mxu0 0
    %1102 = vmatprep.subr.bf16.mxu0 0
    %1103 = vmatpush2.bf16.msra.mxu0 0
    %1104 = vmatprep.mubr.bf16.mxu0 0
    %1105 = vmatmul.mubr.bf16.gmra.mxu0 %v1030
    %v1106 = vpop.f32.mrf.mxu0
    %v1107 = vadd.f32 0.0, %v1106
    %v1108 = vpop.f32.mrf.mxu0
    %v1109 = vadd.f32 0.0, %v1108
    %v1110 = vpop.f32.mrf.mxu0
    %v1111 = vpop.f32.mrf.mxu0
    %1112 = vdwg.mxu0
    %s1113 = scalar_lea.vmem [#allocation2], 48
    %v1114 = vld [vmem:[%s1113] sm:$0xff]
    %v1115 = vld [vmem:[%s1113 + $0x8] sm:$0xff]
    %v1116 = vunpack.c.l.bf16 %v1114
    %v1117 = vunpack.c.h.bf16 %v1114
    %v1118 = vunpack.c.l.bf16 %v1115
    %v1119 = vunpack.c.h.bf16 %v1115
    %v1120 = vadd.f32 %v1116, %v1066
    %v1121 = vadd.f32 %v1117, %v1068
    %v1122 = vadd.f32 %v1118, %v1107
    %v1123 = vadd.f32 %v1119, %v1109
    %v1124 = vxor.u32 %v1120, 2147483648
    %v1125 = vmul.f32 %v1124, 1.442695
    %v1126 = vpow.pop %v1125
    %v1127 = vadd.f32 %v1126, 1.0
    %v1128 = vrcp.pop %v1127
    %v1129 = vmul.f32 1.0, %v1128
    %v1130 = vxor.u32 %v1121, 2147483648
    %v1131 = vmul.f32 %v1130, 1.442695
    %v1132 = vpow.pop %v1131
    %v1133 = vadd.f32 %v1132, 1.0
    %v1134 = vrcp.pop %v1133
    %v1135 = vmul.f32 1.0, %v1134
    %v1136 = vtanh.pop %v1122
    %v1137 = vxor.u32 %v1123, 2147483648
    %v1138 = vmul.f32 %v1137, 1.442695
    %v1139 = vpow.pop %v1138
    %v1140 = vadd.f32 %v1139, 1.0
    %v1141 = vrcp.pop %v1140
    %v1142 = vmul.f32 1.0, %v1141
    %v1143 = vld [vmem:[#allocation4] sm:$0xff]
    %v1144 = vmul.f32 %v1135, %v1143
    %v1145 = vmul.f32 %v1129, %v1136
    %v1146 = vadd.f32 %v1144, %v1145
    %v1147 = vtanh.pop %v1146
    %v1148 = vmul.f32 %v1142, %v1147
    %1149 = vst [vmem:[#allocation4] sm:$0xff] %v1146
    %1150 = vst [vmem:[#allocation3] sm:$0xff] %v1148
    %v1151 = vpack.c.bf16 %v1148, %v1148
    %s1152 = scalar_lea.vmem %s4, 12
    %1153 = vst [vmem:[%s1152] sm:$0xf] %v1151
    %v1154 = vld [vmem:[#allocation3] sm:$0xff]
    %v1155 = vpack.c.bf16 %v1154, %v1154
    %1156 = vmatprep.subr.bf16.mxu0 %v623
    %1157 = vmatpush1.bf16.msra.mxu0 %v622
    %1158 = vmatprep.subr.bf16.mxu0 %v619
    %1159 = vmatpush1.bf16.msra.mxu0 %v618
    %1160 = vmatprep.subr.bf16.mxu0 %v615
    %1161 = vmatpush1.bf16.msra.mxu0 %v614
    %1162 = vmatprep.subr.bf16.mxu0 %v611
    %1163 = vmatpush1.bf16.msra.mxu0 %v610
    %1164 = vmatprep.subr.bf16.mxu0 %v607
    %1165 = vmatpush1.bf16.msra.mxu0 %v606
    %1166 = vmatprep.subr.bf16.mxu0 %v603
    %1167 = vmatpush1.bf16.msra.mxu0 %v602
    %1168 = vmatprep.subr.bf16.mxu0 %v599
    %1169 = vmatpush1.bf16.msra.mxu0 %v598
    %1170 = vmatprep.subr.bf16.mxu0 %v595
    %1171 = vmatpush1.bf16.msra.mxu0 %v594
    %1172 = vmatprep.subr.bf16.mxu0 0
    %1173 = vmatpush2.bf16.msra.mxu0 0
    %1174 = vmatprep.subr.bf16.mxu0 0
    %1175 = vmatpush2.bf16.msra.mxu0 0
    %1176 = vmatprep.subr.bf16.mxu0 0
    %1177 = vmatpush2.bf16.msra.mxu0 0
    %1178 = vmatprep.subr.bf16.mxu0 0
    %1179 = vmatpush2.bf16.msra.mxu0 0
    %1180 = vmatprep.subr.bf16.mxu0 0
    %1181 = vmatpush2.bf16.msra.mxu0 0
    %1182 = vmatprep.subr.bf16.mxu0 0
    %1183 = vmatpush2.bf16.msra.mxu0 0
    %1184 = vmatprep.subr.bf16.mxu0 0
    %1185 = vmatpush2.bf16.msra.mxu0 0
    %1186 = vmatprep.subr.bf16.mxu0 0
    %1187 = vmatpush2.bf16.msra.mxu0 0
    %1188 = vmatprep.mubr.bf16.mxu0 0
    %1189 = vmatmul.mubr.bf16.gmra.mxu0 %v1155
    %v1190 = vpop.f32.mrf.mxu0
    %v1191 = vadd.f32 0.0, %v1190
    %v1192 = vpop.f32.mrf.mxu0
    %v1193 = vadd.f32 0.0, %v1192
    %v1194 = vpop.f32.mrf.mxu0
    %v1195 = vpop.f32.mrf.mxu0
    %1196 = vdwg.mxu0
    %1197 = vmatprep.subr.bf16.mxu0 %v625
    %1198 = vmatpush1.bf16.msra.mxu0 %v624
    %1199 = vmatprep.subr.bf16.mxu0 %v621
    %1200 = vmatpush1.bf16.msra.mxu0 %v620
    %1201 = vmatprep.subr.bf16.mxu0 %v617
    %1202 = vmatpush1.bf16.msra.mxu0 %v616
    %1203 = vmatprep.subr.bf16.mxu0 %v613
    %1204 = vmatpush1.bf16.msra.mxu0 %v612
    %1205 = vmatprep.subr.bf16.mxu0 %v609
    %1206 = vmatpush1.bf16.msra.mxu0 %v608
    %1207 = vmatprep.subr.bf16.mxu0 %v605
    %1208 = vmatpush1.bf16.msra.mxu0 %v604
    %1209 = vmatprep.subr.bf16.mxu0 %v601
    %1210 = vmatpush1.bf16.msra.mxu0 %v600
    %1211 = vmatprep.subr.bf16.mxu0 %v597
    %1212 = vmatpush1.bf16.msra.mxu0 %v596
    %1213 = vmatprep.subr.bf16.mxu0 0
    %1214 = vmatpush2.bf16.msra.mxu0 0
    %1215 = vmatprep.subr.bf16.mxu0 0
    %1216 = vmatpush2.bf16.msra.mxu0 0
    %1217 = vmatprep.subr.bf16.mxu0 0
    %1218 = vmatpush2.bf16.msra.mxu0 0
    %1219 = vmatprep.subr.bf16.mxu0 0
    %1220 = vmatpush2.bf16.msra.mxu0 0
    %1221 = vmatprep.subr.bf16.mxu0 0
    %1222 = vmatpush2.bf16.msra.mxu0 0
    %1223 = vmatprep.subr.bf16.mxu0 0
    %1224 = vmatpush2.bf16.msra.mxu0 0
    %1225 = vmatprep.subr.bf16.mxu0 0
    %1226 = vmatpush2.bf16.msra.mxu0 0
    %1227 = vmatprep.subr.bf16.mxu0 0
    %1228 = vmatpush2.bf16.msra.mxu0 0
    %1229 = vmatprep.mubr.bf16.mxu0 0
    %1230 = vmatmul.mubr.bf16.gmra.mxu0 %v1155
    %v1231 = vpop.f32.mrf.mxu0
    %v1232 = vadd.f32 0.0, %v1231
    %v1233 = vpop.f32.mrf.mxu0
    %v1234 = vadd.f32 0.0, %v1233
    %v1235 = vpop.f32.mrf.mxu0
    %v1236 = vpop.f32.mrf.mxu0
    %1237 = vdwg.mxu0
    %s1238 = scalar_lea.vmem [#allocation2], 64
    %v1239 = vld [vmem:[%s1238] sm:$0xff]
    %v1240 = vld [vmem:[%s1238 + $0x8] sm:$0xff]
    %v1241 = vunpack.c.l.bf16 %v1239
    %v1242 = vunpack.c.h.bf16 %v1239
    %v1243 = vunpack.c.l.bf16 %v1240
    %v1244 = vunpack.c.h.bf16 %v1240
    %v1245 = vadd.f32 %v1241, %v1191
    %v1246 = vadd.f32 %v1242, %v1193
    %v1247 = vadd.f32 %v1243, %v1232
    %v1248 = vadd.f32 %v1244, %v1234
    %v1249 = vxor.u32 %v1245, 2147483648
    %v1250 = vmul.f32 %v1249, 1.442695
    %v1251 = vpow.pop %v1250
    %v1252 = vadd.f32 %v1251, 1.0
    %v1253 = vrcp.pop %v1252
    %v1254 = vmul.f32 1.0, %v1253
    %v1255 = vxor.u32 %v1246, 2147483648
    %v1256 = vmul.f32 %v1255, 1.442695
    %v1257 = vpow.pop %v1256
    %v1258 = vadd.f32 %v1257, 1.0
    %v1259 = vrcp.pop %v1258
    %v1260 = vmul.f32 1.0, %v1259
    %v1261 = vtanh.pop %v1247
    %v1262 = vxor.u32 %v1248, 2147483648
    %v1263 = vmul.f32 %v1262, 1.442695
    %v1264 = vpow.pop %v1263
    %v1265 = vadd.f32 %v1264, 1.0
    %v1266 = vrcp.pop %v1265
    %v1267 = vmul.f32 1.0, %v1266
    %v1268 = vld [vmem:[#allocation4] sm:$0xff]
    %v1269 = vmul.f32 %v1260, %v1268
    %v1270 = vmul.f32 %v1254, %v1261
    %v1271 = vadd.f32 %v1269, %v1270
    %v1272 = vtanh.pop %v1271
    %v1273 = vmul.f32 %v1267, %v1272
    %1274 = vst [vmem:[#allocation4] sm:$0xff] %v1271
    %1275 = vst [vmem:[#allocation3] sm:$0xff] %v1273
    %v1276 = vpack.c.bf16 %v1273, %v1273
    %s1277 = scalar_lea.vmem %s4, 16
    %1278 = vst [vmem:[%s1277] sm:$0xf] %v1276
    %v1279 = vld [vmem:[#allocation3] sm:$0xff]
    %v1280 = vpack.c.bf16 %v1279, %v1279
    %1281 = vmatprep.subr.bf16.mxu0 %v623
    %1282 = vmatpush1.bf16.msra.mxu0 %v622
    %1283 = vmatprep.subr.bf16.mxu0 %v619
    %1284 = vmatpush1.bf16.msra.mxu0 %v618
    %1285 = vmatprep.subr.bf16.mxu0 %v615
    %1286 = vmatpush1.bf16.msra.mxu0 %v614
    %1287 = vmatprep.subr.bf16.mxu0 %v611
    %1288 = vmatpush1.bf16.msra.mxu0 %v610
    %1289 = vmatprep.subr.bf16.mxu0 %v607
    %1290 = vmatpush1.bf16.msra.mxu0 %v606
    %1291 = vmatprep.subr.bf16.mxu0 %v603
    %1292 = vmatpush1.bf16.msra.mxu0 %v602
    %1293 = vmatprep.subr.bf16.mxu0 %v599
    %1294 = vmatpush1.bf16.msra.mxu0 %v598
    %1295 = vmatprep.subr.bf16.mxu0 %v595
    %1296 = vmatpush1.bf16.msra.mxu0 %v594
    %1297 = vmatprep.subr.bf16.mxu0 0
    %1298 = vmatpush2.bf16.msra.mxu0 0
    %1299 = vmatprep.subr.bf16.mxu0 0
    %1300 = vmatpush2.bf16.msra.mxu0 0
    %1301 = vmatprep.subr.bf16.mxu0 0
    %1302 = vmatpush2.bf16.msra.mxu0 0
    %1303 = vmatprep.subr.bf16.mxu0 0
    %1304 = vmatpush2.bf16.msra.mxu0 0
    %1305 = vmatprep.subr.bf16.mxu0 0
    %1306 = vmatpush2.bf16.msra.mxu0 0
    %1307 = vmatprep.subr.bf16.mxu0 0
    %1308 = vmatpush2.bf16.msra.mxu0 0
    %1309 = vmatprep.subr.bf16.mxu0 0
    %1310 = vmatpush2.bf16.msra.mxu0 0
    %1311 = vmatprep.subr.bf16.mxu0 0
    %1312 = vmatpush2.bf16.msra.mxu0 0
    %1313 = vmatprep.mubr.bf16.mxu0 0
    %1314 = vmatmul.mubr.bf16.gmra.mxu0 %v1280
    %v1315 = vpop.f32.mrf.mxu0
    %v1316 = vadd.f32 0.0, %v1315
    %v1317 = vpop.f32.mrf.mxu0
    %v1318 = vadd.f32 0.0, %v1317
    %v1319 = vpop.f32.mrf.mxu0
    %v1320 = vpop.f32.mrf.mxu0
    %1321 = vdwg.mxu0
    %1322 = vmatprep.subr.bf16.mxu0 %v625
    %1323 = vmatpush1.bf16.msra.mxu0 %v624
    %1324 = vmatprep.subr.bf16.mxu0 %v621
    %1325 = vmatpush1.bf16.msra.mxu0 %v620
    %1326 = vmatprep.subr.bf16.mxu0 %v617
    %1327 = vmatpush1.bf16.msra.mxu0 %v616
    %1328 = vmatprep.subr.bf16.mxu0 %v613
    %1329 = vmatpush1.bf16.msra.mxu0 %v612
    %1330 = vmatprep.subr.bf16.mxu0 %v609
    %1331 = vmatpush1.bf16.msra.mxu0 %v608
    %1332 = vmatprep.subr.bf16.mxu0 %v605
    %1333 = vmatpush1.bf16.msra.mxu0 %v604
    %1334 = vmatprep.subr.bf16.mxu0 %v601
    %1335 = vmatpush1.bf16.msra.mxu0 %v600
    %1336 = vmatprep.subr.bf16.mxu0 %v597
    %1337 = vmatpush1.bf16.msra.mxu0 %v596
    %1338 = vmatprep.subr.bf16.mxu0 0
    %1339 = vmatpush2.bf16.msra.mxu0 0
    %1340 = vmatprep.subr.bf16.mxu0 0
    %1341 = vmatpush2.bf16.msra.mxu0 0
    %1342 = vmatprep.subr.bf16.mxu0 0
    %1343 = vmatpush2.bf16.msra.mxu0 0
    %1344 = vmatprep.subr.bf16.mxu0 0
    %1345 = vmatpush2.bf16.msra.mxu0 0
    %1346 = vmatprep.subr.bf16.mxu0 0
    %1347 = vmatpush2.bf16.msra.mxu0 0
    %1348 = vmatprep.subr.bf16.mxu0 0
    %1349 = vmatpush2.bf16.msra.mxu0 0
    %1350 = vmatprep.subr.bf16.mxu0 0
    %1351 = vmatpush2.bf16.msra.mxu0 0
    %1352 = vmatprep.subr.bf16.mxu0 0
    %1353 = vmatpush2.bf16.msra.mxu0 0
    %1354 = vmatprep.mubr.bf16.mxu0 0
    %1355 = vmatmul.mubr.bf16.gmra.mxu0 %v1280
    %v1356 = vpop.f32.mrf.mxu0
    %v1357 = vadd.f32 0.0, %v1356
    %v1358 = vpop.f32.mrf.mxu0
    %v1359 = vadd.f32 0.0, %v1358
    %v1360 = vpop.f32.mrf.mxu0
    %v1361 = vpop.f32.mrf.mxu0
    %1362 = vdwg.mxu0
    %s1363 = scalar_lea.vmem [#allocation2], 80
    %v1364 = vld [vmem:[%s1363] sm:$0xff]
    %v1365 = vld [vmem:[%s1363 + $0x8] sm:$0xff]
    %v1366 = vunpack.c.l.bf16 %v1364
    %v1367 = vunpack.c.h.bf16 %v1364
    %v1368 = vunpack.c.l.bf16 %v1365
    %v1369 = vunpack.c.h.bf16 %v1365
    %v1370 = vadd.f32 %v1366, %v1316
    %v1371 = vadd.f32 %v1367, %v1318
    %v1372 = vadd.f32 %v1368, %v1357
    %v1373 = vadd.f32 %v1369, %v1359
    %v1374 = vxor.u32 %v1370, 2147483648
    %v1375 = vmul.f32 %v1374, 1.442695
    %v1376 = vpow.pop %v1375
    %v1377 = vadd.f32 %v1376, 1.0
    %v1378 = vrcp.pop %v1377
    %v1379 = vmul.f32 1.0, %v1378
    %v1380 = vxor.u32 %v1371, 2147483648
    %v1381 = vmul.f32 %v1380, 1.442695
    %v1382 = vpow.pop %v1381
    %v1383 = vadd.f32 %v1382, 1.0
    %v1384 = vrcp.pop %v1383
    %v1385 = vmul.f32 1.0, %v1384
    %v1386 = vtanh.pop %v1372
    %v1387 = vxor.u32 %v1373, 2147483648
    %v1388 = vmul.f32 %v1387, 1.442695
    %v1389 = vpow.pop %v1388
    %v1390 = vadd.f32 %v1389, 1.0
    %v1391 = vrcp.pop %v1390
    %v1392 = vmul.f32 1.0, %v1391
    %v1393 = vld [vmem:[#allocation4] sm:$0xff]
    %v1394 = vmul.f32 %v1385, %v1393
    %v1395 = vmul.f32 %v1379, %v1386
    %v1396 = vadd.f32 %v1394, %v1395
    %v1397 = vtanh.pop %v1396
    %v1398 = vmul.f32 %v1392, %v1397
    %1399 = vst [vmem:[#allocation4] sm:$0xff] %v1396
    %1400 = vst [vmem:[#allocation3] sm:$0xff] %v1398
    %v1401 = vpack.c.bf16 %v1398, %v1398
    %s1402 = scalar_lea.vmem %s4, 20
    %1403 = vst [vmem:[%s1402] sm:$0xf] %v1401
    %v1404 = vld [vmem:[#allocation3] sm:$0xff]
    %v1405 = vpack.c.bf16 %v1404, %v1404
    %1406 = vmatprep.subr.bf16.mxu0 %v623
    %1407 = vmatpush1.bf16.msra.mxu0 %v622
    %1408 = vmatprep.subr.bf16.mxu0 %v619
    %1409 = vmatpush1.bf16.msra.mxu0 %v618
    %1410 = vmatprep.subr.bf16.mxu0 %v615
    %1411 = vmatpush1.bf16.msra.mxu0 %v614
    %1412 = vmatprep.subr.bf16.mxu0 %v611
    %1413 = vmatpush1.bf16.msra.mxu0 %v610
    %1414 = vmatprep.subr.bf16.mxu0 %v607
    %1415 = vmatpush1.bf16.msra.mxu0 %v606
    %1416 = vmatprep.subr.bf16.mxu0 %v603
    %1417 = vmatpush1.bf16.msra.mxu0 %v602
    %1418 = vmatprep.subr.bf16.mxu0 %v599
    %1419 = vmatpush1.bf16.msra.mxu0 %v598
    %1420 = vmatprep.subr.bf16.mxu0 %v595
    %1421 = vmatpush1.bf16.msra.mxu0 %v594
    %1422 = vmatprep.subr.bf16.mxu0 0
    %1423 = vmatpush2.bf16.msra.mxu0 0
    %1424 = vmatprep.subr.bf16.mxu0 0
    %1425 = vmatpush2.bf16.msra.mxu0 0
    %1426 = vmatprep.subr.bf16.mxu0 0
    %1427 = vmatpush2.bf16.msra.mxu0 0
    %1428 = vmatprep.subr.bf16.mxu0 0
    %1429 = vmatpush2.bf16.msra.mxu0 0
    %1430 = vmatprep.subr.bf16.mxu0 0
    %1431 = vmatpush2.bf16.msra.mxu0 0
    %1432 = vmatprep.subr.bf16.mxu0 0
    %1433 = vmatpush2.bf16.msra.mxu0 0
    %1434 = vmatprep.subr.bf16.mxu0 0
    %1435 = vmatpush2.bf16.msra.mxu0 0
    %1436 = vmatprep.subr.bf16.mxu0 0
    %1437 = vmatpush2.bf16.msra.mxu0 0
    %1438 = vmatprep.mubr.bf16.mxu0 0
    %1439 = vmatmul.mubr.bf16.gmra.mxu0 %v1405
    %v1440 = vpop.f32.mrf.mxu0
    %v1441 = vadd.f32 0.0, %v1440
    %v1442 = vpop.f32.mrf.mxu0
    %v1443 = vadd.f32 0.0, %v1442
    %v1444 = vpop.f32.mrf.mxu0
    %v1445 = vpop.f32.mrf.mxu0
    %1446 = vdwg.mxu0
    %1447 = vmatprep.subr.bf16.mxu0 %v625
    %1448 = vmatpush1.bf16.msra.mxu0 %v624
    %1449 = vmatprep.subr.bf16.mxu0 %v621
    %1450 = vmatpush1.bf16.msra.mxu0 %v620
    %1451 = vmatprep.subr.bf16.mxu0 %v617
    %1452 = vmatpush1.bf16.msra.mxu0 %v616
    %1453 = vmatprep.subr.bf16.mxu0 %v613
    %1454 = vmatpush1.bf16.msra.mxu0 %v612
    %1455 = vmatprep.subr.bf16.mxu0 %v609
    %1456 = vmatpush1.bf16.msra.mxu0 %v608
    %1457 = vmatprep.subr.bf16.mxu0 %v605
    %1458 = vmatpush1.bf16.msra.mxu0 %v604
    %1459 = vmatprep.subr.bf16.mxu0 %v601
    %1460 = vmatpush1.bf16.msra.mxu0 %v600
    %1461 = vmatprep.subr.bf16.mxu0 %v597
    %1462 = vmatpush1.bf16.msra.mxu0 %v596
    %1463 = vmatprep.subr.bf16.mxu0 0
    %1464 = vmatpush2.bf16.msra.mxu0 0
    %1465 = vmatprep.subr.bf16.mxu0 0
    %1466 = vmatpush2.bf16.msra.mxu0 0
    %1467 = vmatprep.subr.bf16.mxu0 0
    %1468 = vmatpush2.bf16.msra.mxu0 0
    %1469 = vmatprep.subr.bf16.mxu0 0
    %1470 = vmatpush2.bf16.msra.mxu0 0
    %1471 = vmatprep.subr.bf16.mxu0 0
    %1472 = vmatpush2.bf16.msra.mxu0 0
    %1473 = vmatprep.subr.bf16.mxu0 0
    %1474 = vmatpush2.bf16.msra.mxu0 0
    %1475 = vmatprep.subr.bf16.mxu0 0
    %1476 = vmatpush2.bf16.msra.mxu0 0
    %1477 = vmatprep.subr.bf16.mxu0 0
    %1478 = vmatpush2.bf16.msra.mxu0 0
    %1479 = vmatprep.mubr.bf16.mxu0 0
    %1480 = vmatmul.mubr.bf16.gmra.mxu0 %v1405
    %v1481 = vpop.f32.mrf.mxu0
    %v1482 = vadd.f32 0.0, %v1481
    %v1483 = vpop.f32.mrf.mxu0
    %v1484 = vadd.f32 0.0, %v1483
    %v1485 = vpop.f32.mrf.mxu0
    %v1486 = vpop.f32.mrf.mxu0
    %1487 = vdwg.mxu0
    %s1488 = scalar_lea.vmem [#allocation2], 96
    %v1489 = vld [vmem:[%s1488] sm:$0xff]
    %v1490 = vld [vmem:[%s1488 + $0x8] sm:$0xff]
    %v1491 = vunpack.c.l.bf16 %v1489
    %v1492 = vunpack.c.h.bf16 %v1489
    %v1493 = vunpack.c.l.bf16 %v1490
    %v1494 = vunpack.c.h.bf16 %v1490
    %v1495 = vadd.f32 %v1491, %v1441
    %v1496 = vadd.f32 %v1492, %v1443
    %v1497 = vadd.f32 %v1493, %v1482
    %v1498 = vadd.f32 %v1494, %v1484
    %v1499 = vxor.u32 %v1495, 2147483648
    %v1500 = vmul.f32 %v1499, 1.442695
    %v1501 = vpow.pop %v1500
    %v1502 = vadd.f32 %v1501, 1.0
    %v1503 = vrcp.pop %v1502
    %v1504 = vmul.f32 1.0, %v1503
    %v1505 = vxor.u32 %v1496, 2147483648
    %v1506 = vmul.f32 %v1505, 1.442695
    %v1507 = vpow.pop %v1506
    %v1508 = vadd.f32 %v1507, 1.0
    %v1509 = vrcp.pop %v1508
    %v1510 = vmul.f32 1.0, %v1509
    %v1511 = vtanh.pop %v1497
    %v1512 = vxor.u32 %v1498, 2147483648
    %v1513 = vmul.f32 %v1512, 1.442695
    %v1514 = vpow.pop %v1513
    %v1515 = vadd.f32 %v1514, 1.0
    %v1516 = vrcp.pop %v1515
    %v1517 = vmul.f32 1.0, %v1516
    %v1518 = vld [vmem:[#allocation4] sm:$0xff]
    %v1519 = vmul.f32 %v1510, %v1518
    %v1520 = vmul.f32 %v1504, %v1511
    %v1521 = vadd.f32 %v1519, %v1520
    %v1522 = vtanh.pop %v1521
    %v1523 = vmul.f32 %v1517, %v1522
    %1524 = vst [vmem:[#allocation4] sm:$0xff] %v1521
    %1525 = vst [vmem:[#allocation3] sm:$0xff] %v1523
    %v1526 = vpack.c.bf16 %v1523, %v1523
    %s1527 = scalar_lea.vmem %s4, 24
    %1528 = vst [vmem:[%s1527] sm:$0xf] %v1526
    %v1529 = vld [vmem:[#allocation3] sm:$0xff]
    %v1530 = vpack.c.bf16 %v1529, %v1529
    %1531 = vmatprep.subr.bf16.mxu0 %v623
    %1532 = vmatpush1.bf16.msra.mxu0 %v622
    %1533 = vmatprep.subr.bf16.mxu0 %v619
    %1534 = vmatpush1.bf16.msra.mxu0 %v618
    %1535 = vmatprep.subr.bf16.mxu0 %v615
    %1536 = vmatpush1.bf16.msra.mxu0 %v614
    %1537 = vmatprep.subr.bf16.mxu0 %v611
    %1538 = vmatpush1.bf16.msra.mxu0 %v610
    %1539 = vmatprep.subr.bf16.mxu0 %v607
    %1540 = vmatpush1.bf16.msra.mxu0 %v606
    %1541 = vmatprep.subr.bf16.mxu0 %v603
    %1542 = vmatpush1.bf16.msra.mxu0 %v602
    %1543 = vmatprep.subr.bf16.mxu0 %v599
    %1544 = vmatpush1.bf16.msra.mxu0 %v598
    %1545 = vmatprep.subr.bf16.mxu0 %v595
    %1546 = vmatpush1.bf16.msra.mxu0 %v594
    %1547 = vmatprep.subr.bf16.mxu0 0
    %1548 = vmatpush2.bf16.msra.mxu0 0
    %1549 = vmatprep.subr.bf16.mxu0 0
    %1550 = vmatpush2.bf16.msra.mxu0 0
    %1551 = vmatprep.subr.bf16.mxu0 0
    %1552 = vmatpush2.bf16.msra.mxu0 0
    %1553 = vmatprep.subr.bf16.mxu0 0
    %1554 = vmatpush2.bf16.msra.mxu0 0
    %1555 = vmatprep.subr.bf16.mxu0 0
    %1556 = vmatpush2.bf16.msra.mxu0 0
    %1557 = vmatprep.subr.bf16.mxu0 0
    %1558 = vmatpush2.bf16.msra.mxu0 0
    %1559 = vmatprep.subr.bf16.mxu0 0
    %1560 = vmatpush2.bf16.msra.mxu0 0
    %1561 = vmatprep.subr.bf16.mxu0 0
    %1562 = vmatpush2.bf16.msra.mxu0 0
    %1563 = vmatprep.mubr.bf16.mxu0 0
    %1564 = vmatmul.mubr.bf16.gmra.mxu0 %v1530
    %v1565 = vpop.f32.mrf.mxu0
    %v1566 = vadd.f32 0.0, %v1565
    %v1567 = vpop.f32.mrf.mxu0
    %v1568 = vadd.f32 0.0, %v1567
    %v1569 = vpop.f32.mrf.mxu0
    %v1570 = vpop.f32.mrf.mxu0
    %1571 = vdwg.mxu0
    %1572 = vmatprep.subr.bf16.mxu0 %v625
    %1573 = vmatpush1.bf16.msra.mxu0 %v624
    %1574 = vmatprep.subr.bf16.mxu0 %v621
    %1575 = vmatpush1.bf16.msra.mxu0 %v620
    %1576 = vmatprep.subr.bf16.mxu0 %v617
    %1577 = vmatpush1.bf16.msra.mxu0 %v616
    %1578 = vmatprep.subr.bf16.mxu0 %v613
    %1579 = vmatpush1.bf16.msra.mxu0 %v612
    %1580 = vmatprep.subr.bf16.mxu0 %v609
    %1581 = vmatpush1.bf16.msra.mxu0 %v608
    %1582 = vmatprep.subr.bf16.mxu0 %v605
    %1583 = vmatpush1.bf16.msra.mxu0 %v604
    %1584 = vmatprep.subr.bf16.mxu0 %v601
    %1585 = vmatpush1.bf16.msra.mxu0 %v600
    %1586 = vmatprep.subr.bf16.mxu0 %v597
    %1587 = vmatpush1.bf16.msra.mxu0 %v596
    %1588 = vmatprep.subr.bf16.mxu0 0
    %1589 = vmatpush2.bf16.msra.mxu0 0
    %1590 = vmatprep.subr.bf16.mxu0 0
    %1591 = vmatpush2.bf16.msra.mxu0 0
    %1592 = vmatprep.subr.bf16.mxu0 0
    %1593 = vmatpush2.bf16.msra.mxu0 0
    %1594 = vmatprep.subr.bf16.mxu0 0
    %1595 = vmatpush2.bf16.msra.mxu0 0
    %1596 = vmatprep.subr.bf16.mxu0 0
    %1597 = vmatpush2.bf16.msra.mxu0 0
    %1598 = vmatprep.subr.bf16.mxu0 0
    %1599 = vmatpush2.bf16.msra.mxu0 0
    %1600 = vmatprep.subr.bf16.mxu0 0
    %1601 = vmatpush2.bf16.msra.mxu0 0
    %1602 = vmatprep.subr.bf16.mxu0 0
    %1603 = vmatpush2.bf16.msra.mxu0 0
    %1604 = vmatprep.mubr.bf16.mxu0 0
    %1605 = vmatmul.mubr.bf16.gmra.mxu0 %v1530
    %v1606 = vpop.f32.mrf.mxu0
    %v1607 = vadd.f32 0.0, %v1606
    %v1608 = vpop.f32.mrf.mxu0
    %v1609 = vadd.f32 0.0, %v1608
    %v1610 = vpop.f32.mrf.mxu0
    %v1611 = vpop.f32.mrf.mxu0
    %1612 = vdwg.mxu0
    %s1613 = scalar_lea.vmem [#allocation2], 112
    %v1614 = vld [vmem:[%s1613] sm:$0xff]
    %v1615 = vld [vmem:[%s1613 + $0x8] sm:$0xff]
    %v1616 = vunpack.c.l.bf16 %v1614
    %v1617 = vunpack.c.h.bf16 %v1614
    %v1618 = vunpack.c.l.bf16 %v1615
    %v1619 = vunpack.c.h.bf16 %v1615
    %v1620 = vadd.f32 %v1616, %v1566
    %v1621 = vadd.f32 %v1617, %v1568
    %v1622 = vadd.f32 %v1618, %v1607
    %v1623 = vadd.f32 %v1619, %v1609
    %v1624 = vxor.u32 %v1620, 2147483648
    %v1625 = vmul.f32 %v1624, 1.442695
    %v1626 = vpow.pop %v1625
    %v1627 = vadd.f32 %v1626, 1.0
    %v1628 = vrcp.pop %v1627
    %v1629 = vmul.f32 1.0, %v1628
    %v1630 = vxor.u32 %v1621, 2147483648
    %v1631 = vmul.f32 %v1630, 1.442695
    %v1632 = vpow.pop %v1631
    %v1633 = vadd.f32 %v1632, 1.0
    %v1634 = vrcp.pop %v1633
    %v1635 = vmul.f32 1.0, %v1634
    %v1636 = vtanh.pop %v1622
    %v1637 = vxor.u32 %v1623, 2147483648
    %v1638 = vmul.f32 %v1637, 1.442695
    %v1639 = vpow.pop %v1638
    %v1640 = vadd.f32 %v1639, 1.0
    %v1641 = vrcp.pop %v1640
    %v1642 = vmul.f32 1.0, %v1641
    %v1643 = vld [vmem:[#allocation4] sm:$0xff]
    %v1644 = vmul.f32 %v1635, %v1643
    %v1645 = vmul.f32 %v1629, %v1636
    %v1646 = vadd.f32 %v1644, %v1645
    %v1647 = vtanh.pop %v1646
    %v1648 = vmul.f32 %v1642, %v1647
    %1649 = vst [vmem:[#allocation4] sm:$0xff] %v1646
    %1650 = vst [vmem:[#allocation3] sm:$0xff] %v1648
    %v1651 = vpack.c.bf16 %v1648, %v1648
    %s1652 = scalar_lea.vmem %s4, 28
    %1653 = vst [vmem:[%s1652] sm:$0xf] %v1651
    // Predicated region
    $region34: #{lstm_rnn_forward.2} parent=1 // pred_check
      _
    $region35: #{lstm_rnn_forward.2} parent=1 // pred_check_branch
      %1655 = sbr.rel (0) target = $region37
    $region36: #{lstm_rnn_forward.2} parent=1 // pred_region
      _
    $region37: #{lstm_rnn_forward.2} parent=1 // pred_fallthru
      _
    // Predicated region
    $region38: #{lstm_rnn_forward.2} parent=1 // pred_check
      _
    $region39: #{lstm_rnn_forward.2} parent=1 // pred_check_branch
      %1657 = sbr.rel (0) target = $region41
    $region40: #{lstm_rnn_forward.2} parent=1 // pred_region
      _
    $region41: #{lstm_rnn_forward.2} parent=1 // pred_fallthru
      _
    %1658 = vsyncpa [#allocation6], 1
    %1659 = vsyncpa [#allocation8], 1

</llo_original>
